<compile_context>
chip_gen: v5e
topology: v5e:2x2
jax: 0.10.0
libtpu: 0.0.40
codegen_flags: <defaults>
</compile_context>

<pallas_src>
import jax
import jax.numpy as jnp
from jax.experimental import pallas as pl
from jax.experimental.pallas import tpu as pltpu

jax.config.update("jax_default_matmul_precision", "highest")

_EPS = 1e-5  # nn.LayerNorm default eps


# --------------------------------------------------------------------------
# Pallas kernel: one TransformerBlock, one batch element per grid step
# --------------------------------------------------------------------------
def _block_kernel(x_ref, g2_ref, b2_ref, wc1_ref, a_ref, wc2_ref,
                  wd1_ref, wd2_ref, g3_ref, b3_ref, wl1_ref, bl1_ref,
                  kdw_ref, bdw_ref, wl2_ref, bl2_ref,
                  xo_ref, yo_ref, padc_ref, padh_ref):
    L = x_ref.shape[1]
    C = x_ref.shape[2]
    HID = wl1_ref.shape[1]
    Wp = L // 16            # width of the (16, L//16) spatial fold in TwoDCFF
    P = Wp + 1              # zero rows on each side of the dwconv scratch

    x = x_ref[0].astype(jnp.float32)                       # (L, C)

    def layernorm(v, g_ref, b_ref):
        mu = jnp.mean(v, axis=-1, keepdims=True)
        var = jnp.mean(jnp.square(v - mu), axis=-1, keepdims=True)
        return (v - mu) * jax.lax.rsqrt(var + _EPS) * g_ref[...] + b_ref[...]

    # ---- norm2 ----
    xn = layernorm(x, g2_ref, b2_ref)

    # ---- CAB body: conv1d(k=3) -> PReLU -> conv1d(k=3) ----
    padc_ref[...] = jnp.zeros_like(padc_ref)               # zero-padded rows 0 and L+1

    def conv1d_k3(v, w_ref):
        # w_ref: (3, C, C); tap k laid out as [c_in, c_out]
        padc_ref[1:L + 1, :] = v
        acc = jnp.dot(padc_ref[0:L, :], w_ref[0],
                      preferred_element_type=jnp.float32)
        acc = acc + jnp.dot(padc_ref[1:L + 1, :], w_ref[1],
                            preferred_element_type=jnp.float32)
        acc = acc + jnp.dot(padc_ref[2:L + 2, :], w_ref[2],
                            preferred_element_type=jnp.float32)
        return acc

    h = conv1d_k3(xn, wc1_ref)
    a = a_ref[...]                                          # (1, 1) PReLU slope
    h = jnp.where(h >= 0.0, h, h * a)
    res = conv1d_k3(h, wc2_ref)

    # ---- channel attention (CALayer) ----
    pooled = jnp.mean(res, axis=0, keepdims=True)           # (1, C)
    z = jnp.maximum(
        jnp.dot(pooled, wd1_ref[...], preferred_element_type=jnp.float32), 0.0)
    logit = jnp.dot(z, wd2_ref[...], preferred_element_type=jnp.float32)
    y_att = 1.0 / (1.0 + jnp.exp(-logit))                   # (1, C)

    res = res * y_att + xn                                  # CAB residual (normed input)
    x1 = x + res                                            # block residual #1
    yo_ref[0] = y_att.astype(yo_ref.dtype)                  # -> (B, 1, C) output

    # ---- norm3 + TwoDCFF MLP ----
    xn3 = layernorm(x1, g3_ref, b3_ref)
    hmid = jnp.dot(xn3, wl1_ref[...],
                   preferred_element_type=jnp.float32) + bl1_ref[...]
    hmid = jax.nn.gelu(hmid, approximate=True)              # (L, HID)

    # depthwise 3x3 conv over the (16, Wp) fold, computed on the flat layout
    padh_ref[...] = jnp.zeros_like(padh_ref)
    padh_ref[P:P + L, :] = hmid

    jpos = jax.lax.broadcasted_iota(jnp.int32, (L, 1), 0) % Wp
    mask_m1 = (jpos > 0).astype(jnp.float32)                # dj = -1 in-bounds
    mask_p1 = (jpos < (Wp - 1)).astype(jnp.float32)         # dj = +1 in-bounds

    acc = jnp.zeros((L, HID), jnp.float32)
    for di in (-1, 0, 1):
        for dj in (-1, 0, 1):
            s = di * Wp + dj
            shifted = padh_ref[P + s:P + s + L, :]          # hmid[l + s] (zero-padded)
            if dj == 1:
                shifted = shifted * mask_p1
            elif dj == -1:
                shifted = shifted * mask_m1
            t = (di + 1) * 3 + (dj + 1)
            acc = acc + shifted * kdw_ref[t:t + 1, :]       # per-channel tap (1, HID)
    acc = acc + bdw_ref[...]
    hdw = jax.nn.gelu(acc, approximate=True)

    mlp = jnp.dot(hdw, wl2_ref[...],
                  preferred_element_type=jnp.float32) + bl2_ref[...]
    xo_ref[0] = (x1 + mlp).astype(xo_ref.dtype)


# --------------------------------------------------------------------------
# Wrapper: one TransformerBlock (repacks PyTorch-layout params, calls Pallas)
# --------------------------------------------------------------------------
def transformer_block(x, p):
    B, L, C = x.shape
    assert L % 16 == 0, "TwoDCFF folds the sequence into (16, L // 16)"
    HID = p["wl1"].shape[0]
    Cr = p["wd1"].shape[0]
    Wp = L // 16

    # PyTorch layouts -> matmul-ready layouts (one-time, outside the kernel)
    wc1 = jnp.stack([p["wc1"][:, :, k].T for k in range(3)], axis=0)  # (3, C, C)
    wc2 = jnp.stack([p["wc2"][:, :, k].T for k in range(3)], axis=0)  # (3, C, C)
    wd1 = p["wd1"][:, :, 0].T                                         # (C, Cr)
    wd2 = p["wd2"][:, :, 0].T                                         # (Cr, C)
    wl1 = p["wl1"].T                                                  # (C, HID)
    wl2 = p["wl2"].T                                                  # (HID, C)
    kdw = p["kdw"][:, 0, :, :].reshape(HID, 9).T                      # (9, HID)

    g2 = p["g2"].reshape(1, C)
    b2 = p["b2"].reshape(1, C)
    g3 = p["g3"].reshape(1, C)
    b3 = p["b3"].reshape(1, C)
    bl1 = p["bl1"].reshape(1, HID)
    bdw = p["bdw"].reshape(1, HID)
    bl2 = p["bl2"].reshape(1, C)
    a = jnp.asarray(p["prelu_a"], jnp.float32).reshape(1, 1)

    def const2(shape):
        return pl.BlockSpec(shape, lambda b: (0, 0))

    grid_spec = pltpu.PrefetchScalarGridSpec(
        num_scalar_prefetch=0,
        grid=(B,),
        in_specs=[
            pl.BlockSpec((1, L, C), lambda b: (b, 0, 0)),     # x
            const2((1, C)),                                   # norm2 gamma
            const2((1, C)),                                   # norm2 beta
            pl.BlockSpec((3, C, C), lambda b: (0, 0, 0)),     # conv1 taps
            const2((1, 1)),                                   # PReLU slope
            pl.BlockSpec((3, C, C), lambda b: (0, 0, 0)),     # conv2 taps
            const2((C, Cr)),                                  # CA squeeze
            const2((Cr, C)),                                  # CA excite
            const2((1, C)),                                   # norm3 gamma
            const2((1, C)),                                   # norm3 beta
            const2((C, HID)),                                 # linear1
            const2((1, HID)),                                 # linear1 bias
            const2((9, HID)),                                 # dwconv taps
            const2((1, HID)),                                 # dwconv bias
            const2((HID, C)),                                 # linear2
            const2((1, C)),                                   # linear2 bias
        ],
        out_specs=[
            pl.BlockSpec((1, L, C), lambda b: (b, 0, 0)),     # block output x
            pl.BlockSpec((1, 1, C), lambda b: (b, 0, 0)),     # CA weights y
        ],
        scratch_shapes=[
            pltpu.VMEM((L + 2, C), jnp.float32),              # conv1d zero-pad buffer
            pltpu.VMEM((L + 2 * (Wp + 1), HID), jnp.float32), # dwconv zero-pad buffer
        ],
    )

    out, y = pl.pallas_call(
        _block_kernel,
        out_shape=(jax.ShapeDtypeStruct((B, L, C), x.dtype),
                   jax.ShapeDtypeStruct((B, 1, C), x.dtype)),
        grid_spec=grid_spec,
        compiler_params=pltpu.CompilerParams(
            dimension_semantics=("parallel",)),
    )(x, g2, b2, wc1, a, wc2, wd1, wd2, g3, b3, wl1, bl1, kdw, bdw, wl2, bl2)
    return out, y


def basic_uformer_layer(x, blocks_params):
    """BasicUformerLayer.forward: returns (x, [y_block0, y_block1, ...])."""
    weights = []
    for p in blocks_params:
        x, y = transformer_block(x, p)
        weights.append(y)          # == PyTorch y.permute(0, 2, 1): (B, 1, C)
    return x, weights


# --------------------------------------------------------------------------
# Pure-JAX reference mirroring the PyTorch module (tanh-GELU, same as kernel)
# --------------------------------------------------------------------------
def _layernorm_ref(v, g, b):
    mu = v.mean(axis=-1, keepdims=True)
    var = jnp.mean((v - mu) ** 2, axis=-1, keepdims=True)
    return (v - mu) / jnp.sqrt(var + _EPS) * g + b


def _conv1d3_ref(v, w):
    # v: (B, L, C) channels-last; w: (C_out, C_in, 3); padding=1 (PyTorch Conv1d)
    L = v.shape[1]
    vp = jnp.pad(v, ((0, 0), (1, 1), (0, 0)))
    return sum(jnp.einsum("blc,oc->blo", vp[:, k:k + L, :], w[:, :, k])
               for k in range(3))


def transformer_block_ref(x, p):
    B, L, C = x.shape
    xn = _layernorm_ref(x, p["g2"], p["b2"])
    h = _conv1d3_ref(xn, p["wc1"])
    h = jnp.where(h >= 0.0, h, h * p["prelu_a"])
    res = _conv1d3_ref(h, p["wc2"])
    pooled = res.mean(axis=1, keepdims=True)                               # (B,1,C)
    z = jnp.maximum(jnp.einsum("bxc,oc->bxo", pooled, p["wd1"][:, :, 0]), 0.0)
    y = 1.0 / (1.0 + jnp.exp(-jnp.einsum("bxr,or->bxo", z, p["wd2"][:, :, 0])))
    res = res * y + xn
    x1 = x + res

    xn3 = _layernorm_ref(x1, p["g3"], p["b3"])
    hmid = jax.nn.gelu(xn3 @ p["wl1"].T + p["bl1"], approximate=True)      # (B,L,HID)
    HID = hmid.shape[-1]
    Wp = L // 16
    g = hmid.reshape(B, 16, Wp, HID)
    gp = jnp.pad(g, ((0, 0), (1, 1), (1, 1), (0, 0)))
    dw = jnp.zeros_like(g)
    for ki in range(3):
        for kj in range(3):
            dw = dw + gp[:, ki:ki + 16, kj:kj + Wp, :] * p["kdw"][:, 0, ki, kj]
    dw = jax.nn.gelu(dw + p["bdw"], approximate=True).reshape(B, L, HID)
    return x1 + dw @ p["wl2"].T + p["bl2"], y


def basic_uformer_layer_ref(x, blocks_params):
    weights = []
    for p in blocks_params:
        x, y = transformer_block_ref(x, p)
        weights.append(y)
    return x, weights


# --------------------------------------------------------------------------
# Deterministic parameter init (PyTorch tensor layouts)
# --------------------------------------------------------------------------
def init_block_params(key, dim, hidden, reduction):
    Cr = dim // reduction
    ks = jax.random.split(key, 14)
    s = 0.1
    return {
        "g2": 1.0 + 0.1 * jax.random.normal(ks[0], (dim,), jnp.float32),
        "b2": 0.1 * jax.random.normal(ks[1], (dim,), jnp.float32),
        "wc1": s * jax.random.normal(ks[2], (dim, dim, 3), jnp.float32),
        "prelu_a": jnp.float32(0.25),                       # nn.PReLU() default
        "wc2": s * jax.random.normal(ks[3], (dim, dim, 3), jnp.float32),
        "wd1": s * jax.random.normal(ks[4], (Cr, dim, 1), jnp.float32),
        "wd2": s * jax.random.normal(ks[5], (dim, Cr, 1), jnp.float32),
        "g3": 1.0 + 0.1 * jax.random.normal(ks[6], (dim,), jnp.float32),
        "b3": 0.1 * jax.random.normal(ks[7], (dim,), jnp.float32),
        "wl1": s * jax.random.normal(ks[8], (hidden, dim), jnp.float32),
        "bl1": s * jax.random.normal(ks[9], (hidden,), jnp.float32),
        "kdw": s * jax.random.normal(ks[10], (hidden, 1, 3, 3), jnp.float32),
        "bdw": s * jax.random.normal(ks[11], (hidden,), jnp.float32),
        "wl2": s * jax.random.normal(ks[12], (dim, hidden), jnp.float32),
        "bl2": s * jax.random.normal(ks[13], (dim,), jnp.float32),
    }


if __name__ == "__main__":
    key = jax.random.PRNGKey(0)
    B, L, dim = 2, 32, 16            # L must be a multiple of 16 (TwoDCFF fold)
    mlp_ratio = 4.0
    hidden = int(dim * mlp_ratio)    # 64
    reduction = 4                    # hard-coded in TransformerBlock's CAB
    depth = 2

    kx, kp = jax.random.split(key)
    x = jax.random.normal(kx, (B, L, dim), dtype=jnp.float32)
    params = [init_block_params(k, dim, hidden, reduction)
              for k in jax.random.split(kp, depth)]

    out, weights = basic_uformer_layer(x, params)
    out = jax.block_until_ready(out)

    out_ref, weights_ref = basic_uformer_layer_ref(x, params)
    assert out.shape == (B, L, dim), out.shape
    assert len(weights) == depth
    assert all(w.shape == (B, 1, dim) for w in weights)
    assert jnp.allclose(out, out_ref, atol=2e-3, rtol=2e-3), (
        float(jnp.max(jnp.abs(out - out_ref))))
    for w, wr in zip(weights, weights_ref):
        assert jnp.allclose(w, wr, atol=2e-3, rtol=2e-3), (
            float(jnp.max(jnp.abs(w - wr))))

    print("KERNEL_OK")
</pallas_src>

<mosaic_0001>
module attributes {stable_mosaic.version = 11 : i64} {
  func.func @_block_kernel(%arg0: i32, %arg1: memref<1x32x16xf32, #tpu.memory_space<vmem>>, %arg2: memref<1x16xf32, #tpu.memory_space<vmem>>, %arg3: memref<1x16xf32, #tpu.memory_space<vmem>>, %arg4: memref<3x16x16xf32, #tpu.memory_space<vmem>>, %arg5: memref<1x1xf32, #tpu.memory_space<vmem>>, %arg6: memref<3x16x16xf32, #tpu.memory_space<vmem>>, %arg7: memref<16x4xf32, #tpu.memory_space<vmem>>, %arg8: memref<4x16xf32, #tpu.memory_space<vmem>>, %arg9: memref<1x16xf32, #tpu.memory_space<vmem>>, %arg10: memref<1x16xf32, #tpu.memory_space<vmem>>, %arg11: memref<16x64xf32, #tpu.memory_space<vmem>>, %arg12: memref<1x64xf32, #tpu.memory_space<vmem>>, %arg13: memref<9x64xf32, #tpu.memory_space<vmem>>, %arg14: memref<1x64xf32, #tpu.memory_space<vmem>>, %arg15: memref<64x16xf32, #tpu.memory_space<vmem>>, %arg16: memref<1x16xf32, #tpu.memory_space<vmem>>, %arg17: memref<1x32x16xf32, #tpu.memory_space<vmem>>, %arg18: memref<1x1x16xf32, #tpu.memory_space<vmem>>, %arg19: memref<34x16xf32, #tpu.memory_space<vmem>>, %arg20: memref<38x64xf32, #tpu.memory_space<vmem>>) attributes {dimension_semantics = [#tpu.dimension_semantics<parallel>], iteration_bounds = array<i64: 2>, scalar_prefetch = 0 : i64, scratch_operands = 2 : i64, tpu.core_type = #tpu.core_type<tc>, window_params = [{transform_indices = @transform_0, window_bounds = array<i64: 1, 32, 16>}, {pipeline_mode = #tpu.pipeline_mode<synchronous>, transform_indices = @transform_1, window_bounds = array<i64: 1, 16>}, {pipeline_mode = #tpu.pipeline_mode<synchronous>, transform_indices = @transform_2, window_bounds = array<i64: 1, 16>}, {pipeline_mode = #tpu.pipeline_mode<synchronous>, transform_indices = @transform_3, window_bounds = array<i64: 3, 16, 16>}, {pipeline_mode = #tpu.pipeline_mode<synchronous>, transform_indices = @transform_4, window_bounds = array<i64: 1, 1>}, {pipeline_mode = #tpu.pipeline_mode<synchronous>, transform_indices = @transform_5, window_bounds = array<i64: 3, 16, 16>}, {pipeline_mode = #tpu.pipeline_mode<synchronous>, transform_indices = @transform_6, window_bounds = array<i64: 16, 4>}, {pipeline_mode = #tpu.pipeline_mode<synchronous>, transform_indices = @transform_7, window_bounds = array<i64: 4, 16>}, {pipeline_mode = #tpu.pipeline_mode<synchronous>, transform_indices = @transform_8, window_bounds = array<i64: 1, 16>}, {pipeline_mode = #tpu.pipeline_mode<synchronous>, transform_indices = @transform_9, window_bounds = array<i64: 1, 16>}, {pipeline_mode = #tpu.pipeline_mode<synchronous>, transform_indices = @transform_10, window_bounds = array<i64: 16, 64>}, {pipeline_mode = #tpu.pipeline_mode<synchronous>, transform_indices = @transform_11, window_bounds = array<i64: 1, 64>}, {pipeline_mode = #tpu.pipeline_mode<synchronous>, transform_indices = @transform_12, window_bounds = array<i64: 9, 64>}, {pipeline_mode = #tpu.pipeline_mode<synchronous>, transform_indices = @transform_13, window_bounds = array<i64: 1, 64>}, {pipeline_mode = #tpu.pipeline_mode<synchronous>, transform_indices = @transform_14, window_bounds = array<i64: 64, 16>}, {pipeline_mode = #tpu.pipeline_mode<synchronous>, transform_indices = @transform_15, window_bounds = array<i64: 1, 16>}, {transform_indices = @transform_16, window_bounds = array<i64: 1, 32, 16>}, {transform_indices = @transform_17, window_bounds = array<i64: 1, 1, 16>}]} {
    %c0 = arith.constant 0 : index
    %c0_0 = arith.constant 0 : index
    %c0_1 = arith.constant 0 : index
    %0 = vector.load %arg1[%c0, %c0_0, %c0_1] : memref<1x32x16xf32, #tpu.memory_space<vmem>>, vector<1x32x16xf32>
    %1 = vector.shape_cast %0 : vector<1x32x16xf32> to vector<32x16xf32>
    %cst = arith.constant dense<0.000000e+00> : vector<32xf32>
    %2 = vector.multi_reduction <add>, %1, %cst [1] : vector<32x16xf32> to vector<32xf32>
    %3 = vector.shape_cast %2 : vector<32xf32> to vector<32x1xf32>
    %cst_2 = arith.constant 1.600000e+01 : f32
    %4 = vector.broadcast %cst_2 : f32 to vector<32x1xf32>
    %5 = arith.divf %3, %4 : vector<32x1xf32>
    %6 = vector.broadcast %5 : vector<32x1xf32> to vector<32x16xf32>
    %7 = arith.subf %1, %6 : vector<32x16xf32>
    %8 = arith.mulf %7, %7 : vector<32x16xf32>
    %cst_3 = arith.constant dense<0.000000e+00> : vector<32xf32>
    %9 = vector.multi_reduction <add>, %8, %cst_3 [1] : vector<32x16xf32> to vector<32xf32>
    %10 = vector.shape_cast %9 : vector<32xf32> to vector<32x1xf32>
    %cst_4 = arith.constant 1.600000e+01 : f32
    %11 = vector.broadcast %cst_4 : f32 to vector<32x1xf32>
    %12 = arith.divf %10, %11 : vector<32x1xf32>
    %13 = vector.broadcast %5 : vector<32x1xf32> to vector<32x16xf32>
    %14 = arith.subf %1, %13 : vector<32x16xf32>
    %cst_5 = arith.constant 9.99999974E-6 : f32
    %15 = vector.broadcast %cst_5 : f32 to vector<32x1xf32>
    %16 = arith.addf %12, %15 : vector<32x1xf32>
    %17 = math.rsqrt %16 : vector<32x1xf32>
    %18 = vector.broadcast %17 : vector<32x1xf32> to vector<32x16xf32>
    %19 = arith.mulf %14, %18 : vector<32x16xf32>
    %c0_6 = arith.constant 0 : index
    %c0_7 = arith.constant 0 : index
    %20 = vector.load %arg2[%c0_6, %c0_7] : memref<1x16xf32, #tpu.memory_space<vmem>>, vector<1x16xf32>
    %21 = vector.broadcast %20 : vector<1x16xf32> to vector<32x16xf32>
    %22 = arith.mulf %19, %21 : vector<32x16xf32>
    %c0_8 = arith.constant 0 : index
    %c0_9 = arith.constant 0 : index
    %23 = vector.load %arg3[%c0_8, %c0_9] : memref<1x16xf32, #tpu.memory_space<vmem>>, vector<1x16xf32>
    %24 = vector.broadcast %23 : vector<1x16xf32> to vector<32x16xf32>
    %25 = arith.addf %22, %24 : vector<32x16xf32>
    %cst_10 = arith.constant 0.000000e+00 : f32
    %26 = vector.broadcast %cst_10 : f32 to vector<34x16xf32>
    %c0_11 = arith.constant 0 : index
    %c0_12 = arith.constant 0 : index
    %27 = vector.load %arg19[%c0_11, %c0_12] : memref<34x16xf32, #tpu.memory_space<vmem>>, vector<34x16xf32>
    tpu.vector_store %arg19[%c0_11, %c0_12], %26 {strides = array<i32>} : memref<34x16xf32, #tpu.memory_space<vmem>>, vector<34x16xf32>,
    %c1 = arith.constant 1 : index
    %c0_13 = arith.constant 0 : index
    %28 = vector.load %arg19[%c1, %c0_13] : memref<34x16xf32, #tpu.memory_space<vmem>>, vector<32x16xf32>
    tpu.vector_store %arg19[%c1, %c0_13], %25 {strides = array<i32>} : memref<34x16xf32, #tpu.memory_space<vmem>>, vector<32x16xf32>,
    %c0_14 = arith.constant 0 : index
    %c0_15 = arith.constant 0 : index
    %29 = vector.load %arg19[%c0_14, %c0_15] : memref<34x16xf32, #tpu.memory_space<vmem>>, vector<32x16xf32>
    %c0_16 = arith.constant 0 : index
    %c0_17 = arith.constant 0 : index
    %c0_18 = arith.constant 0 : index
    %30 = vector.load %arg4[%c0_16, %c0_17, %c0_18] : memref<3x16x16xf32, #tpu.memory_space<vmem>>, vector<1x16x16xf32>
    %31 = vector.shape_cast %30 : vector<1x16x16xf32> to vector<16x16xf32>
    %cst_19 = arith.constant dense<0.000000e+00> : vector<32x16xf32>
    %32 = tpu.matmul %29, %31, %cst_19 {dimension_numbers = #tpu.dot_dimension_numbers<[1], [0], [0], [1], [0, 0, 1, 1], [], []>, precision = #tpu.contract_precision<fp32>} : vector<32x16xf32>, vector<16x16xf32>, vector<32x16xf32> -> vector<32x16xf32>
    %c1_20 = arith.constant 1 : index
    %c0_21 = arith.constant 0 : index
    %33 = vector.load %arg19[%c1_20, %c0_21] : memref<34x16xf32, #tpu.memory_space<vmem>>, vector<32x16xf32>
    %c1_22 = arith.constant 1 : index
    %c0_23 = arith.constant 0 : index
    %c0_24 = arith.constant 0 : index
    %34 = vector.load %arg4[%c1_22, %c0_23, %c0_24] : memref<3x16x16xf32, #tpu.memory_space<vmem>>, vector<1x16x16xf32>
    %35 = vector.shape_cast %34 : vector<1x16x16xf32> to vector<16x16xf32>
    %cst_25 = arith.constant dense<0.000000e+00> : vector<32x16xf32>
    %36 = tpu.matmul %33, %35, %cst_25 {dimension_numbers = #tpu.dot_dimension_numbers<[1], [0], [0], [1], [0, 0, 1, 1], [], []>, precision = #tpu.contract_precision<fp32>} : vector<32x16xf32>, vector<16x16xf32>, vector<32x16xf32> -> vector<32x16xf32>
    %37 = arith.addf %32, %36 : vector<32x16xf32>
    %c2 = arith.constant 2 : index
    %c0_26 = arith.constant 0 : index
    %38 = vector.load %arg19[%c2, %c0_26] : memref<34x16xf32, #tpu.memory_space<vmem>>, vector<32x16xf32>
    %c2_27 = arith.constant 2 : index
    %c0_28 = arith.constant 0 : index
    %c0_29 = arith.constant 0 : index
    %39 = vector.load %arg4[%c2_27, %c0_28, %c0_29] : memref<3x16x16xf32, #tpu.memory_space<vmem>>, vector<1x16x16xf32>
    %40 = vector.shape_cast %39 : vector<1x16x16xf32> to vector<16x16xf32>
    %cst_30 = arith.constant dense<0.000000e+00> : vector<32x16xf32>
    %41 = tpu.matmul %38, %40, %cst_30 {dimension_numbers = #tpu.dot_dimension_numbers<[1], [0], [0], [1], [0, 0, 1, 1], [], []>, precision = #tpu.contract_precision<fp32>} : vector<32x16xf32>, vector<16x16xf32>, vector<32x16xf32> -> vector<32x16xf32>
    %42 = arith.addf %37, %41 : vector<32x16xf32>
    %c0_31 = arith.constant 0 : index
    %c0_32 = arith.constant 0 : index
    %43 = vector.load %arg5[%c0_31, %c0_32] : memref<1x1xf32, #tpu.memory_space<vmem>>, vector<1x1xf32>
    %cst_33 = arith.constant 0.000000e+00 : f32
    %44 = vector.broadcast %cst_33 : f32 to vector<32x16xf32>
    %45 = arith.cmpf oge, %42, %44 : vector<32x16xf32>
    %46 = vector.broadcast %43 : vector<1x1xf32> to vector<32x16xf32>
    %47 = arith.mulf %42, %46 : vector<32x16xf32>
    %48 = arith.select %45, %42, %47 : vector<32x16xi1>, vector<32x16xf32>
    %c1_34 = arith.constant 1 : index
    %c0_35 = arith.constant 0 : index
    %49 = vector.load %arg19[%c1_34, %c0_35] : memref<34x16xf32, #tpu.memory_space<vmem>>, vector<32x16xf32>
    tpu.vector_store %arg19[%c1_34, %c0_35], %48 {strides = array<i32>} : memref<34x16xf32, #tpu.memory_space<vmem>>, vector<32x16xf32>,
    %c0_36 = arith.constant 0 : index
    %c0_37 = arith.constant 0 : index
    %50 = vector.load %arg19[%c0_36, %c0_37] : memref<34x16xf32, #tpu.memory_space<vmem>>, vector<32x16xf32>
    %c0_38 = arith.constant 0 : index
    %c0_39 = arith.constant 0 : index
    %c0_40 = arith.constant 0 : index
    %51 = vector.load %arg6[%c0_38, %c0_39, %c0_40] : memref<3x16x16xf32, #tpu.memory_space<vmem>>, vector<1x16x16xf32>
    %52 = vector.shape_cast %51 : vector<1x16x16xf32> to vector<16x16xf32>
    %cst_41 = arith.constant dense<0.000000e+00> : vector<32x16xf32>
    %53 = tpu.matmul %50, %52, %cst_41 {dimension_numbers = #tpu.dot_dimension_numbers<[1], [0], [0], [1], [0, 0, 1, 1], [], []>, precision = #tpu.contract_precision<fp32>} : vector<32x16xf32>, vector<16x16xf32>, vector<32x16xf32> -> vector<32x16xf32>
    %c1_42 = arith.constant 1 : index
    %c0_43 = arith.constant 0 : index
    %54 = vector.load %arg19[%c1_42, %c0_43] : memref<34x16xf32, #tpu.memory_space<vmem>>, vector<32x16xf32>
    %c1_44 = arith.constant 1 : index
    %c0_45 = arith.constant 0 : index
    %c0_46 = arith.constant 0 : index
    %55 = vector.load %arg6[%c1_44, %c0_45, %c0_46] : memref<3x16x16xf32, #tpu.memory_space<vmem>>, vector<1x16x16xf32>
    %56 = vector.shape_cast %55 : vector<1x16x16xf32> to vector<16x16xf32>
    %cst_47 = arith.constant dense<0.000000e+00> : vector<32x16xf32>
    %57 = tpu.matmul %54, %56, %cst_47 {dimension_numbers = #tpu.dot_dimension_numbers<[1], [0], [0], [1], [0, 0, 1, 1], [], []>, precision = #tpu.contract_precision<fp32>} : vector<32x16xf32>, vector<16x16xf32>, vector<32x16xf32> -> vector<32x16xf32>
    %58 = arith.addf %53, %57 : vector<32x16xf32>
    %c2_48 = arith.constant 2 : index
    %c0_49 = arith.constant 0 : index
    %59 = vector.load %arg19[%c2_48, %c0_49] : memref<34x16xf32, #tpu.memory_space<vmem>>, vector<32x16xf32>
    %c2_50 = arith.constant 2 : index
    %c0_51 = arith.constant 0 : index
    %c0_52 = arith.constant 0 : index
    %60 = vector.load %arg6[%c2_50, %c0_51, %c0_52] : memref<3x16x16xf32, #tpu.memory_space<vmem>>, vector<1x16x16xf32>
    %61 = vector.shape_cast %60 : vector<1x16x16xf32> to vector<16x16xf32>
    %cst_53 = arith.constant dense<0.000000e+00> : vector<32x16xf32>
    %62 = tpu.matmul %59, %61, %cst_53 {dimension_numbers = #tpu.dot_dimension_numbers<[1], [0], [0], [1], [0, 0, 1, 1], [], []>, precision = #tpu.contract_precision<fp32>} : vector<32x16xf32>, vector<16x16xf32>, vector<32x16xf32> -> vector<32x16xf32>
    %63 = arith.addf %58, %62 : vector<32x16xf32>
    %cst_54 = arith.constant dense<0.000000e+00> : vector<16xf32>
    %64 = vector.multi_reduction <add>, %63, %cst_54 [0] : vector<32x16xf32> to vector<16xf32>
    %65 = vector.shape_cast %64 : vector<16xf32> to vector<1x16xf32>
    %cst_55 = arith.constant 3.200000e+01 : f32
    %66 = vector.broadcast %cst_55 : f32 to vector<1x16xf32>
    %67 = arith.divf %65, %66 : vector<1x16xf32>
    %c0_56 = arith.constant 0 : index
    %c0_57 = arith.constant 0 : index
    %68 = vector.load %arg7[%c0_56, %c0_57] : memref<16x4xf32, #tpu.memory_space<vmem>>, vector<16x4xf32>
    %cst_58 = arith.constant dense<0.000000e+00> : vector<1x4xf32>
    %69 = tpu.matmul %67, %68, %cst_58 {dimension_numbers = #tpu.dot_dimension_numbers<[1], [0], [0], [1], [0, 0, 1, 1], [], []>, precision = #tpu.contract_precision<fp32>} : vector<1x16xf32>, vector<16x4xf32>, vector<1x4xf32> -> vector<1x4xf32>
    %cst_59 = arith.constant 0.000000e+00 : f32
    %70 = vector.broadcast %cst_59 : f32 to vector<1x4xf32>
    %71 = arith.maximumf %69, %70 : vector<1x4xf32>
    %c0_60 = arith.constant 0 : index
    %c0_61 = arith.constant 0 : index
    %72 = vector.load %arg8[%c0_60, %c0_61] : memref<4x16xf32, #tpu.memory_space<vmem>>, vector<4x16xf32>
    %cst_62 = arith.constant dense<0.000000e+00> : vector<1x16xf32>
    %73 = tpu.matmul %71, %72, %cst_62 {dimension_numbers = #tpu.dot_dimension_numbers<[1], [0], [0], [1], [0, 0, 1, 1], [], []>, precision = #tpu.contract_precision<fp32>} : vector<1x4xf32>, vector<4x16xf32>, vector<1x16xf32> -> vector<1x16xf32>
    %cst_63 = arith.constant 0.000000e+00 : f32
    %74 = vector.broadcast %cst_63 : f32 to vector<1x16xf32>
    %75 = arith.subf %74, %73 : vector<1x16xf32>
    %76 = math.exp %75 : vector<1x16xf32>
    %cst_64 = arith.constant 1.000000e+00 : f32
    %77 = vector.broadcast %cst_64 : f32 to vector<1x16xf32>
    %78 = arith.addf %77, %76 : vector<1x16xf32>
    %cst_65 = arith.constant 1.000000e+00 : f32
    %79 = vector.broadcast %cst_65 : f32 to vector<1x16xf32>
    %80 = arith.divf %79, %78 : vector<1x16xf32>
    %81 = vector.broadcast %80 : vector<1x16xf32> to vector<32x16xf32>
    %82 = arith.mulf %63, %81 : vector<32x16xf32>
    %83 = arith.addf %82, %25 : vector<32x16xf32>
    %84 = arith.addf %1, %83 : vector<32x16xf32>
    %c0_66 = arith.constant 0 : index
    %c0_67 = arith.constant 0 : index
    %c0_68 = arith.constant 0 : index
    %85 = vector.load %arg18[%c0_66, %c0_67, %c0_68] : memref<1x1x16xf32, #tpu.memory_space<vmem>>, vector<1x1x16xf32>
    %86 = vector.shape_cast %85 : vector<1x1x16xf32> to vector<1x16xf32>
    %87 = vector.shape_cast %80 : vector<1x16xf32> to vector<1x1x16xf32>
    tpu.vector_store %arg18[%c0_66, %c0_67, %c0_68], %87 {strides = array<i32>} : memref<1x1x16xf32, #tpu.memory_space<vmem>>, vector<1x1x16xf32>,
    %cst_69 = arith.constant dense<0.000000e+00> : vector<32xf32>
    %88 = vector.multi_reduction <add>, %84, %cst_69 [1] : vector<32x16xf32> to vector<32xf32>
    %89 = vector.shape_cast %88 : vector<32xf32> to vector<32x1xf32>
    %cst_70 = arith.constant 1.600000e+01 : f32
    %90 = vector.broadcast %cst_70 : f32 to vector<32x1xf32>
    %91 = arith.divf %89, %90 : vector<32x1xf32>
    %92 = vector.broadcast %91 : vector<32x1xf32> to vector<32x16xf32>
    %93 = arith.subf %84, %92 : vector<32x16xf32>
    %94 = arith.mulf %93, %93 : vector<32x16xf32>
    %cst_71 = arith.constant dense<0.000000e+00> : vector<32xf32>
    %95 = vector.multi_reduction <add>, %94, %cst_71 [1] : vector<32x16xf32> to vector<32xf32>
    %96 = vector.shape_cast %95 : vector<32xf32> to vector<32x1xf32>
    %cst_72 = arith.constant 1.600000e+01 : f32
    %97 = vector.broadcast %cst_72 : f32 to vector<32x1xf32>
    %98 = arith.divf %96, %97 : vector<32x1xf32>
    %99 = vector.broadcast %91 : vector<32x1xf32> to vector<32x16xf32>
    %100 = arith.subf %84, %99 : vector<32x16xf32>
    %cst_73 = arith.constant 9.99999974E-6 : f32
    %101 = vector.broadcast %cst_73 : f32 to vector<32x1xf32>
    %102 = arith.addf %98, %101 : vector<32x1xf32>
    %103 = math.rsqrt %102 : vector<32x1xf32>
    %104 = vector.broadcast %103 : vector<32x1xf32> to vector<32x16xf32>
    %105 = arith.mulf %100, %104 : vector<32x16xf32>
    %c0_74 = arith.constant 0 : index
    %c0_75 = arith.constant 0 : index
    %106 = vector.load %arg9[%c0_74, %c0_75] : memref<1x16xf32, #tpu.memory_space<vmem>>, vector<1x16xf32>
    %107 = vector.broadcast %106 : vector<1x16xf32> to vector<32x16xf32>
    %108 = arith.mulf %105, %107 : vector<32x16xf32>
    %c0_76 = arith.constant 0 : index
    %c0_77 = arith.constant 0 : index
    %109 = vector.load %arg10[%c0_76, %c0_77] : memref<1x16xf32, #tpu.memory_space<vmem>>, vector<1x16xf32>
    %110 = vector.broadcast %109 : vector<1x16xf32> to vector<32x16xf32>
    %111 = arith.addf %108, %110 : vector<32x16xf32>
    %c0_78 = arith.constant 0 : index
    %c0_79 = arith.constant 0 : index
    %112 = vector.load %arg11[%c0_78, %c0_79] : memref<16x64xf32, #tpu.memory_space<vmem>>, vector<16x64xf32>
    %cst_80 = arith.constant dense<0.000000e+00> : vector<32x64xf32>
    %113 = tpu.matmul %111, %112, %cst_80 {dimension_numbers = #tpu.dot_dimension_numbers<[1], [0], [0], [1], [0, 0, 1, 1], [], []>, precision = #tpu.contract_precision<fp32>} : vector<32x16xf32>, vector<16x64xf32>, vector<32x64xf32> -> vector<32x64xf32>
    %c0_81 = arith.constant 0 : index
    %c0_82 = arith.constant 0 : index
    %114 = vector.load %arg12[%c0_81, %c0_82] : memref<1x64xf32, #tpu.memory_space<vmem>>, vector<1x64xf32>
    %115 = vector.broadcast %114 : vector<1x64xf32> to vector<32x64xf32>
    %116 = arith.addf %113, %115 : vector<32x64xf32>
    %117 = arith.mulf %116, %116 : vector<32x64xf32>
    %118 = arith.mulf %116, %117 : vector<32x64xf32>
    %cst_83 = arith.constant 4.471500e-02 : f32
    %119 = vector.broadcast %cst_83 : f32 to vector<32x64xf32>
    %120 = arith.mulf %119, %118 : vector<32x64xf32>
    %121 = arith.addf %116, %120 : vector<32x64xf32>
    %cst_84 = arith.constant 0.797884583 : f32
    %122 = vector.broadcast %cst_84 : f32 to vector<32x64xf32>
    %123 = arith.mulf %122, %121 : vector<32x64xf32>
    %124 = math.tanh %123 : vector<32x64xf32>
    %cst_85 = arith.constant 1.000000e+00 : f32
    %125 = vector.broadcast %cst_85 : f32 to vector<32x64xf32>
    %126 = arith.addf %125, %124 : vector<32x64xf32>
    %cst_86 = arith.constant 5.000000e-01 : f32
    %127 = vector.broadcast %cst_86 : f32 to vector<32x64xf32>
    %128 = arith.mulf %127, %126 : vector<32x64xf32>
    %129 = arith.mulf %116, %128 : vector<32x64xf32>
    %cst_87 = arith.constant 0.000000e+00 : f32
    %130 = vector.broadcast %cst_87 : f32 to vector<38x64xf32>
    %c0_88 = arith.constant 0 : index
    %c0_89 = arith.constant 0 : index
    %131 = vector.load %arg20[%c0_88, %c0_89] : memref<38x64xf32, #tpu.memory_space<vmem>>, vector<38x64xf32>
    tpu.vector_store %arg20[%c0_88, %c0_89], %130 {strides = array<i32>} : memref<38x64xf32, #tpu.memory_space<vmem>>, vector<38x64xf32>,
    %c3 = arith.constant 3 : index
    %c0_90 = arith.constant 0 : index
    %132 = vector.load %arg20[%c3, %c0_90] : memref<38x64xf32, #tpu.memory_space<vmem>>, vector<32x64xf32>
    tpu.vector_store %arg20[%c3, %c0_90], %129 {strides = array<i32>} : memref<38x64xf32, #tpu.memory_space<vmem>>, vector<32x64xf32>,
    %133 = tpu.iota {dimensions = array<i32: 0>} : vector<32x1xi32>
    %c2_i32 = arith.constant 2 : i32
    %c0_i32 = arith.constant 0 : i32
    %134 = arith.cmpi eq, %c2_i32, %c0_i32 : i32
    %c1_i32 = arith.constant 1 : i32
    %135 = arith.select %134, %c1_i32, %c2_i32 : i32
    %136 = vector.broadcast %135 : i32 to vector<32x1xi32>
    %137 = arith.remsi %133, %136 : vector<32x1xi32>
    %c0_i32_91 = arith.constant 0 : i32
    %138 = vector.broadcast %c0_i32_91 : i32 to vector<32x1xi32>
    %139 = arith.cmpi ne, %137, %138 : vector<32x1xi32>
    %c0_i32_92 = arith.constant 0 : i32
    %140 = vector.broadcast %c0_i32_92 : i32 to vector<32x1xi32>
    %141 = arith.cmpi slt, %137, %140 : vector<32x1xi32>
    %c0_i32_93 = arith.constant 0 : i32
    %142 = arith.cmpi slt, %135, %c0_i32_93 : i32
    %143 = vector.broadcast %142 : i1 to vector<32x1xi1>
    %144 = vector.broadcast %143 : vector<32x1xi1> to vector<32x1xi1>
    %145 = arith.xori %141, %144 : vector<32x1xi1>
    %146 = arith.andi %145, %139 : vector<32x1xi1>
    %147 = vector.broadcast %135 : i32 to vector<32x1xi32>
    %148 = arith.addi %137, %147 : vector<32x1xi32>
    %149 = arith.select %146, %148, %137 : vector<32x1xi1>, vector<32x1xi32>
    %c0_i32_94 = arith.constant 0 : i32
    %150 = vector.broadcast %c0_i32_94 : i32 to vector<32x1xi32>
    %151 = arith.cmpi sgt, %149, %150 : vector<32x1xi32>
    %152 = arith.extui %151 : vector<32x1xi1> to vector<32x1xi32>
    %153 = arith.sitofp %152 : vector<32x1xi32> to vector<32x1xf32>
    %c1_i32_95 = arith.constant 1 : i32
    %154 = vector.broadcast %c1_i32_95 : i32 to vector<32x1xi32>
    %155 = arith.cmpi slt, %149, %154 : vector<32x1xi32>
    %156 = arith.extui %155 : vector<32x1xi1> to vector<32x1xi32>
    %157 = arith.sitofp %156 : vector<32x1xi32> to vector<32x1xf32>
    %cst_96 = arith.constant 0.000000e+00 : f32
    %158 = vector.broadcast %cst_96 : f32 to vector<32x64xf32>
    %c0_97 = arith.constant 0 : index
    %c0_98 = arith.constant 0 : index
    %159 = vector.load %arg20[%c0_97, %c0_98] : memref<38x64xf32, #tpu.memory_space<vmem>>, vector<32x64xf32>
    %160 = vector.broadcast %153 : vector<32x1xf32> to vector<32x64xf32>
    %161 = arith.mulf %159, %160 : vector<32x64xf32>
    %c0_99 = arith.constant 0 : index
    %c0_100 = arith.constant 0 : index
    %162 = vector.load %arg13[%c0_99, %c0_100] : memref<9x64xf32, #tpu.memory_space<vmem>>, vector<1x64xf32>
    %163 = vector.broadcast %162 : vector<1x64xf32> to vector<32x64xf32>
    %164 = arith.mulf %161, %163 : vector<32x64xf32>
    %165 = arith.addf %158, %164 : vector<32x64xf32>
    %c1_101 = arith.constant 1 : index
    %c0_102 = arith.constant 0 : index
    %166 = vector.load %arg20[%c1_101, %c0_102] : memref<38x64xf32, #tpu.memory_space<vmem>>, vector<32x64xf32>
    %c1_103 = arith.constant 1 : index
    %c0_104 = arith.constant 0 : index
    %167 = vector.load %arg13[%c1_103, %c0_104] : memref<9x64xf32, #tpu.memory_space<vmem>>, vector<1x64xf32>
    %168 = vector.broadcast %167 : vector<1x64xf32> to vector<32x64xf32>
    %169 = arith.mulf %166, %168 : vector<32x64xf32>
    %170 = arith.addf %165, %169 : vector<32x64xf32>
    %c2_105 = arith.constant 2 : index
    %c0_106 = arith.constant 0 : index
    %171 = vector.load %arg20[%c2_105, %c0_106] : memref<38x64xf32, #tpu.memory_space<vmem>>, vector<32x64xf32>
    %172 = vector.broadcast %157 : vector<32x1xf32> to vector<32x64xf32>
    %173 = arith.mulf %171, %172 : vector<32x64xf32>
    %c2_107 = arith.constant 2 : index
    %c0_108 = arith.constant 0 : index
    %174 = vector.load %arg13[%c2_107, %c0_108] : memref<9x64xf32, #tpu.memory_space<vmem>>, vector<1x64xf32>
    %175 = vector.broadcast %174 : vector<1x64xf32> to vector<32x64xf32>
    %176 = arith.mulf %173, %175 : vector<32x64xf32>
    %177 = arith.addf %170, %176 : vector<32x64xf32>
    %c2_109 = arith.constant 2 : index
    %c0_110 = arith.constant 0 : index
    %178 = vector.load %arg20[%c2_109, %c0_110] : memref<38x64xf32, #tpu.memory_space<vmem>>, vector<32x64xf32>
    %179 = vector.broadcast %153 : vector<32x1xf32> to vector<32x64xf32>
    %180 = arith.mulf %178, %179 : vector<32x64xf32>
    %c3_111 = arith.constant 3 : index
    %c0_112 = arith.constant 0 : index
    %181 = vector.load %arg13[%c3_111, %c0_112] : memref<9x64xf32, #tpu.memory_space<vmem>>, vector<1x64xf32>
    %182 = vector.broadcast %181 : vector<1x64xf32> to vector<32x64xf32>
    %183 = arith.mulf %180, %182 : vector<32x64xf32>
    %184 = arith.addf %177, %183 : vector<32x64xf32>
    %c3_113 = arith.constant 3 : index
    %c0_114 = arith.constant 0 : index
    %185 = vector.load %arg20[%c3_113, %c0_114] : memref<38x64xf32, #tpu.memory_space<vmem>>, vector<32x64xf32>
    %c4 = arith.constant 4 : index
    %c0_115 = arith.constant 0 : index
    %186 = vector.load %arg13[%c4, %c0_115] : memref<9x64xf32, #tpu.memory_space<vmem>>, vector<1x64xf32>
    %187 = vector.broadcast %186 : vector<1x64xf32> to vector<32x64xf32>
    %188 = arith.mulf %185, %187 : vector<32x64xf32>
    %189 = arith.addf %184, %188 : vector<32x64xf32>
    %c4_116 = arith.constant 4 : index
    %c0_117 = arith.constant 0 : index
    %190 = vector.load %arg20[%c4_116, %c0_117] : memref<38x64xf32, #tpu.memory_space<vmem>>, vector<32x64xf32>
    %191 = vector.broadcast %157 : vector<32x1xf32> to vector<32x64xf32>
    %192 = arith.mulf %190, %191 : vector<32x64xf32>
    %c5 = arith.constant 5 : index
    %c0_118 = arith.constant 0 : index
    %193 = vector.load %arg13[%c5, %c0_118] : memref<9x64xf32, #tpu.memory_space<vmem>>, vector<1x64xf32>
    %194 = vector.broadcast %193 : vector<1x64xf32> to vector<32x64xf32>
    %195 = arith.mulf %192, %194 : vector<32x64xf32>
    %196 = arith.addf %189, %195 : vector<32x64xf32>
    %c4_119 = arith.constant 4 : index
    %c0_120 = arith.constant 0 : index
    %197 = vector.load %arg20[%c4_119, %c0_120] : memref<38x64xf32, #tpu.memory_space<vmem>>, vector<32x64xf32>
    %198 = vector.broadcast %153 : vector<32x1xf32> to vector<32x64xf32>
    %199 = arith.mulf %197, %198 : vector<32x64xf32>
    %c6 = arith.constant 6 : index
    %c0_121 = arith.constant 0 : index
    %200 = vector.load %arg13[%c6, %c0_121] : memref<9x64xf32, #tpu.memory_space<vmem>>, vector<1x64xf32>
    %201 = vector.broadcast %200 : vector<1x64xf32> to vector<32x64xf32>
    %202 = arith.mulf %199, %201 : vector<32x64xf32>
    %203 = arith.addf %196, %202 : vector<32x64xf32>
    %c5_122 = arith.constant 5 : index
    %c0_123 = arith.constant 0 : index
    %204 = vector.load %arg20[%c5_122, %c0_123] : memref<38x64xf32, #tpu.memory_space<vmem>>, vector<32x64xf32>
    %c7 = arith.constant 7 : index
    %c0_124 = arith.constant 0 : index
    %205 = vector.load %arg13[%c7, %c0_124] : memref<9x64xf32, #tpu.memory_space<vmem>>, vector<1x64xf32>
    %206 = vector.broadcast %205 : vector<1x64xf32> to vector<32x64xf32>
    %207 = arith.mulf %204, %206 : vector<32x64xf32>
    %208 = arith.addf %203, %207 : vector<32x64xf32>
    %c6_125 = arith.constant 6 : index
    %c0_126 = arith.constant 0 : index
    %209 = vector.load %arg20[%c6_125, %c0_126] : memref<38x64xf32, #tpu.memory_space<vmem>>, vector<32x64xf32>
    %210 = vector.broadcast %157 : vector<32x1xf32> to vector<32x64xf32>
    %211 = arith.mulf %209, %210 : vector<32x64xf32>
    %c8 = arith.constant 8 : index
    %c0_127 = arith.constant 0 : index
    %212 = vector.load %arg13[%c8, %c0_127] : memref<9x64xf32, #tpu.memory_space<vmem>>, vector<1x64xf32>
    %213 = vector.broadcast %212 : vector<1x64xf32> to vector<32x64xf32>
    %214 = arith.mulf %211, %213 : vector<32x64xf32>
    %215 = arith.addf %208, %214 : vector<32x64xf32>
    %c0_128 = arith.constant 0 : index
    %c0_129 = arith.constant 0 : index
    %216 = vector.load %arg14[%c0_128, %c0_129] : memref<1x64xf32, #tpu.memory_space<vmem>>, vector<1x64xf32>
    %217 = vector.broadcast %216 : vector<1x64xf32> to vector<32x64xf32>
    %218 = arith.addf %215, %217 : vector<32x64xf32>
    %219 = arith.mulf %218, %218 : vector<32x64xf32>
    %220 = arith.mulf %218, %219 : vector<32x64xf32>
    %cst_130 = arith.constant 4.471500e-02 : f32
    %221 = vector.broadcast %cst_130 : f32 to vector<32x64xf32>
    %222 = arith.mulf %221, %220 : vector<32x64xf32>
    %223 = arith.addf %218, %222 : vector<32x64xf32>
    %cst_131 = arith.constant 0.797884583 : f32
    %224 = vector.broadcast %cst_131 : f32 to vector<32x64xf32>
    %225 = arith.mulf %224, %223 : vector<32x64xf32>
    %226 = math.tanh %225 : vector<32x64xf32>
    %cst_132 = arith.constant 1.000000e+00 : f32
    %227 = vector.broadcast %cst_132 : f32 to vector<32x64xf32>
    %228 = arith.addf %227, %226 : vector<32x64xf32>
    %cst_133 = arith.constant 5.000000e-01 : f32
    %229 = vector.broadcast %cst_133 : f32 to vector<32x64xf32>
    %230 = arith.mulf %229, %228 : vector<32x64xf32>
    %231 = arith.mulf %218, %230 : vector<32x64xf32>
    %c0_134 = arith.constant 0 : index
    %c0_135 = arith.constant 0 : index
    %232 = vector.load %arg15[%c0_134, %c0_135] : memref<64x16xf32, #tpu.memory_space<vmem>>, vector<64x16xf32>
    %cst_136 = arith.constant dense<0.000000e+00> : vector<32x16xf32>
    %233 = tpu.matmul %231, %232, %cst_136 {dimension_numbers = #tpu.dot_dimension_numbers<[1], [0], [0], [1], [0, 0, 1, 1], [], []>, precision = #tpu.contract_precision<fp32>} : vector<32x64xf32>, vector<64x16xf32>, vector<32x16xf32> -> vector<32x16xf32>
    %c0_137 = arith.constant 0 : index
    %c0_138 = arith.constant 0 : index
    %234 = vector.load %arg16[%c0_137, %c0_138] : memref<1x16xf32, #tpu.memory_space<vmem>>, vector<1x16xf32>
    %235 = vector.broadcast %234 : vector<1x16xf32> to vector<32x16xf32>
    %236 = arith.addf %233, %235 : vector<32x16xf32>
    %237 = arith.addf %84, %236 : vector<32x16xf32>
    %c0_139 = arith.constant 0 : index
    %c0_140 = arith.constant 0 : index
    %c0_141 = arith.constant 0 : index
    %238 = vector.load %arg17[%c0_139, %c0_140, %c0_141] : memref<1x32x16xf32, #tpu.memory_space<vmem>>, vector<1x32x16xf32>
    %239 = vector.shape_cast %238 : vector<1x32x16xf32> to vector<32x16xf32>
    %240 = vector.shape_cast %237 : vector<32x16xf32> to vector<1x32x16xf32>
    tpu.vector_store %arg17[%c0_139, %c0_140, %c0_141], %240 {strides = array<i32>} : memref<1x32x16xf32, #tpu.memory_space<vmem>>, vector<1x32x16xf32>,
    return
  }
  func.func @transform_0(%arg0: i32) -> (i32, i32, i32) {
    %c0_i32 = arith.constant 0 : i32
    %c0_i32_0 = arith.constant 0 : i32
    %c0_i32_1 = arith.constant 0 : i32
    return %arg0, %c0_i32, %c0_i32_0 : i32, i32, i32
  }
  func.func @transform_1(%arg0: i32) -> (i32, i32) {
    %c0_i32 = arith.constant 0 : i32
    %c0_i32_0 = arith.constant 0 : i32
    %c0_i32_1 = arith.constant 0 : i32
    return %c0_i32, %c0_i32_0 : i32, i32
  }
  func.func @transform_2(%arg0: i32) -> (i32, i32) {
    %c0_i32 = arith.constant 0 : i32
    %c0_i32_0 = arith.constant 0 : i32
    %c0_i32_1 = arith.constant 0 : i32
    return %c0_i32, %c0_i32_0 : i32, i32
  }
  func.func @transform_3(%arg0: i32) -> (i32, i32, i32) {
    %c0_i32 = arith.constant 0 : i32
    %c0_i32_0 = arith.constant 0 : i32
    %c0_i32_1 = arith.constant 0 : i32
    %c0_i32_2 = arith.constant 0 : i32
    return %c0_i32, %c0_i32_0, %c0_i32_1 : i32, i32, i32
  }
  func.func @transform_4(%arg0: i32) -> (i32, i32) {
    %c0_i32 = arith.constant 0 : i32
    %c0_i32_0 = arith.constant 0 : i32
    %c0_i32_1 = arith.constant 0 : i32
    return %c0_i32, %c0_i32_0 : i32, i32
  }
  func.func @transform_5(%arg0: i32) -> (i32, i32, i32) {
    %c0_i32 = arith.constant 0 : i32
    %c0_i32_0 = arith.constant 0 : i32
    %c0_i32_1 = arith.constant 0 : i32
    %c0_i32_2 = arith.constant 0 : i32
    return %c0_i32, %c0_i32_0, %c0_i32_1 : i32, i32, i32
  }
  func.func @transform_6(%arg0: i32) -> (i32, i32) {
    %c0_i32 = arith.constant 0 : i32
    %c0_i32_0 = arith.constant 0 : i32
    %c0_i32_1 = arith.constant 0 : i32
    return %c0_i32, %c0_i32_0 : i32, i32
  }
  func.func @transform_7(%arg0: i32) -> (i32, i32) {
    %c0_i32 = arith.constant 0 : i32
    %c0_i32_0 = arith.constant 0 : i32
    %c0_i32_1 = arith.constant 0 : i32
    return %c0_i32, %c0_i32_0 : i32, i32
  }
  func.func @transform_8(%arg0: i32) -> (i32, i32) {
    %c0_i32 = arith.constant 0 : i32
    %c0_i32_0 = arith.constant 0 : i32
    %c0_i32_1 = arith.constant 0 : i32
    return %c0_i32, %c0_i32_0 : i32, i32
  }
  func.func @transform_9(%arg0: i32) -> (i32, i32) {
    %c0_i32 = arith.constant 0 : i32
    %c0_i32_0 = arith.constant 0 : i32
    %c0_i32_1 = arith.constant 0 : i32
    return %c0_i32, %c0_i32_0 : i32, i32
  }
  func.func @transform_10(%arg0: i32) -> (i32, i32) {
    %c0_i32 = arith.constant 0 : i32
    %c0_i32_0 = arith.constant 0 : i32
    %c0_i32_1 = arith.constant 0 : i32
    return %c0_i32, %c0_i32_0 : i32, i32
  }
  func.func @transform_11(%arg0: i32) -> (i32, i32) {
    %c0_i32 = arith.constant 0 : i32
    %c0_i32_0 = arith.constant 0 : i32
    %c0_i32_1 = arith.constant 0 : i32
    return %c0_i32, %c0_i32_0 : i32, i32
  }
  func.func @transform_12(%arg0: i32) -> (i32, i32) {
    %c0_i32 = arith.constant 0 : i32
    %c0_i32_0 = arith.constant 0 : i32
    %c0_i32_1 = arith.constant 0 : i32
    return %c0_i32, %c0_i32_0 : i32, i32
  }
  func.func @transform_13(%arg0: i32) -> (i32, i32) {
    %c0_i32 = arith.constant 0 : i32
    %c0_i32_0 = arith.constant 0 : i32
    %c0_i32_1 = arith.constant 0 : i32
    return %c0_i32, %c0_i32_0 : i32, i32
  }
  func.func @transform_14(%arg0: i32) -> (i32, i32) {
    %c0_i32 = arith.constant 0 : i32
    %c0_i32_0 = arith.constant 0 : i32
    %c0_i32_1 = arith.constant 0 : i32
    return %c0_i32, %c0_i32_0 : i32, i32
  }
  func.func @transform_15(%arg0: i32) -> (i32, i32) {
    %c0_i32 = arith.constant 0 : i32
    %c0_i32_0 = arith.constant 0 : i32
    %c0_i32_1 = arith.constant 0 : i32
    return %c0_i32, %c0_i32_0 : i32, i32
  }
  func.func @transform_16(%arg0: i32) -> (i32, i32, i32) {
    %c0_i32 = arith.constant 0 : i32
    %c0_i32_0 = arith.constant 0 : i32
    %c0_i32_1 = arith.constant 0 : i32
    return %arg0, %c0_i32, %c0_i32_0 : i32, i32, i32
  }
  func.func @transform_17(%arg0: i32) -> (i32, i32, i32) {
    %c0_i32 = arith.constant 0 : i32
    %c0_i32_0 = arith.constant 0 : i32
    %c0_i32_1 = arith.constant 0 : i32
    return %arg0, %c0_i32, %c0_i32_0 : i32, i32, i32
  }
}

</mosaic_0001>

<llo_original>
// kernel: tpu_custom_call.1
$region0: #{tpu_custom_call.1}
  #allocation0 [shape = 'u32[]', space=smem, size = 0x4, offset = 0x4, fixed_abs, tag = 'smem constant byte address 0x4 - core index']
  #allocation1 [shape = 'u32[72,128]{1,0:T(1,128)}', space=vmem, size = 0x9000, scoped, tag = 'internal scratch']
  #allocation2 [shape = 'f32[34,16]{1,0:T(8,128)}', space=vmem, size = 0x5000, scoped, tag = 'scratch operand']
  #allocation3 [shape = 'f32[38,64]{1,0:T(8,128)}', space=vmem, size = 0x5000, scoped, tag = 'scratch operand']
  #allocation4 [shape = 'f32[1,1]{1,0:T(1,128)S(1)}', space=vmem, size = 0x200, scoped, tag = 'scoped memory for tpu_custom_call.1']
  %s0 = inlined_call_operand.vmem [shape: f32[2,32,16], index: 0, kind: input, shape index: {}]
  %s1 = inlined_call_operand.vmem [shape: f32[1,16], index: 1, kind: input, shape index: {}]
  %s2 = inlined_call_operand.vmem [shape: f32[1,16], index: 2, kind: input, shape index: {}]
  %s3 = inlined_call_operand.vmem [shape: f32[3,16,16], index: 3, kind: input, shape index: {}]
  %s4 = inlined_call_operand.<no memory space> [shape: f32[1,1], index: 4, kind: input, shape index: {}]
  %s5 = inlined_call_operand.vmem [shape: f32[3,16,16], index: 5, kind: input, shape index: {}]
  %s6 = inlined_call_operand.vmem [shape: f32[16,4], index: 6, kind: input, shape index: {}]
  %s7 = inlined_call_operand.vmem [shape: f32[4,16], index: 7, kind: input, shape index: {}]
  %s8 = inlined_call_operand.vmem [shape: f32[1,16], index: 8, kind: input, shape index: {}]
  %s9 = inlined_call_operand.vmem [shape: f32[1,16], index: 9, kind: input, shape index: {}]
  %s10 = inlined_call_operand.vmem [shape: f32[16,64], index: 10, kind: input, shape index: {}]
  %s11 = inlined_call_operand.vmem [shape: f32[1,64], index: 11, kind: input, shape index: {}]
  %s12 = inlined_call_operand.vmem [shape: f32[9,64], index: 12, kind: input, shape index: {}]
  %s13 = inlined_call_operand.vmem [shape: f32[1,64], index: 13, kind: input, shape index: {}]
  %s14 = inlined_call_operand.vmem [shape: f32[64,16], index: 14, kind: input, shape index: {}]
  %s15 = inlined_call_operand.vmem [shape: f32[1,16], index: 15, kind: input, shape index: {}]
  %s16 = inlined_call_operand.vmem [shape: f32[2,32,16], index: 16, kind: output, shape index: {0}]
  %s17 = inlined_call_operand.hbm [shape: f32[2,1,16], index: 17, kind: output, shape index: {1}]
  %18 = xla_tuple %s16, %s17
  %s19 = sld [smem:[#allocation0]]
  $region105: #{tpu_custom_call.1} parent=0
    _
  %s21 = ssub.s32 1, %s19
  %s22 = scalar_select 0, %s21, %s19
  %v23 = vstv %s4
  %24 = vst [vmem:[#allocation4] sm:$0x1] %v23
  $region1: #{tpu_custom_call.1} parent=0
    #allocation5 [shape = 'u8[1024]{0}', space=vmem, size = 0x400, scoped, tag = 'output window, operand 1']
    #allocation6 [shape = 's32[2]{0}', space=sflag, size = 0x8, scoped, tag = 'scoped memory for tpu_custom_call.1']
    %25 = vsyncpa [#allocation6], 0
    %s26 = scalar_lea.sflag [#allocation6], 1
    %27 = vsyncpa %s26, 0
    loop: start=0, step=1, limit=4
    $region2: #{tpu_custom_call.1} parent=1 // loop_pre_header
      _
    $region3: #{tpu_custom_call.1} parent=1 // loop_header
      %s29 = sphi 0, %s33
      %p30 = scmp.ge.s32.totalorder %s29, 4
      %s39 = sphi 0, %s41
      %s42 = sphi 0, %s39
      %s43 = sphi 0, %s42
      %s59 = sphi 0, %s43
      %s63 = sphi 0, %s63
      %s65 = sphi 0, %s63
      %s66 = sphi 0, %s65
      %s80 = sphi 0, %s66
      %s84 = sphi 0, %s84
      %s86 = sphi 0, %s84
      %s87 = sphi 0, %s86
      %s101 = sphi 0, %s87
      %s105 = sphi 0, %s105
      %s107 = sphi 0, %s105
      %s108 = sphi 0, %s107
      %s122 = sphi 0, %s108
      %s126 = sphi 0, %s126
      %s128 = sphi 0, %s126
      %s129 = sphi 0, %s128
      %s143 = sphi 0, %s129
      %s147 = sphi 0, %s147
      %s149 = sphi 0, %s147
      %s150 = sphi 0, %s149
      %s164 = sphi 0, %s150
      %s168 = sphi 0, %s168
      %s170 = sphi 0, %s168
      %s171 = sphi 0, %s170
      %s185 = sphi 0, %s171
      %s189 = sphi 0, %s189
      %s191 = sphi 0, %s189
      %s192 = sphi 0, %s191
      %s206 = sphi 0, %s192
      %s210 = sphi 0, %s210
      %s212 = sphi 0, %s210
      %s213 = sphi 0, %s212
      %s227 = sphi 0, %s213
      %s231 = sphi 0, %s231
      %s233 = sphi 0, %s231
      %s234 = sphi 0, %s233
      %s248 = sphi 0, %s234
      %s252 = sphi 0, %s252
      %s254 = sphi 0, %s252
      %s255 = sphi 0, %s254
      %s269 = sphi 0, %s255
      %s273 = sphi 0, %s273
      %s275 = sphi 0, %s273
      %s276 = sphi 0, %s275
      %s290 = sphi 0, %s276
      %s294 = sphi 0, %s294
      %s296 = sphi 0, %s294
      %s297 = sphi 0, %s296
      %s311 = sphi 0, %s297
      %s315 = sphi 0, %s315
      %s317 = sphi 0, %s315
      %s318 = sphi 0, %s317
      %s332 = sphi 0, %s318
      %s336 = sphi 0, %s336
      %s338 = sphi 0, %s336
      %s339 = sphi 0, %s338
      %s353 = sphi 0, %s339
      %s357 = sphi 0, %s357
      %s359 = sphi 0, %s357
      %s360 = sphi 0, %s359
      %s374 = sphi 0, %s360
      %s380 = sphi 0, %s382
      %s383 = sphi 0, %s380
      %s384 = sphi 0, %s383
      %s400 = sphi 0, %s384
      %s406 = sphi 0, %s408
      %s409 = sphi 0, %s406
      %s410 = sphi 0, %s409
      %s426 = sphi 0, %s410
    $region4: #{tpu_custom_call.1} parent=1 // loop_header_branch
      %32 = sbr.rel (%p30) target = $region8
    $region5: #{tpu_custom_call.1} parent=1 // loop_body
      %s34 = ssub.s32 %s29, 1
      %s35 = ssub.s32 %s29, 2
      %s36 = sadd.s32 %s29, 1
      %s37 = ssub.s32 %s29, %s36
      %p38 = scmp.eq.s32.totalorder %s37, 0
      %s40 = sadd.s32 %s39, 1
      %s41 = scalar_select %p38, %s39, %s40
      %p44 = pneg %p38
      %p45 = scmp.eq.s32.totalorder %s29, 1
      %p46 = por %p44, %p45
      %p47 = scmp.ne.s32.totalorder %s39, %s42
      %p48 = scmp.eq.s32.totalorder %s29, 0
      %p49 = por %p47, %p48
      %p50 = scmp.ne.s32.totalorder %s39, %s42
      %p51 = scmp.eq.s32.totalorder %s34, 1
      %p52 = por %p50, %p51
      %p53 = scmp.ne.s32.totalorder %s42, %s43
      %p54 = scmp.eq.s32.totalorder %s34, 0
      %p55 = por %p53, %p54
      %p56 = scmp.ne.s32.totalorder %s42, %s43
      %p57 = scmp.eq.s32.totalorder %s35, 1
      %p58 = por %p56, %p57
      %p60 = scmp.ne.s32.totalorder %s43, %s59
      %p61 = scmp.eq.s32.totalorder %s35, 0
      %p62 = por %p60, %p61
      %s64 = sadd.s32 %s63, 1
      %p67 = scmp.eq.s32.totalorder %s29, 1
      %p68 = scmp.ne.s32.totalorder %s63, %s65
      %p69 = scmp.eq.s32.totalorder %s29, 0
      %p70 = por %p68, %p69
      %p71 = scmp.ne.s32.totalorder %s63, %s65
      %p72 = scmp.eq.s32.totalorder %s34, 1
      %p73 = por %p71, %p72
      %p74 = scmp.ne.s32.totalorder %s65, %s66
      %p75 = scmp.eq.s32.totalorder %s34, 0
      %p76 = por %p74, %p75
      %p77 = scmp.ne.s32.totalorder %s65, %s66
      %p78 = scmp.eq.s32.totalorder %s35, 1
      %p79 = por %p77, %p78
      %p81 = scmp.ne.s32.totalorder %s66, %s80
      %p82 = scmp.eq.s32.totalorder %s35, 0
      %p83 = por %p81, %p82
      %s85 = sadd.s32 %s84, 1
      %p88 = scmp.eq.s32.totalorder %s29, 1
      %p89 = scmp.ne.s32.totalorder %s84, %s86
      %p90 = scmp.eq.s32.totalorder %s29, 0
      %p91 = por %p89, %p90
      %p92 = scmp.ne.s32.totalorder %s84, %s86
      %p93 = scmp.eq.s32.totalorder %s34, 1
      %p94 = por %p92, %p93
      %p95 = scmp.ne.s32.totalorder %s86, %s87
      %p96 = scmp.eq.s32.totalorder %s34, 0
      %p97 = por %p95, %p96
      %p98 = scmp.ne.s32.totalorder %s86, %s87
      %p99 = scmp.eq.s32.totalorder %s35, 1
      %p100 = por %p98, %p99
      %p102 = scmp.ne.s32.totalorder %s87, %s101
      %p103 = scmp.eq.s32.totalorder %s35, 0
      %p104 = por %p102, %p103
      %s106 = sadd.s32 %s105, 1
      %p109 = scmp.eq.s32.totalorder %s29, 1
      %p110 = scmp.ne.s32.totalorder %s105, %s107
      %p111 = scmp.eq.s32.totalorder %s29, 0
      %p112 = por %p110, %p111
      %p113 = scmp.ne.s32.totalorder %s105, %s107
      %p114 = scmp.eq.s32.totalorder %s34, 1
      %p115 = por %p113, %p114
      %p116 = scmp.ne.s32.totalorder %s107, %s108
      %p117 = scmp.eq.s32.totalorder %s34, 0
      %p118 = por %p116, %p117
      %p119 = scmp.ne.s32.totalorder %s107, %s108
      %p120 = scmp.eq.s32.totalorder %s35, 1
      %p121 = por %p119, %p120
      %p123 = scmp.ne.s32.totalorder %s108, %s122
      %p124 = scmp.eq.s32.totalorder %s35, 0
      %p125 = por %p123, %p124
      %s127 = sadd.s32 %s126, 1
      %p130 = scmp.eq.s32.totalorder %s29, 1
      %p131 = scmp.ne.s32.totalorder %s126, %s128
      %p132 = scmp.eq.s32.totalorder %s29, 0
      %p133 = por %p131, %p132
      %p134 = scmp.ne.s32.totalorder %s126, %s128
      %p135 = scmp.eq.s32.totalorder %s34, 1
      %p136 = por %p134, %p135
      %p137 = scmp.ne.s32.totalorder %s128, %s129
      %p138 = scmp.eq.s32.totalorder %s34, 0
      %p139 = por %p137, %p138
      %p140 = scmp.ne.s32.totalorder %s128, %s129
      %p141 = scmp.eq.s32.totalorder %s35, 1
      %p142 = por %p140, %p141
      %p144 = scmp.ne.s32.totalorder %s129, %s143
      %p145 = scmp.eq.s32.totalorder %s35, 0
      %p146 = por %p144, %p145
      %s148 = sadd.s32 %s147, 1
      %p151 = scmp.eq.s32.totalorder %s29, 1
      %p152 = scmp.ne.s32.totalorder %s147, %s149
      %p153 = scmp.eq.s32.totalorder %s29, 0
      %p154 = por %p152, %p153
      %p155 = scmp.ne.s32.totalorder %s147, %s149
      %p156 = scmp.eq.s32.totalorder %s34, 1
      %p157 = por %p155, %p156
      %p158 = scmp.ne.s32.totalorder %s149, %s150
      %p159 = scmp.eq.s32.totalorder %s34, 0
      %p160 = por %p158, %p159
      %p161 = scmp.ne.s32.totalorder %s149, %s150
      %p162 = scmp.eq.s32.totalorder %s35, 1
      %p163 = por %p161, %p162
      %p165 = scmp.ne.s32.totalorder %s150, %s164
      %p166 = scmp.eq.s32.totalorder %s35, 0
      %p167 = por %p165, %p166
      %s169 = sadd.s32 %s168, 1
      %p172 = scmp.eq.s32.totalorder %s29, 1
      %p173 = scmp.ne.s32.totalorder %s168, %s170
      %p174 = scmp.eq.s32.totalorder %s29, 0
      %p175 = por %p173, %p174
      %p176 = scmp.ne.s32.totalorder %s168, %s170
      %p177 = scmp.eq.s32.totalorder %s34, 1
      %p178 = por %p176, %p177
      %p179 = scmp.ne.s32.totalorder %s170, %s171
      %p180 = scmp.eq.s32.totalorder %s34, 0
      %p181 = por %p179, %p180
      %p182 = scmp.ne.s32.totalorder %s170, %s171
      %p183 = scmp.eq.s32.totalorder %s35, 1
      %p184 = por %p182, %p183
      %p186 = scmp.ne.s32.totalorder %s171, %s185
      %p187 = scmp.eq.s32.totalorder %s35, 0
      %p188 = por %p186, %p187
      %s190 = sadd.s32 %s189, 1
      %p193 = scmp.eq.s32.totalorder %s29, 1
      %p194 = scmp.ne.s32.totalorder %s189, %s191
      %p195 = scmp.eq.s32.totalorder %s29, 0
      %p196 = por %p194, %p195
      %p197 = scmp.ne.s32.totalorder %s189, %s191
      %p198 = scmp.eq.s32.totalorder %s34, 1
      %p199 = por %p197, %p198
      %p200 = scmp.ne.s32.totalorder %s191, %s192
      %p201 = scmp.eq.s32.totalorder %s34, 0
      %p202 = por %p200, %p201
      %p203 = scmp.ne.s32.totalorder %s191, %s192
      %p204 = scmp.eq.s32.totalorder %s35, 1
      %p205 = por %p203, %p204
      %p207 = scmp.ne.s32.totalorder %s192, %s206
      %p208 = scmp.eq.s32.totalorder %s35, 0
      %p209 = por %p207, %p208
      %s211 = sadd.s32 %s210, 1
      %p214 = scmp.eq.s32.totalorder %s29, 1
      %p215 = scmp.ne.s32.totalorder %s210, %s212
      %p216 = scmp.eq.s32.totalorder %s29, 0
      %p217 = por %p215, %p216
      %p218 = scmp.ne.s32.totalorder %s210, %s212
      %p219 = scmp.eq.s32.totalorder %s34, 1
      %p220 = por %p218, %p219
      %p221 = scmp.ne.s32.totalorder %s212, %s213
      %p222 = scmp.eq.s32.totalorder %s34, 0
      %p223 = por %p221, %p222
      %p224 = scmp.ne.s32.totalorder %s212, %s213
      %p225 = scmp.eq.s32.totalorder %s35, 1
      %p226 = por %p224, %p225
      %p228 = scmp.ne.s32.totalorder %s213, %s227
      %p229 = scmp.eq.s32.totalorder %s35, 0
      %p230 = por %p228, %p229
      %s232 = sadd.s32 %s231, 1
      %p235 = scmp.eq.s32.totalorder %s29, 1
      %p236 = scmp.ne.s32.totalorder %s231, %s233
      %p237 = scmp.eq.s32.totalorder %s29, 0
      %p238 = por %p236, %p237
      %p239 = scmp.ne.s32.totalorder %s231, %s233
      %p240 = scmp.eq.s32.totalorder %s34, 1
      %p241 = por %p239, %p240
      %p242 = scmp.ne.s32.totalorder %s233, %s234
      %p243 = scmp.eq.s32.totalorder %s34, 0
      %p244 = por %p242, %p243
      %p245 = scmp.ne.s32.totalorder %s233, %s234
      %p246 = scmp.eq.s32.totalorder %s35, 1
      %p247 = por %p245, %p246
      %p249 = scmp.ne.s32.totalorder %s234, %s248
      %p250 = scmp.eq.s32.totalorder %s35, 0
      %p251 = por %p249, %p250
      %s253 = sadd.s32 %s252, 1
      %p256 = scmp.eq.s32.totalorder %s29, 1
      %p257 = scmp.ne.s32.totalorder %s252, %s254
      %p258 = scmp.eq.s32.totalorder %s29, 0
      %p259 = por %p257, %p258
      %p260 = scmp.ne.s32.totalorder %s252, %s254
      %p261 = scmp.eq.s32.totalorder %s34, 1
      %p262 = por %p260, %p261
      %p263 = scmp.ne.s32.totalorder %s254, %s255
      %p264 = scmp.eq.s32.totalorder %s34, 0
      %p265 = por %p263, %p264
      %p266 = scmp.ne.s32.totalorder %s254, %s255
      %p267 = scmp.eq.s32.totalorder %s35, 1
      %p268 = por %p266, %p267
      %p270 = scmp.ne.s32.totalorder %s255, %s269
      %p271 = scmp.eq.s32.totalorder %s35, 0
      %p272 = por %p270, %p271
      %s274 = sadd.s32 %s273, 1
      %p277 = scmp.eq.s32.totalorder %s29, 1
      %p278 = scmp.ne.s32.totalorder %s273, %s275
      %p279 = scmp.eq.s32.totalorder %s29, 0
      %p280 = por %p278, %p279
      %p281 = scmp.ne.s32.totalorder %s273, %s275
      %p282 = scmp.eq.s32.totalorder %s34, 1
      %p283 = por %p281, %p282
      %p284 = scmp.ne.s32.totalorder %s275, %s276
      %p285 = scmp.eq.s32.totalorder %s34, 0
      %p286 = por %p284, %p285
      %p287 = scmp.ne.s32.totalorder %s275, %s276
      %p288 = scmp.eq.s32.totalorder %s35, 1
      %p289 = por %p287, %p288
      %p291 = scmp.ne.s32.totalorder %s276, %s290
      %p292 = scmp.eq.s32.totalorder %s35, 0
      %p293 = por %p291, %p292
      %s295 = sadd.s32 %s294, 1
      %p298 = scmp.eq.s32.totalorder %s29, 1
      %p299 = scmp.ne.s32.totalorder %s294, %s296
      %p300 = scmp.eq.s32.totalorder %s29, 0
      %p301 = por %p299, %p300
      %p302 = scmp.ne.s32.totalorder %s294, %s296
      %p303 = scmp.eq.s32.totalorder %s34, 1
      %p304 = por %p302, %p303
      %p305 = scmp.ne.s32.totalorder %s296, %s297
      %p306 = scmp.eq.s32.totalorder %s34, 0
      %p307 = por %p305, %p306
      %p308 = scmp.ne.s32.totalorder %s296, %s297
      %p309 = scmp.eq.s32.totalorder %s35, 1
      %p310 = por %p308, %p309
      %p312 = scmp.ne.s32.totalorder %s297, %s311
      %p313 = scmp.eq.s32.totalorder %s35, 0
      %p314 = por %p312, %p313
      %s316 = sadd.s32 %s315, 1
      %p319 = scmp.eq.s32.totalorder %s29, 1
      %p320 = scmp.ne.s32.totalorder %s315, %s317
      %p321 = scmp.eq.s32.totalorder %s29, 0
      %p322 = por %p320, %p321
      %p323 = scmp.ne.s32.totalorder %s315, %s317
      %p324 = scmp.eq.s32.totalorder %s34, 1
      %p325 = por %p323, %p324
      %p326 = scmp.ne.s32.totalorder %s317, %s318
      %p327 = scmp.eq.s32.totalorder %s34, 0
      %p328 = por %p326, %p327
      %p329 = scmp.ne.s32.totalorder %s317, %s318
      %p330 = scmp.eq.s32.totalorder %s35, 1
      %p331 = por %p329, %p330
      %p333 = scmp.ne.s32.totalorder %s318, %s332
      %p334 = scmp.eq.s32.totalorder %s35, 0
      %p335 = por %p333, %p334
      %s337 = sadd.s32 %s336, 1
      %p340 = scmp.eq.s32.totalorder %s29, 1
      %p341 = scmp.ne.s32.totalorder %s336, %s338
      %p342 = scmp.eq.s32.totalorder %s29, 0
      %p343 = por %p341, %p342
      %p344 = scmp.ne.s32.totalorder %s336, %s338
      %p345 = scmp.eq.s32.totalorder %s34, 1
      %p346 = por %p344, %p345
      %p347 = scmp.ne.s32.totalorder %s338, %s339
      %p348 = scmp.eq.s32.totalorder %s34, 0
      %p349 = por %p347, %p348
      %p350 = scmp.ne.s32.totalorder %s338, %s339
      %p351 = scmp.eq.s32.totalorder %s35, 1
      %p352 = por %p350, %p351
      %p354 = scmp.ne.s32.totalorder %s339, %s353
      %p355 = scmp.eq.s32.totalorder %s35, 0
      %p356 = por %p354, %p355
      %s358 = sadd.s32 %s357, 1
      %p361 = scmp.eq.s32.totalorder %s29, 1
      %p362 = scmp.ne.s32.totalorder %s357, %s359
      %p363 = scmp.eq.s32.totalorder %s29, 0
      %p364 = por %p362, %p363
      %p365 = scmp.ne.s32.totalorder %s357, %s359
      %p366 = scmp.eq.s32.totalorder %s34, 1
      %p367 = por %p365, %p366
      %p368 = scmp.ne.s32.totalorder %s359, %s360
      %p369 = scmp.eq.s32.totalorder %s34, 0
      %p370 = por %p368, %p369
      %p371 = scmp.ne.s32.totalorder %s359, %s360
      %p372 = scmp.eq.s32.totalorder %s35, 1
      %p373 = por %p371, %p372
      %p375 = scmp.ne.s32.totalorder %s360, %s374
      %p376 = scmp.eq.s32.totalorder %s35, 0
      %p377 = por %p375, %p376
      %s378 = ssub.s32 %s29, %s36
      %p379 = scmp.eq.s32.totalorder %s378, 0
      %s381 = sadd.s32 %s380, 1
      %s382 = scalar_select %p379, %s380, %s381
      %p385 = pneg %p379
      %p386 = scmp.eq.s32.totalorder %s29, 1
      %p387 = por %p385, %p386
      %p388 = scmp.ne.s32.totalorder %s380, %s383
      %p389 = scmp.eq.s32.totalorder %s29, 0
      %p390 = por %p388, %p389
      %p391 = scmp.ne.s32.totalorder %s380, %s383
      %p392 = scmp.eq.s32.totalorder %s34, 1
      %p393 = por %p391, %p392
      %p394 = scmp.ne.s32.totalorder %s383, %s384
      %p395 = scmp.eq.s32.totalorder %s34, 0
      %p396 = por %p394, %p395
      %p397 = scmp.ne.s32.totalorder %s383, %s384
      %p398 = scmp.eq.s32.totalorder %s35, 1
      %p399 = por %p397, %p398
      %p401 = scmp.ne.s32.totalorder %s384, %s400
      %p402 = scmp.eq.s32.totalorder %s35, 0
      %p403 = por %p401, %p402
      %s404 = ssub.s32 %s29, %s36
      %p405 = scmp.eq.s32.totalorder %s404, 0
      %s407 = sadd.s32 %s406, 1
      %s408 = scalar_select %p405, %s406, %s407
      %p411 = pneg %p405
      %p412 = scmp.eq.s32.totalorder %s29, 1
      %p413 = por %p411, %p412
      %p414 = scmp.ne.s32.totalorder %s406, %s409
      %p415 = scmp.eq.s32.totalorder %s29, 0
      %p416 = por %p414, %p415
      %p417 = scmp.ne.s32.totalorder %s406, %s409
      %p418 = scmp.eq.s32.totalorder %s34, 1
      %p419 = por %p417, %p418
      %p420 = scmp.ne.s32.totalorder %s409, %s410
      %p421 = scmp.eq.s32.totalorder %s34, 0
      %p422 = por %p420, %p421
      %p423 = scmp.ne.s32.totalorder %s409, %s410
      %p424 = scmp.eq.s32.totalorder %s35, 1
      %p425 = por %p423, %p424
      %p427 = scmp.ne.s32.totalorder %s410, %s426
      %p428 = scmp.eq.s32.totalorder %s35, 0
      %p429 = por %p427, %p428
      %p430 = scmp.le.s32.totalorder 1, %s29
      %p431 = scmp.lt.s32.totalorder %s29, 3
      %p432 = pnand %p430, %p431
      %p433 = pneg %p432
      // Predicated region
      $region9: #{tpu_custom_call.1} parent=5 // pred_check
        _
      $region10: #{tpu_custom_call.1} parent=5 // pred_check_branch
        %435 = sbr.rel (%p432) target = $region12
      $region11: #{tpu_custom_call.1} parent=5 // pred_region
        %s436 = ssub.s32 %s29, 1
        // Predicated region
        $region13: #{tpu_custom_call.1} parent=11 // pred_check
          %p437 = pneg %p76
        $region14: #{tpu_custom_call.1} parent=11 // pred_check_branch
          %439 = sbr.rel (%p437) target = $region16
        $region15: #{tpu_custom_call.1} parent=11 // pred_region
          _
        $region16: #{tpu_custom_call.1} parent=11 // pred_fallthru
          _
        // Predicated region
        $region17: #{tpu_custom_call.1} parent=11 // pred_check
          %p440 = pneg %p97
        $region18: #{tpu_custom_call.1} parent=11 // pred_check_branch
          %442 = sbr.rel (%p440) target = $region20
        $region19: #{tpu_custom_call.1} parent=11 // pred_region
          _
        $region20: #{tpu_custom_call.1} parent=11 // pred_fallthru
          _
        // Predicated region
        $region21: #{tpu_custom_call.1} parent=11 // pred_check
          %p443 = pneg %p118
        $region22: #{tpu_custom_call.1} parent=11 // pred_check_branch
          %445 = sbr.rel (%p443) target = $region24
        $region23: #{tpu_custom_call.1} parent=11 // pred_region
          _
        $region24: #{tpu_custom_call.1} parent=11 // pred_fallthru
          _
        // Predicated region
        $region25: #{tpu_custom_call.1} parent=11 // pred_check
          %p446 = pneg %p139
        $region26: #{tpu_custom_call.1} parent=11 // pred_check_branch
          %448 = sbr.rel (%p446) target = $region28
        $region27: #{tpu_custom_call.1} parent=11 // pred_region
          _
        $region28: #{tpu_custom_call.1} parent=11 // pred_fallthru
          _
        // Predicated region
        $region29: #{tpu_custom_call.1} parent=11 // pred_check
          %p449 = pneg %p160
        $region30: #{tpu_custom_call.1} parent=11 // pred_check_branch
          %451 = sbr.rel (%p449) target = $region32
        $region31: #{tpu_custom_call.1} parent=11 // pred_region
          _
        $region32: #{tpu_custom_call.1} parent=11 // pred_fallthru
          _
        // Predicated region
        $region33: #{tpu_custom_call.1} parent=11 // pred_check
          %p452 = pneg %p181
        $region34: #{tpu_custom_call.1} parent=11 // pred_check_branch
          %454 = sbr.rel (%p452) target = $region36
        $region35: #{tpu_custom_call.1} parent=11 // pred_region
          _
        $region36: #{tpu_custom_call.1} parent=11 // pred_fallthru
          _
        // Predicated region
        $region37: #{tpu_custom_call.1} parent=11 // pred_check
          %p455 = pneg %p202
        $region38: #{tpu_custom_call.1} parent=11 // pred_check_branch
          %457 = sbr.rel (%p455) target = $region40
        $region39: #{tpu_custom_call.1} parent=11 // pred_region
          _
        $region40: #{tpu_custom_call.1} parent=11 // pred_fallthru
          _
        // Predicated region
        $region41: #{tpu_custom_call.1} parent=11 // pred_check
          %p458 = pneg %p223
        $region42: #{tpu_custom_call.1} parent=11 // pred_check_branch
          %460 = sbr.rel (%p458) target = $region44
        $region43: #{tpu_custom_call.1} parent=11 // pred_region
          _
        $region44: #{tpu_custom_call.1} parent=11 // pred_fallthru
          _
        // Predicated region
        $region45: #{tpu_custom_call.1} parent=11 // pred_check
          %p461 = pneg %p244
        $region46: #{tpu_custom_call.1} parent=11 // pred_check_branch
          %463 = sbr.rel (%p461) target = $region48
        $region47: #{tpu_custom_call.1} parent=11 // pred_region
          _
        $region48: #{tpu_custom_call.1} parent=11 // pred_fallthru
          _
        // Predicated region
        $region49: #{tpu_custom_call.1} parent=11 // pred_check
          %p464 = pneg %p265
        $region50: #{tpu_custom_call.1} parent=11 // pred_check_branch
          %466 = sbr.rel (%p464) target = $region52
        $region51: #{tpu_custom_call.1} parent=11 // pred_region
          _
        $region52: #{tpu_custom_call.1} parent=11 // pred_fallthru
          _
        // Predicated region
        $region53: #{tpu_custom_call.1} parent=11 // pred_check
          %p467 = pneg %p286
        $region54: #{tpu_custom_call.1} parent=11 // pred_check_branch
          %469 = sbr.rel (%p467) target = $region56
        $region55: #{tpu_custom_call.1} parent=11 // pred_region
          _
        $region56: #{tpu_custom_call.1} parent=11 // pred_fallthru
          _
        // Predicated region
        $region57: #{tpu_custom_call.1} parent=11 // pred_check
          %p470 = pneg %p307
        $region58: #{tpu_custom_call.1} parent=11 // pred_check_branch
          %472 = sbr.rel (%p470) target = $region60
        $region59: #{tpu_custom_call.1} parent=11 // pred_region
          _
        $region60: #{tpu_custom_call.1} parent=11 // pred_fallthru
          _
        // Predicated region
        $region61: #{tpu_custom_call.1} parent=11 // pred_check
          %p473 = pneg %p328
        $region62: #{tpu_custom_call.1} parent=11 // pred_check_branch
          %475 = sbr.rel (%p473) target = $region64
        $region63: #{tpu_custom_call.1} parent=11 // pred_region
          _
        $region64: #{tpu_custom_call.1} parent=11 // pred_fallthru
          _
        // Predicated region
        $region65: #{tpu_custom_call.1} parent=11 // pred_check
          %p476 = pneg %p349
        $region66: #{tpu_custom_call.1} parent=11 // pred_check_branch
          %478 = sbr.rel (%p476) target = $region68
        $region67: #{tpu_custom_call.1} parent=11 // pred_region
          _
        $region68: #{tpu_custom_call.1} parent=11 // pred_fallthru
          _
        // Predicated region
        $region69: #{tpu_custom_call.1} parent=11 // pred_check
          %p479 = pneg %p370
        $region70: #{tpu_custom_call.1} parent=11 // pred_check_branch
          %481 = sbr.rel (%p479) target = $region72
        $region71: #{tpu_custom_call.1} parent=11 // pred_region
          _
        $region72: #{tpu_custom_call.1} parent=11 // pred_fallthru
          _
      $region12: #{tpu_custom_call.1} parent=5 // pred_fallthru
        _
      %p482 = scmp.lt.s32.totalorder %s29, 2
      // Predicated region
      $region73: #{tpu_custom_call.1} parent=5 // pred_check
        %p483 = pneg %p482
      $region74: #{tpu_custom_call.1} parent=5 // pred_check_branch
        %485 = sbr.rel (%p483) target = $region76
      $region75: #{tpu_custom_call.1} parent=5 // pred_region
        // Predicated region
        $region77: #{tpu_custom_call.1} parent=75 // pred_check
          %p486 = pneg %p49
        $region78: #{tpu_custom_call.1} parent=75 // pred_check_branch
          %488 = sbr.rel (%p486) target = $region80
        $region79: #{tpu_custom_call.1} parent=75 // pred_region
          %p489 = scmp.lt.s32.totalorder %s29, 1
          %s490 = scalar_select %p489, %s29, 1
          %s491 = smul.addr %s490, 4
          %s492 = smul.addr %s491, 8
          %s493 = scalar_lea.vmem %s0, %s492
        $region80: #{tpu_custom_call.1} parent=75 // pred_fallthru
          _
      $region76: #{tpu_custom_call.1} parent=5 // pred_fallthru
        _
      %p494 = scmp.le.s32.totalorder 1, %s29
      %p495 = scmp.lt.s32.totalorder %s29, 3
      %p496 = pnand %p494, %p495
      %p497 = pneg %p496
      // Predicated region
      $region81: #{tpu_custom_call.1} parent=5 // pred_check
        _
      $region82: #{tpu_custom_call.1} parent=5 // pred_check_branch
        %499 = sbr.rel (%p496) target = $region84
      $region83: #{tpu_custom_call.1} parent=5 // pred_region
        %s500 = ssub.s32 %s29, 1
        %p501 = scmp.lt.s32.totalorder %s34, 1
        %s502 = scalar_select %p501, %s34, 1
        %s503 = smul.addr %s502, 4
        %s504 = smul.addr %s503, 8
        %s505 = scalar_lea.vmem %s0, %s504
        %p506 = pneg %p55
        %p507 = pneg %p52
        %p508 = pneg %p76
        %p509 = pneg %p73
        %p510 = pneg %p97
        %p511 = pneg %p94
        %p512 = pneg %p118
        %p513 = pneg %p115
        %p514 = pneg %p139
        %p515 = pneg %p136
        %p516 = pneg %p160
        %p517 = pneg %p157
        %p518 = pneg %p181
        %p519 = pneg %p178
        %p520 = pneg %p202
        %p521 = pneg %p199
        %p522 = pneg %p223
        %p523 = pneg %p220
        %p524 = pneg %p244
        %p525 = pneg %p241
        %p526 = pneg %p265
        %p527 = pneg %p262
        %p528 = pneg %p286
        %p529 = pneg %p283
        %p530 = pneg %p307
        %p531 = pneg %p304
        %p532 = pneg %p328
        %p533 = pneg %p325
        %p534 = pneg %p349
        %p535 = pneg %p346
        %p536 = pneg %p370
        %p537 = pneg %p367
        %p538 = pneg %p396
        %p539 = pneg %p393
        %p540 = scmp.lt.s32.totalorder %s34, 1
        %s541 = scalar_select %p540, %s34, 1
        %s542 = smul.addr %s541, 4
        %s543 = smul.addr %s542, 8
        %s544 = scalar_lea.vmem %s16, %s543
        %p545 = pneg %p422
        %p546 = pneg %p419
        %s547 = sand.u32 %s409, 1
        %s548 = scalar_lea.sflag [#allocation6], %s547
        %s549 = sand.u32 %s409, 1
        %s550 = scalar_lea.vmem [#allocation5], %s549
        %p551 = scmp.lt.s32.totalorder %s34, 1
        %s552 = scalar_select %p551, %s34, 1
        %s553 = smul.addr %s552, 4
        %s554 = smul.addr %s553, 8
        %s555 = scalar_lea.vmem %s0, %s554
        %p556 = scmp.lt.s32.totalorder %s34, 1
        %s557 = scalar_select %p556, %s34, 1
        %s558 = smul.addr %s557, 4
        %s559 = smul.addr %s558, 8
        %s560 = scalar_lea.vmem %s16, %s559
        %v561 = vld [vmem:[%s555] sm:$0xff]
        %v562 = vld [vmem:[%s555 + $0x8] sm:$0xff]
        %v563 = vld [vmem:[%s555 + $0x10] sm:$0xff]
        %v564 = vld [vmem:[%s555 + $0x18] sm:$0xff]
        %vm565 = vcmask 130048
        %v566 = vsel %vm565, %v561, 0.0
        %567 = vadd.xlane.f32.xlu0 %v566
        %v568 = vpop.xlane.xlu0 %567
        %v569 = vsel %vm565, %v562, 0.0
        %570 = vadd.xlane.f32.xlu0 %v569
        %v571 = vpop.xlane.xlu0 %570
        %v572 = vsel %vm565, %v563, 0.0
        %573 = vadd.xlane.f32.xlu0 %v572
        %v574 = vpop.xlane.xlu0 %573
        %v575 = vsel %vm565, %v564, 0.0
        %576 = vadd.xlane.f32.xlu0 %v575
        %v577 = vpop.xlane.xlu0 %576
        %v578 = vrcp.pop 16.0
        %v579 = vmul.f32 16.0, %v578
        %v580 = vsub.f32 1.0, %v579
        %v581 = vmul.f32 %v578, %v580
        %v582 = vadd.f32 %v578, %v581
        %vm583 = vweird.f32 %v578
        %v584 = vsel %vm583, %v578, %v582
        %v585 = vmul.f32 %v568, %v584
        %v586 = vmul.f32 %v571, %v584
        %v587 = vmul.f32 %v574, %v584
        %v588 = vmul.f32 %v577, %v584
        %v589 = vsub.f32 %v561, %v585
        %v590 = vsub.f32 %v562, %v586
        %v591 = vsub.f32 %v563, %v587
        %v592 = vsub.f32 %v564, %v588
        %v593 = vmul.f32 %v589, %v589
        %v594 = vmul.f32 %v590, %v590
        %v595 = vmul.f32 %v591, %v591
        %v596 = vmul.f32 %v592, %v592
        %v597 = vsel %vm565, %v593, 0.0
        %598 = vadd.xlane.f32.xlu0 %v597
        %v599 = vpop.xlane.xlu0 %598
        %v600 = vsel %vm565, %v594, 0.0
        %601 = vadd.xlane.f32.xlu0 %v600
        %v602 = vpop.xlane.xlu0 %601
        %v603 = vsel %vm565, %v595, 0.0
        %604 = vadd.xlane.f32.xlu0 %v603
        %v605 = vpop.xlane.xlu0 %604
        %v606 = vsel %vm565, %v596, 0.0
        %607 = vadd.xlane.f32.xlu0 %v606
        %v608 = vpop.xlane.xlu0 %607
        %v609 = vmul.f32 %v599, %v584
        %v610 = vmul.f32 %v602, %v584
        %v611 = vmul.f32 %v605, %v584
        %v612 = vmul.f32 %v608, %v584
        %v613 = vadd.f32 %v609, 1e-05
        %v614 = vadd.f32 %v610, 1e-05
        %v615 = vadd.f32 %v611, 1e-05
        %v616 = vadd.f32 %v612, 1e-05
        %v617 = vrsqrt.pop %v613
        %v618 = vmul.f32 %v617, %v613
        %v619 = vmul.f32 %v618, %v617
        %v620 = vmul.f32 0.5, %v619
        %v621 = vsub.f32 1.5, %v620
        %v622 = vmul.f32 %v617, %v621
        %vm623 = vweird.f32 %v613
        %vm624 = vweird.f32 %v617
        %vm625 = vmor %vm623, %vm624
        %v626 = vsel %vm625, %v617, %v622
        %v627 = vrsqrt.pop %v614
        %v628 = vmul.f32 %v627, %v614
        %v629 = vmul.f32 %v628, %v627
        %v630 = vmul.f32 0.5, %v629
        %v631 = vsub.f32 1.5, %v630
        %v632 = vmul.f32 %v627, %v631
        %vm633 = vweird.f32 %v614
        %vm634 = vweird.f32 %v627
        %vm635 = vmor %vm633, %vm634
        %v636 = vsel %vm635, %v627, %v632
        %v637 = vrsqrt.pop %v615
        %v638 = vmul.f32 %v637, %v615
        %v639 = vmul.f32 %v638, %v637
        %v640 = vmul.f32 0.5, %v639
        %v641 = vsub.f32 1.5, %v640
        %v642 = vmul.f32 %v637, %v641
        %vm643 = vweird.f32 %v615
        %vm644 = vweird.f32 %v637
        %vm645 = vmor %vm643, %vm644
        %v646 = vsel %vm645, %v637, %v642
        %v647 = vrsqrt.pop %v616
        %v648 = vmul.f32 %v647, %v616
        %v649 = vmul.f32 %v648, %v647
        %v650 = vmul.f32 0.5, %v649
        %v651 = vsub.f32 1.5, %v650
        %v652 = vmul.f32 %v647, %v651
        %vm653 = vweird.f32 %v616
        %vm654 = vweird.f32 %v647
        %vm655 = vmor %vm653, %vm654
        %v656 = vsel %vm655, %v647, %v652
        %v657 = vmul.f32 %v589, %v626
        %v658 = vmul.f32 %v590, %v636
        %v659 = vmul.f32 %v591, %v646
        %v660 = vmul.f32 %v592, %v656
        %v661 = vld [vmem:[%s1] sm:$0x1]
        %v663 = vperm.slane %v661, 0
        %v665 = vmul.f32 %v657, %v663
        %v666 = vmul.f32 %v658, %v663
        %v667 = vmul.f32 %v659, %v663
        %v668 = vmul.f32 %v660, %v663
        %v669 = vld [vmem:[%s2] sm:$0x1]
        %v671 = vperm.slane %v669, 0
        %v673 = vadd.f32 %v665, %v671
        %v674 = vadd.f32 %v666, %v671
        %v675 = vadd.f32 %v667, %v671
        %v676 = vadd.f32 %v668, %v671
        %677 = vst.msk [vmem:[#allocation2] sm:$0xff] %vm565, 0.0
        %678 = vst.msk [vmem:[#allocation2 + $0x8] sm:$0xff] %vm565, 0.0
        %679 = vst.msk [vmem:[#allocation2 + $0x10] sm:$0xff] %vm565, 0.0
        %680 = vst.msk [vmem:[#allocation2 + $0x18] sm:$0xff] %vm565, 0.0
        %vm681 = vcmask 123904
        %682 = vst.msk [vmem:[#allocation2 + $0x20] sm:$0x3] %vm681, 0.0
        %683 = vst.msk [vmem:[#allocation2 + $0x1] sm:$0xff] %vm565, %v673
        %684 = vst.msk [vmem:[#allocation2 + $0x9] sm:$0xff] %vm565, %v674
        %685 = vst.msk [vmem:[#allocation2 + $0x11] sm:$0xff] %vm565, %v675
        %686 = vst.msk [vmem:[#allocation2 + $0x19] sm:$0xff] %vm565, %v676
        %v687 = vld [vmem:[#allocation2] sm:$0xff]
        %v688 = vld [vmem:[#allocation2 + $0x8] sm:$0xff]
        %v689 = vld [vmem:[#allocation2 + $0x10] sm:$0xff]
        %v690 = vld [vmem:[#allocation2 + $0x18] sm:$0xff]
        %v691 = vld [vmem:[%s3] sm:$0xff]
        %v692 = vld [vmem:[%s3 + $0x8] sm:$0xff]
        %v693 = vld [vmem:[#allocation2 + $0x1] sm:$0xff]
        %v694 = vld [vmem:[#allocation2 + $0x9] sm:$0xff]
        %v695 = vld [vmem:[#allocation2 + $0x11] sm:$0xff]
        %v696 = vld [vmem:[#allocation2 + $0x19] sm:$0xff]
        %s697 = scalar_lea.vmem %s3, 16
        %v698 = vld [vmem:[%s697] sm:$0xff]
        %v699 = vld [vmem:[%s697 + $0x8] sm:$0xff]
        %v701 = vsel %vm565, %v693, 0
        %v704 = vsel %vm565, %v694, 0
        %v707 = vsel %vm565, %v695, 0
        %v710 = vsel %vm565, %v696, 0
        %712 = vmatpush.msra.mxu0 0.0
        %713 = vmatpush.msra.mxu0 0.0
        %714 = vmatpush.msra.mxu0 0.0
        %715 = vmatpush.msra.mxu0 0.0
        %716 = vmatpush.msra.mxu0 0.0
        %717 = vmatpush.msra.mxu0 0.0
        %718 = vmatpush.msra.mxu0 0.0
        %719 = vmatpush.msra.mxu0 0.0
        %720 = vmatpush.msra.mxu0 0.0
        %721 = vmatpush.msra.mxu0 0.0
        %722 = vmatpush.msra.mxu0 0.0
        %723 = vmatpush.msra.mxu0 0.0
        %724 = vmatpush.msra.mxu0 0.0
        %725 = vmatpush.msra.mxu0 0.0
        %v726 = vand.u32 %v699, 4294901760
        %727 = vmatpush.msra.mxu0 %v726
        %v728 = vand.u32 %v698, 4294901760
        %729 = vmatpush.msra.mxu0 %v728
        %v730 = vand.u32 %v701, 4294901760
        %v731 = vsub.f32 %v701, %v730
        %v732 = vand.u32 %v731, 4294901760
        %v733 = vsub.f32 %v731, %v732
        %v734 = vand.u32 %v733, 4294901760
        %735 = vmatmul.f32.gmra.mxu0 %v734
        %v736 = vpop.f32.mrf.mxu0
        %v737 = vadd.f32 0.0, %v736
        %v738 = vand.u32 %v704, 4294901760
        %v739 = vsub.f32 %v704, %v738
        %v740 = vand.u32 %v739, 4294901760
        %v741 = vsub.f32 %v739, %v740
        %v742 = vand.u32 %v741, 4294901760
        %743 = vmatmul.f32.gmra.mxu0 %v742
        %v744 = vpop.f32.mrf.mxu0
        %v745 = vadd.f32 0.0, %v744
        %v746 = vand.u32 %v707, 4294901760
        %v747 = vsub.f32 %v707, %v746
        %v748 = vand.u32 %v747, 4294901760
        %v749 = vsub.f32 %v747, %v748
        %v750 = vand.u32 %v749, 4294901760
        %751 = vmatmul.f32.gmra.mxu0 %v750
        %v752 = vpop.f32.mrf.mxu0
        %v753 = vadd.f32 0.0, %v752
        %v754 = vand.u32 %v710, 4294901760
        %v755 = vsub.f32 %v710, %v754
        %v756 = vand.u32 %v755, 4294901760
        %v757 = vsub.f32 %v755, %v756
        %v758 = vand.u32 %v757, 4294901760
        %759 = vmatmul.f32.gmra.mxu0 %v758
        %v760 = vpop.f32.mrf.mxu0
        %v761 = vadd.f32 0.0, %v760
        %762 = vdwg.mxu0
        %763 = vmatpush.msra.mxu0 0.0
        %764 = vmatpush.msra.mxu0 0.0
        %765 = vmatpush.msra.mxu0 0.0
        %766 = vmatpush.msra.mxu0 0.0
        %767 = vmatpush.msra.mxu0 0.0
        %768 = vmatpush.msra.mxu0 0.0
        %769 = vmatpush.msra.mxu0 0.0
        %770 = vmatpush.msra.mxu0 0.0
        %771 = vmatpush.msra.mxu0 0.0
        %772 = vmatpush.msra.mxu0 0.0
        %773 = vmatpush.msra.mxu0 0.0
        %774 = vmatpush.msra.mxu0 0.0
        %775 = vmatpush.msra.mxu0 0.0
        %776 = vmatpush.msra.mxu0 0.0
        %v777 = vand.u32 %v699, 4294901760
        %v778 = vsub.f32 %v699, %v777
        %v779 = vand.u32 %v778, 4294901760
        %v780 = vsub.f32 %v778, %v779
        %v781 = vand.u32 %v780, 4294901760
        %782 = vmatpush.msra.mxu0 %v781
        %v783 = vand.u32 %v698, 4294901760
        %v784 = vsub.f32 %v698, %v783
        %v785 = vand.u32 %v784, 4294901760
        %v786 = vsub.f32 %v784, %v785
        %v787 = vand.u32 %v786, 4294901760
        %788 = vmatpush.msra.mxu0 %v787
        %v789 = vand.u32 %v701, 4294901760
        %790 = vmatmul.f32.gmra.mxu0 %v789
        %v791 = vpop.f32.mrf.mxu0
        %v792 = vadd.f32 %v737, %v791
        %v793 = vand.u32 %v704, 4294901760
        %794 = vmatmul.f32.gmra.mxu0 %v793
        %v795 = vpop.f32.mrf.mxu0
        %v796 = vadd.f32 %v745, %v795
        %v797 = vand.u32 %v707, 4294901760
        %798 = vmatmul.f32.gmra.mxu0 %v797
        %v799 = vpop.f32.mrf.mxu0
        %v800 = vadd.f32 %v753, %v799
        %v801 = vand.u32 %v710, 4294901760
        %802 = vmatmul.f32.gmra.mxu0 %v801
        %v803 = vpop.f32.mrf.mxu0
        %v804 = vadd.f32 %v761, %v803
        %805 = vdwg.mxu0
        %806 = vmatpush.msra.mxu0 0.0
        %807 = vmatpush.msra.mxu0 0.0
        %808 = vmatpush.msra.mxu0 0.0
        %809 = vmatpush.msra.mxu0 0.0
        %810 = vmatpush.msra.mxu0 0.0
        %811 = vmatpush.msra.mxu0 0.0
        %812 = vmatpush.msra.mxu0 0.0
        %813 = vmatpush.msra.mxu0 0.0
        %814 = vmatpush.msra.mxu0 0.0
        %815 = vmatpush.msra.mxu0 0.0
        %816 = vmatpush.msra.mxu0 0.0
        %817 = vmatpush.msra.mxu0 0.0
        %818 = vmatpush.msra.mxu0 0.0
        %819 = vmatpush.msra.mxu0 0.0
        %v820 = vand.u32 %v699, 4294901760
        %v821 = vsub.f32 %v699, %v820
        %822 = vmatpush.msra.mxu0 %v821
        %v823 = vand.u32 %v698, 4294901760
        %v824 = vsub.f32 %v698, %v823
        %825 = vmatpush.msra.mxu0 %v824
        %v826 = vand.u32 %v701, 4294901760
        %v827 = vsub.f32 %v701, %v826
        %828 = vmatmul.f32.gmra.mxu0 %v827
        %v829 = vpop.f32.mrf.mxu0
        %v830 = vadd.f32 %v792, %v829
        %v831 = vand.u32 %v704, 4294901760
        %v832 = vsub.f32 %v704, %v831
        %833 = vmatmul.f32.gmra.mxu0 %v832
        %v834 = vpop.f32.mrf.mxu0
        %v835 = vadd.f32 %v796, %v834
        %v836 = vand.u32 %v707, 4294901760
        %v837 = vsub.f32 %v707, %v836
        %838 = vmatmul.f32.gmra.mxu0 %v837
        %v839 = vpop.f32.mrf.mxu0
        %v840 = vadd.f32 %v800, %v839
        %v841 = vand.u32 %v710, 4294901760
        %v842 = vsub.f32 %v710, %v841
        %843 = vmatmul.f32.gmra.mxu0 %v842
        %v844 = vpop.f32.mrf.mxu0
        %v845 = vadd.f32 %v804, %v844
        %846 = vdwg.mxu0
        %847 = vmatpush.msra.mxu0 0.0
        %848 = vmatpush.msra.mxu0 0.0
        %849 = vmatpush.msra.mxu0 0.0
        %850 = vmatpush.msra.mxu0 0.0
        %851 = vmatpush.msra.mxu0 0.0
        %852 = vmatpush.msra.mxu0 0.0
        %853 = vmatpush.msra.mxu0 0.0
        %854 = vmatpush.msra.mxu0 0.0
        %855 = vmatpush.msra.mxu0 0.0
        %856 = vmatpush.msra.mxu0 0.0
        %857 = vmatpush.msra.mxu0 0.0
        %858 = vmatpush.msra.mxu0 0.0
        %859 = vmatpush.msra.mxu0 0.0
        %860 = vmatpush.msra.mxu0 0.0
        %v861 = vand.u32 %v699, 4294901760
        %862 = vmatpush.msra.mxu0 %v861
        %v863 = vand.u32 %v698, 4294901760
        %864 = vmatpush.msra.mxu0 %v863
        %v865 = vand.u32 %v701, 4294901760
        %v866 = vsub.f32 %v701, %v865
        %v867 = vand.u32 %v866, 4294901760
        %868 = vmatmul.f32.gmra.mxu0 %v867
        %v869 = vpop.f32.mrf.mxu0
        %v870 = vadd.f32 %v830, %v869
        %v871 = vand.u32 %v704, 4294901760
        %v872 = vsub.f32 %v704, %v871
        %v873 = vand.u32 %v872, 4294901760
        %874 = vmatmul.f32.gmra.mxu0 %v873
        %v875 = vpop.f32.mrf.mxu0
        %v876 = vadd.f32 %v835, %v875
        %v877 = vand.u32 %v707, 4294901760
        %v878 = vsub.f32 %v707, %v877
        %v879 = vand.u32 %v878, 4294901760
        %880 = vmatmul.f32.gmra.mxu0 %v879
        %v881 = vpop.f32.mrf.mxu0
        %v882 = vadd.f32 %v840, %v881
        %v883 = vand.u32 %v710, 4294901760
        %v884 = vsub.f32 %v710, %v883
        %v885 = vand.u32 %v884, 4294901760
        %886 = vmatmul.f32.gmra.mxu0 %v885
        %v887 = vpop.f32.mrf.mxu0
        %v888 = vadd.f32 %v845, %v887
        %889 = vdwg.mxu0
        %890 = vmatpush.msra.mxu0 0.0
        %891 = vmatpush.msra.mxu0 0.0
        %892 = vmatpush.msra.mxu0 0.0
        %893 = vmatpush.msra.mxu0 0.0
        %894 = vmatpush.msra.mxu0 0.0
        %895 = vmatpush.msra.mxu0 0.0
        %896 = vmatpush.msra.mxu0 0.0
        %897 = vmatpush.msra.mxu0 0.0
        %898 = vmatpush.msra.mxu0 0.0
        %899 = vmatpush.msra.mxu0 0.0
        %900 = vmatpush.msra.mxu0 0.0
        %901 = vmatpush.msra.mxu0 0.0
        %902 = vmatpush.msra.mxu0 0.0
        %903 = vmatpush.msra.mxu0 0.0
        %v904 = vand.u32 %v699, 4294901760
        %v905 = vsub.f32 %v699, %v904
        %v906 = vand.u32 %v905, 4294901760
        %907 = vmatpush.msra.mxu0 %v906
        %v908 = vand.u32 %v698, 4294901760
        %v909 = vsub.f32 %v698, %v908
        %v910 = vand.u32 %v909, 4294901760
        %911 = vmatpush.msra.mxu0 %v910
        %v912 = vand.u32 %v701, 4294901760
        %913 = vmatmul.f32.gmra.mxu0 %v912
        %v914 = vpop.f32.mrf.mxu0
        %v915 = vadd.f32 %v870, %v914
        %v916 = vand.u32 %v704, 4294901760
        %917 = vmatmul.f32.gmra.mxu0 %v916
        %v918 = vpop.f32.mrf.mxu0
        %v919 = vadd.f32 %v876, %v918
        %v920 = vand.u32 %v707, 4294901760
        %921 = vmatmul.f32.gmra.mxu0 %v920
        %v922 = vpop.f32.mrf.mxu0
        %v923 = vadd.f32 %v882, %v922
        %v924 = vand.u32 %v710, 4294901760
        %925 = vmatmul.f32.gmra.mxu0 %v924
        %v926 = vpop.f32.mrf.mxu0
        %v927 = vadd.f32 %v888, %v926
        %928 = vdwg.mxu0
        %929 = vmatpush.msra.mxu0 0.0
        %930 = vmatpush.msra.mxu0 0.0
        %931 = vmatpush.msra.mxu0 0.0
        %932 = vmatpush.msra.mxu0 0.0
        %933 = vmatpush.msra.mxu0 0.0
        %934 = vmatpush.msra.mxu0 0.0
        %935 = vmatpush.msra.mxu0 0.0
        %936 = vmatpush.msra.mxu0 0.0
        %937 = vmatpush.msra.mxu0 0.0
        %938 = vmatpush.msra.mxu0 0.0
        %939 = vmatpush.msra.mxu0 0.0
        %940 = vmatpush.msra.mxu0 0.0
        %941 = vmatpush.msra.mxu0 0.0
        %942 = vmatpush.msra.mxu0 0.0
        %v943 = vand.u32 %v699, 4294901760
        %944 = vmatpush.msra.mxu0 %v943
        %v945 = vand.u32 %v698, 4294901760
        %946 = vmatpush.msra.mxu0 %v945
        %v947 = vand.u32 %v701, 4294901760
        %948 = vmatmul.f32.gmra.mxu0 %v947
        %v949 = vpop.f32.mrf.mxu0
        %v950 = vadd.f32 %v915, %v949
        %v951 = vand.u32 %v704, 4294901760
        %952 = vmatmul.f32.gmra.mxu0 %v951
        %v953 = vpop.f32.mrf.mxu0
        %v954 = vadd.f32 %v919, %v953
        %v955 = vand.u32 %v707, 4294901760
        %956 = vmatmul.f32.gmra.mxu0 %v955
        %v957 = vpop.f32.mrf.mxu0
        %v958 = vadd.f32 %v923, %v957
        %v959 = vand.u32 %v710, 4294901760
        %960 = vmatmul.f32.gmra.mxu0 %v959
        %v961 = vpop.f32.mrf.mxu0
        %v962 = vadd.f32 %v927, %v961
        %963 = vdwg.mxu0
        %v965 = vsel %vm565, %v687, 0
        %v968 = vsel %vm565, %v688, 0
        %v971 = vsel %vm565, %v689, 0
        %v974 = vsel %vm565, %v690, 0
        %976 = vmatpush.msra.mxu0 0.0
        %977 = vmatpush.msra.mxu0 0.0
        %978 = vmatpush.msra.mxu0 0.0
        %979 = vmatpush.msra.mxu0 0.0
        %980 = vmatpush.msra.mxu0 0.0
        %981 = vmatpush.msra.mxu0 0.0
        %982 = vmatpush.msra.mxu0 0.0
        %983 = vmatpush.msra.mxu0 0.0
        %984 = vmatpush.msra.mxu0 0.0
        %985 = vmatpush.msra.mxu0 0.0
        %986 = vmatpush.msra.mxu0 0.0
        %987 = vmatpush.msra.mxu0 0.0
        %988 = vmatpush.msra.mxu0 0.0
        %989 = vmatpush.msra.mxu0 0.0
        %v990 = vand.u32 %v692, 4294901760
        %991 = vmatpush.msra.mxu0 %v990
        %v992 = vand.u32 %v691, 4294901760
        %993 = vmatpush.msra.mxu0 %v992
        %v994 = vand.u32 %v965, 4294901760
        %v995 = vsub.f32 %v965, %v994
        %v996 = vand.u32 %v995, 4294901760
        %v997 = vsub.f32 %v995, %v996
        %v998 = vand.u32 %v997, 4294901760
        %999 = vmatmul.f32.gmra.mxu0 %v998
        %v1000 = vpop.f32.mrf.mxu0
        %v1001 = vadd.f32 %v950, %v1000
        %v1002 = vand.u32 %v968, 4294901760
        %v1003 = vsub.f32 %v968, %v1002
        %v1004 = vand.u32 %v1003, 4294901760
        %v1005 = vsub.f32 %v1003, %v1004
        %v1006 = vand.u32 %v1005, 4294901760
        %1007 = vmatmul.f32.gmra.mxu0 %v1006
        %v1008 = vpop.f32.mrf.mxu0
        %v1009 = vadd.f32 %v954, %v1008
        %v1010 = vand.u32 %v971, 4294901760
        %v1011 = vsub.f32 %v971, %v1010
        %v1012 = vand.u32 %v1011, 4294901760
        %v1013 = vsub.f32 %v1011, %v1012
        %v1014 = vand.u32 %v1013, 4294901760
        %1015 = vmatmul.f32.gmra.mxu0 %v1014
        %v1016 = vpop.f32.mrf.mxu0
        %v1017 = vadd.f32 %v958, %v1016
        %v1018 = vand.u32 %v974, 4294901760
        %v1019 = vsub.f32 %v974, %v1018
        %v1020 = vand.u32 %v1019, 4294901760
        %v1021 = vsub.f32 %v1019, %v1020
        %v1022 = vand.u32 %v1021, 4294901760
        %1023 = vmatmul.f32.gmra.mxu0 %v1022
        %v1024 = vpop.f32.mrf.mxu0
        %v1025 = vadd.f32 %v962, %v1024
        %1026 = vdwg.mxu0
        %1027 = vmatpush.msra.mxu0 0.0
        %1028 = vmatpush.msra.mxu0 0.0
        %1029 = vmatpush.msra.mxu0 0.0
        %1030 = vmatpush.msra.mxu0 0.0
        %1031 = vmatpush.msra.mxu0 0.0
        %1032 = vmatpush.msra.mxu0 0.0
        %1033 = vmatpush.msra.mxu0 0.0
        %1034 = vmatpush.msra.mxu0 0.0
        %1035 = vmatpush.msra.mxu0 0.0
        %1036 = vmatpush.msra.mxu0 0.0
        %1037 = vmatpush.msra.mxu0 0.0
        %1038 = vmatpush.msra.mxu0 0.0
        %1039 = vmatpush.msra.mxu0 0.0
        %1040 = vmatpush.msra.mxu0 0.0
        %v1041 = vand.u32 %v692, 4294901760
        %v1042 = vsub.f32 %v692, %v1041
        %v1043 = vand.u32 %v1042, 4294901760
        %v1044 = vsub.f32 %v1042, %v1043
        %v1045 = vand.u32 %v1044, 4294901760
        %1046 = vmatpush.msra.mxu0 %v1045
        %v1047 = vand.u32 %v691, 4294901760
        %v1048 = vsub.f32 %v691, %v1047
        %v1049 = vand.u32 %v1048, 4294901760
        %v1050 = vsub.f32 %v1048, %v1049
        %v1051 = vand.u32 %v1050, 4294901760
        %1052 = vmatpush.msra.mxu0 %v1051
        %v1053 = vand.u32 %v965, 4294901760
        %1054 = vmatmul.f32.gmra.mxu0 %v1053
        %v1055 = vpop.f32.mrf.mxu0
        %v1056 = vadd.f32 %v1001, %v1055
        %v1057 = vand.u32 %v968, 4294901760
        %1058 = vmatmul.f32.gmra.mxu0 %v1057
        %v1059 = vpop.f32.mrf.mxu0
        %v1060 = vadd.f32 %v1009, %v1059
        %v1061 = vand.u32 %v971, 4294901760
        %1062 = vmatmul.f32.gmra.mxu0 %v1061
        %v1063 = vpop.f32.mrf.mxu0
        %v1064 = vadd.f32 %v1017, %v1063
        %v1065 = vand.u32 %v974, 4294901760
        %1066 = vmatmul.f32.gmra.mxu0 %v1065
        %v1067 = vpop.f32.mrf.mxu0
        %v1068 = vadd.f32 %v1025, %v1067
        %1069 = vdwg.mxu0
        %1070 = vmatpush.msra.mxu0 0.0
        %1071 = vmatpush.msra.mxu0 0.0
        %1072 = vmatpush.msra.mxu0 0.0
        %1073 = vmatpush.msra.mxu0 0.0
        %1074 = vmatpush.msra.mxu0 0.0
        %1075 = vmatpush.msra.mxu0 0.0
        %1076 = vmatpush.msra.mxu0 0.0
        %1077 = vmatpush.msra.mxu0 0.0
        %1078 = vmatpush.msra.mxu0 0.0
        %1079 = vmatpush.msra.mxu0 0.0
        %1080 = vmatpush.msra.mxu0 0.0
        %1081 = vmatpush.msra.mxu0 0.0
        %1082 = vmatpush.msra.mxu0 0.0
        %1083 = vmatpush.msra.mxu0 0.0
        %v1084 = vand.u32 %v692, 4294901760
        %v1085 = vsub.f32 %v692, %v1084
        %1086 = vmatpush.msra.mxu0 %v1085
        %v1087 = vand.u32 %v691, 4294901760
        %v1088 = vsub.f32 %v691, %v1087
        %1089 = vmatpush.msra.mxu0 %v1088
        %v1090 = vand.u32 %v965, 4294901760
        %v1091 = vsub.f32 %v965, %v1090
        %1092 = vmatmul.f32.gmra.mxu0 %v1091
        %v1093 = vpop.f32.mrf.mxu0
        %v1094 = vadd.f32 %v1056, %v1093
        %v1095 = vand.u32 %v968, 4294901760
        %v1096 = vsub.f32 %v968, %v1095
        %1097 = vmatmul.f32.gmra.mxu0 %v1096
        %v1098 = vpop.f32.mrf.mxu0
        %v1099 = vadd.f32 %v1060, %v1098
        %v1100 = vand.u32 %v971, 4294901760
        %v1101 = vsub.f32 %v971, %v1100
        %1102 = vmatmul.f32.gmra.mxu0 %v1101
        %v1103 = vpop.f32.mrf.mxu0
        %v1104 = vadd.f32 %v1064, %v1103
        %v1105 = vand.u32 %v974, 4294901760
        %v1106 = vsub.f32 %v974, %v1105
        %1107 = vmatmul.f32.gmra.mxu0 %v1106
        %v1108 = vpop.f32.mrf.mxu0
        %v1109 = vadd.f32 %v1068, %v1108
        %1110 = vdwg.mxu0
        %1111 = vmatpush.msra.mxu0 0.0
        %1112 = vmatpush.msra.mxu0 0.0
        %1113 = vmatpush.msra.mxu0 0.0
        %1114 = vmatpush.msra.mxu0 0.0
        %1115 = vmatpush.msra.mxu0 0.0
        %1116 = vmatpush.msra.mxu0 0.0
        %1117 = vmatpush.msra.mxu0 0.0
        %1118 = vmatpush.msra.mxu0 0.0
        %1119 = vmatpush.msra.mxu0 0.0
        %1120 = vmatpush.msra.mxu0 0.0
        %1121 = vmatpush.msra.mxu0 0.0
        %1122 = vmatpush.msra.mxu0 0.0
        %1123 = vmatpush.msra.mxu0 0.0
        %1124 = vmatpush.msra.mxu0 0.0
        %v1125 = vand.u32 %v692, 4294901760
        %1126 = vmatpush.msra.mxu0 %v1125
        %v1127 = vand.u32 %v691, 4294901760
        %1128 = vmatpush.msra.mxu0 %v1127
        %v1129 = vand.u32 %v965, 4294901760
        %v1130 = vsub.f32 %v965, %v1129
        %v1131 = vand.u32 %v1130, 4294901760
        %1132 = vmatmul.f32.gmra.mxu0 %v1131
        %v1133 = vpop.f32.mrf.mxu0
        %v1134 = vadd.f32 %v1094, %v1133
        %v1135 = vand.u32 %v968, 4294901760
        %v1136 = vsub.f32 %v968, %v1135
        %v1137 = vand.u32 %v1136, 4294901760
        %1138 = vmatmul.f32.gmra.mxu0 %v1137
        %v1139 = vpop.f32.mrf.mxu0
        %v1140 = vadd.f32 %v1099, %v1139
        %v1141 = vand.u32 %v971, 4294901760
        %v1142 = vsub.f32 %v971, %v1141
        %v1143 = vand.u32 %v1142, 4294901760
        %1144 = vmatmul.f32.gmra.mxu0 %v1143
        %v1145 = vpop.f32.mrf.mxu0
        %v1146 = vadd.f32 %v1104, %v1145
        %v1147 = vand.u32 %v974, 4294901760
        %v1148 = vsub.f32 %v974, %v1147
        %v1149 = vand.u32 %v1148, 4294901760
        %1150 = vmatmul.f32.gmra.mxu0 %v1149
        %v1151 = vpop.f32.mrf.mxu0
        %v1152 = vadd.f32 %v1109, %v1151
        %1153 = vdwg.mxu0
        %1154 = vmatpush.msra.mxu0 0.0
        %1155 = vmatpush.msra.mxu0 0.0
        %1156 = vmatpush.msra.mxu0 0.0
        %1157 = vmatpush.msra.mxu0 0.0
        %1158 = vmatpush.msra.mxu0 0.0
        %1159 = vmatpush.msra.mxu0 0.0
        %1160 = vmatpush.msra.mxu0 0.0
        %1161 = vmatpush.msra.mxu0 0.0
        %1162 = vmatpush.msra.mxu0 0.0
        %1163 = vmatpush.msra.mxu0 0.0
        %1164 = vmatpush.msra.mxu0 0.0
        %1165 = vmatpush.msra.mxu0 0.0
        %1166 = vmatpush.msra.mxu0 0.0
        %1167 = vmatpush.msra.mxu0 0.0
        %v1168 = vand.u32 %v692, 4294901760
        %v1169 = vsub.f32 %v692, %v1168
        %v1170 = vand.u32 %v1169, 4294901760
        %1171 = vmatpush.msra.mxu0 %v1170
        %v1172 = vand.u32 %v691, 4294901760
        %v1173 = vsub.f32 %v691, %v1172
        %v1174 = vand.u32 %v1173, 4294901760
        %1175 = vmatpush.msra.mxu0 %v1174
        %v1176 = vand.u32 %v965, 4294901760
        %1177 = vmatmul.f32.gmra.mxu0 %v1176
        %v1178 = vpop.f32.mrf.mxu0
        %v1179 = vadd.f32 %v1134, %v1178
        %v1180 = vand.u32 %v968, 4294901760
        %1181 = vmatmul.f32.gmra.mxu0 %v1180
        %v1182 = vpop.f32.mrf.mxu0
        %v1183 = vadd.f32 %v1140, %v1182
        %v1184 = vand.u32 %v971, 4294901760
        %1185 = vmatmul.f32.gmra.mxu0 %v1184
        %v1186 = vpop.f32.mrf.mxu0
        %v1187 = vadd.f32 %v1146, %v1186
        %v1188 = vand.u32 %v974, 4294901760
        %1189 = vmatmul.f32.gmra.mxu0 %v1188
        %v1190 = vpop.f32.mrf.mxu0
        %v1191 = vadd.f32 %v1152, %v1190
        %1192 = vdwg.mxu0
        %1193 = vmatpush.msra.mxu0 0.0
        %1194 = vmatpush.msra.mxu0 0.0
        %1195 = vmatpush.msra.mxu0 0.0
        %1196 = vmatpush.msra.mxu0 0.0
        %1197 = vmatpush.msra.mxu0 0.0
        %1198 = vmatpush.msra.mxu0 0.0
        %1199 = vmatpush.msra.mxu0 0.0
        %1200 = vmatpush.msra.mxu0 0.0
        %1201 = vmatpush.msra.mxu0 0.0
        %1202 = vmatpush.msra.mxu0 0.0
        %1203 = vmatpush.msra.mxu0 0.0
        %1204 = vmatpush.msra.mxu0 0.0
        %1205 = vmatpush.msra.mxu0 0.0
        %1206 = vmatpush.msra.mxu0 0.0
        %v1207 = vand.u32 %v692, 4294901760
        %1208 = vmatpush.msra.mxu0 %v1207
        %v1209 = vand.u32 %v691, 4294901760
        %1210 = vmatpush.msra.mxu0 %v1209
        %v1211 = vand.u32 %v965, 4294901760
        %1212 = vmatmul.f32.gmra.mxu0 %v1211
        %v1213 = vpop.f32.mrf.mxu0
        %v1214 = vadd.f32 %v1179, %v1213
        %v1215 = vand.u32 %v968, 4294901760
        %1216 = vmatmul.f32.gmra.mxu0 %v1215
        %v1217 = vpop.f32.mrf.mxu0
        %v1218 = vadd.f32 %v1183, %v1217
        %v1219 = vand.u32 %v971, 4294901760
        %1220 = vmatmul.f32.gmra.mxu0 %v1219
        %v1221 = vpop.f32.mrf.mxu0
        %v1222 = vadd.f32 %v1187, %v1221
        %v1223 = vand.u32 %v974, 4294901760
        %1224 = vmatmul.f32.gmra.mxu0 %v1223
        %v1225 = vpop.f32.mrf.mxu0
        %v1226 = vadd.f32 %v1191, %v1225
        %1227 = vdwg.mxu0
        %v1228 = vld [vmem:[#allocation2 + $0x2] sm:$0xff]
        %v1229 = vld [vmem:[#allocation2 + $0xa] sm:$0xff]
        %v1230 = vld [vmem:[#allocation2 + $0x12] sm:$0xff]
        %v1231 = vld [vmem:[#allocation2 + $0x1a] sm:$0xff]
        %s1232 = scalar_lea.vmem %s3, 32
        %v1233 = vld [vmem:[%s1232] sm:$0xff]
        %v1234 = vld [vmem:[%s1232 + $0x8] sm:$0xff]
        %v1236 = vsel %vm565, %v1228, 0
        %v1239 = vsel %vm565, %v1229, 0
        %v1242 = vsel %vm565, %v1230, 0
        %v1245 = vsel %vm565, %v1231, 0
        %1247 = vmatpush.msra.mxu0 0.0
        %1248 = vmatpush.msra.mxu0 0.0
        %1249 = vmatpush.msra.mxu0 0.0
        %1250 = vmatpush.msra.mxu0 0.0
        %1251 = vmatpush.msra.mxu0 0.0
        %1252 = vmatpush.msra.mxu0 0.0
        %1253 = vmatpush.msra.mxu0 0.0
        %1254 = vmatpush.msra.mxu0 0.0
        %1255 = vmatpush.msra.mxu0 0.0
        %1256 = vmatpush.msra.mxu0 0.0
        %1257 = vmatpush.msra.mxu0 0.0
        %1258 = vmatpush.msra.mxu0 0.0
        %1259 = vmatpush.msra.mxu0 0.0
        %1260 = vmatpush.msra.mxu0 0.0
        %v1261 = vand.u32 %v1234, 4294901760
        %1262 = vmatpush.msra.mxu0 %v1261
        %v1263 = vand.u32 %v1233, 4294901760
        %1264 = vmatpush.msra.mxu0 %v1263
        %v1265 = vand.u32 %v1236, 4294901760
        %v1266 = vsub.f32 %v1236, %v1265
        %v1267 = vand.u32 %v1266, 4294901760
        %v1268 = vsub.f32 %v1266, %v1267
        %v1269 = vand.u32 %v1268, 4294901760
        %1270 = vmatmul.f32.gmra.mxu0 %v1269
        %v1271 = vpop.f32.mrf.mxu0
        %v1272 = vadd.f32 0.0, %v1271
        %v1273 = vand.u32 %v1239, 4294901760
        %v1274 = vsub.f32 %v1239, %v1273
        %v1275 = vand.u32 %v1274, 4294901760
        %v1276 = vsub.f32 %v1274, %v1275
        %v1277 = vand.u32 %v1276, 4294901760
        %1278 = vmatmul.f32.gmra.mxu0 %v1277
        %v1279 = vpop.f32.mrf.mxu0
        %v1280 = vadd.f32 0.0, %v1279
        %v1281 = vand.u32 %v1242, 4294901760
        %v1282 = vsub.f32 %v1242, %v1281
        %v1283 = vand.u32 %v1282, 4294901760
        %v1284 = vsub.f32 %v1282, %v1283
        %v1285 = vand.u32 %v1284, 4294901760
        %1286 = vmatmul.f32.gmra.mxu0 %v1285
        %v1287 = vpop.f32.mrf.mxu0
        %v1288 = vadd.f32 0.0, %v1287
        %v1289 = vand.u32 %v1245, 4294901760
        %v1290 = vsub.f32 %v1245, %v1289
        %v1291 = vand.u32 %v1290, 4294901760
        %v1292 = vsub.f32 %v1290, %v1291
        %v1293 = vand.u32 %v1292, 4294901760
        %1294 = vmatmul.f32.gmra.mxu0 %v1293
        %v1295 = vpop.f32.mrf.mxu0
        %v1296 = vadd.f32 0.0, %v1295
        %1297 = vdwg.mxu0
        %1298 = vmatpush.msra.mxu0 0.0
        %1299 = vmatpush.msra.mxu0 0.0
        %1300 = vmatpush.msra.mxu0 0.0
        %1301 = vmatpush.msra.mxu0 0.0
        %1302 = vmatpush.msra.mxu0 0.0
        %1303 = vmatpush.msra.mxu0 0.0
        %1304 = vmatpush.msra.mxu0 0.0
        %1305 = vmatpush.msra.mxu0 0.0
        %1306 = vmatpush.msra.mxu0 0.0
        %1307 = vmatpush.msra.mxu0 0.0
        %1308 = vmatpush.msra.mxu0 0.0
        %1309 = vmatpush.msra.mxu0 0.0
        %1310 = vmatpush.msra.mxu0 0.0
        %1311 = vmatpush.msra.mxu0 0.0
        %v1312 = vand.u32 %v1234, 4294901760
        %v1313 = vsub.f32 %v1234, %v1312
        %v1314 = vand.u32 %v1313, 4294901760
        %v1315 = vsub.f32 %v1313, %v1314
        %v1316 = vand.u32 %v1315, 4294901760
        %1317 = vmatpush.msra.mxu0 %v1316
        %v1318 = vand.u32 %v1233, 4294901760
        %v1319 = vsub.f32 %v1233, %v1318
        %v1320 = vand.u32 %v1319, 4294901760
        %v1321 = vsub.f32 %v1319, %v1320
        %v1322 = vand.u32 %v1321, 4294901760
        %1323 = vmatpush.msra.mxu0 %v1322
        %v1324 = vand.u32 %v1236, 4294901760
        %1325 = vmatmul.f32.gmra.mxu0 %v1324
        %v1326 = vpop.f32.mrf.mxu0
        %v1327 = vadd.f32 %v1272, %v1326
        %v1328 = vand.u32 %v1239, 4294901760
        %1329 = vmatmul.f32.gmra.mxu0 %v1328
        %v1330 = vpop.f32.mrf.mxu0
        %v1331 = vadd.f32 %v1280, %v1330
        %v1332 = vand.u32 %v1242, 4294901760
        %1333 = vmatmul.f32.gmra.mxu0 %v1332
        %v1334 = vpop.f32.mrf.mxu0
        %v1335 = vadd.f32 %v1288, %v1334
        %v1336 = vand.u32 %v1245, 4294901760
        %1337 = vmatmul.f32.gmra.mxu0 %v1336
        %v1338 = vpop.f32.mrf.mxu0
        %v1339 = vadd.f32 %v1296, %v1338
        %1340 = vdwg.mxu0
        %1341 = vmatpush.msra.mxu0 0.0
        %1342 = vmatpush.msra.mxu0 0.0
        %1343 = vmatpush.msra.mxu0 0.0
        %1344 = vmatpush.msra.mxu0 0.0
        %1345 = vmatpush.msra.mxu0 0.0
        %1346 = vmatpush.msra.mxu0 0.0
        %1347 = vmatpush.msra.mxu0 0.0
        %1348 = vmatpush.msra.mxu0 0.0
        %1349 = vmatpush.msra.mxu0 0.0
        %1350 = vmatpush.msra.mxu0 0.0
        %1351 = vmatpush.msra.mxu0 0.0
        %1352 = vmatpush.msra.mxu0 0.0
        %1353 = vmatpush.msra.mxu0 0.0
        %1354 = vmatpush.msra.mxu0 0.0
        %v1355 = vand.u32 %v1234, 4294901760
        %v1356 = vsub.f32 %v1234, %v1355
        %1357 = vmatpush.msra.mxu0 %v1356
        %v1358 = vand.u32 %v1233, 4294901760
        %v1359 = vsub.f32 %v1233, %v1358
        %1360 = vmatpush.msra.mxu0 %v1359
        %v1361 = vand.u32 %v1236, 4294901760
        %v1362 = vsub.f32 %v1236, %v1361
        %1363 = vmatmul.f32.gmra.mxu0 %v1362
        %v1364 = vpop.f32.mrf.mxu0
        %v1365 = vadd.f32 %v1327, %v1364
        %v1366 = vand.u32 %v1239, 4294901760
        %v1367 = vsub.f32 %v1239, %v1366
        %1368 = vmatmul.f32.gmra.mxu0 %v1367
        %v1369 = vpop.f32.mrf.mxu0
        %v1370 = vadd.f32 %v1331, %v1369
        %v1371 = vand.u32 %v1242, 4294901760
        %v1372 = vsub.f32 %v1242, %v1371
        %1373 = vmatmul.f32.gmra.mxu0 %v1372
        %v1374 = vpop.f32.mrf.mxu0
        %v1375 = vadd.f32 %v1335, %v1374
        %v1376 = vand.u32 %v1245, 4294901760
        %v1377 = vsub.f32 %v1245, %v1376
        %1378 = vmatmul.f32.gmra.mxu0 %v1377
        %v1379 = vpop.f32.mrf.mxu0
        %v1380 = vadd.f32 %v1339, %v1379
        %1381 = vdwg.mxu0
        %1382 = vmatpush.msra.mxu0 0.0
        %1383 = vmatpush.msra.mxu0 0.0
        %1384 = vmatpush.msra.mxu0 0.0
        %1385 = vmatpush.msra.mxu0 0.0
        %1386 = vmatpush.msra.mxu0 0.0
        %1387 = vmatpush.msra.mxu0 0.0
        %1388 = vmatpush.msra.mxu0 0.0
        %1389 = vmatpush.msra.mxu0 0.0
        %1390 = vmatpush.msra.mxu0 0.0
        %1391 = vmatpush.msra.mxu0 0.0
        %1392 = vmatpush.msra.mxu0 0.0
        %1393 = vmatpush.msra.mxu0 0.0
        %1394 = vmatpush.msra.mxu0 0.0
        %1395 = vmatpush.msra.mxu0 0.0
        %v1396 = vand.u32 %v1234, 4294901760
        %1397 = vmatpush.msra.mxu0 %v1396
        %v1398 = vand.u32 %v1233, 4294901760
        %1399 = vmatpush.msra.mxu0 %v1398
        %v1400 = vand.u32 %v1236, 4294901760
        %v1401 = vsub.f32 %v1236, %v1400
        %v1402 = vand.u32 %v1401, 4294901760
        %1403 = vmatmul.f32.gmra.mxu0 %v1402
        %v1404 = vpop.f32.mrf.mxu0
        %v1405 = vadd.f32 %v1365, %v1404
        %v1406 = vand.u32 %v1239, 4294901760
        %v1407 = vsub.f32 %v1239, %v1406
        %v1408 = vand.u32 %v1407, 4294901760
        %1409 = vmatmul.f32.gmra.mxu0 %v1408
        %v1410 = vpop.f32.mrf.mxu0
        %v1411 = vadd.f32 %v1370, %v1410
        %v1412 = vand.u32 %v1242, 4294901760
        %v1413 = vsub.f32 %v1242, %v1412
        %v1414 = vand.u32 %v1413, 4294901760
        %1415 = vmatmul.f32.gmra.mxu0 %v1414
        %v1416 = vpop.f32.mrf.mxu0
        %v1417 = vadd.f32 %v1375, %v1416
        %v1418 = vand.u32 %v1245, 4294901760
        %v1419 = vsub.f32 %v1245, %v1418
        %v1420 = vand.u32 %v1419, 4294901760
        %1421 = vmatmul.f32.gmra.mxu0 %v1420
        %v1422 = vpop.f32.mrf.mxu0
        %v1423 = vadd.f32 %v1380, %v1422
        %1424 = vdwg.mxu0
        %1425 = vmatpush.msra.mxu0 0.0
        %1426 = vmatpush.msra.mxu0 0.0
        %1427 = vmatpush.msra.mxu0 0.0
        %1428 = vmatpush.msra.mxu0 0.0
        %1429 = vmatpush.msra.mxu0 0.0
        %1430 = vmatpush.msra.mxu0 0.0
        %1431 = vmatpush.msra.mxu0 0.0
        %1432 = vmatpush.msra.mxu0 0.0
        %1433 = vmatpush.msra.mxu0 0.0
        %1434 = vmatpush.msra.mxu0 0.0
        %1435 = vmatpush.msra.mxu0 0.0
        %1436 = vmatpush.msra.mxu0 0.0
        %1437 = vmatpush.msra.mxu0 0.0
        %1438 = vmatpush.msra.mxu0 0.0
        %v1439 = vand.u32 %v1234, 4294901760
        %v1440 = vsub.f32 %v1234, %v1439
        %v1441 = vand.u32 %v1440, 4294901760
        %1442 = vmatpush.msra.mxu0 %v1441
        %v1443 = vand.u32 %v1233, 4294901760
        %v1444 = vsub.f32 %v1233, %v1443
        %v1445 = vand.u32 %v1444, 4294901760
        %1446 = vmatpush.msra.mxu0 %v1445
        %v1447 = vand.u32 %v1236, 4294901760
        %1448 = vmatmul.f32.gmra.mxu0 %v1447
        %v1449 = vpop.f32.mrf.mxu0
        %v1450 = vadd.f32 %v1405, %v1449
        %v1451 = vand.u32 %v1239, 4294901760
        %1452 = vmatmul.f32.gmra.mxu0 %v1451
        %v1453 = vpop.f32.mrf.mxu0
        %v1454 = vadd.f32 %v1411, %v1453
        %v1455 = vand.u32 %v1242, 4294901760
        %1456 = vmatmul.f32.gmra.mxu0 %v1455
        %v1457 = vpop.f32.mrf.mxu0
        %v1458 = vadd.f32 %v1417, %v1457
        %v1459 = vand.u32 %v1245, 4294901760
        %1460 = vmatmul.f32.gmra.mxu0 %v1459
        %v1461 = vpop.f32.mrf.mxu0
        %v1462 = vadd.f32 %v1423, %v1461
        %1463 = vdwg.mxu0
        %1464 = vmatpush.msra.mxu0 0.0
        %1465 = vmatpush.msra.mxu0 0.0
        %1466 = vmatpush.msra.mxu0 0.0
        %1467 = vmatpush.msra.mxu0 0.0
        %1468 = vmatpush.msra.mxu0 0.0
        %1469 = vmatpush.msra.mxu0 0.0
        %1470 = vmatpush.msra.mxu0 0.0
        %1471 = vmatpush.msra.mxu0 0.0
        %1472 = vmatpush.msra.mxu0 0.0
        %1473 = vmatpush.msra.mxu0 0.0
        %1474 = vmatpush.msra.mxu0 0.0
        %1475 = vmatpush.msra.mxu0 0.0
        %1476 = vmatpush.msra.mxu0 0.0
        %1477 = vmatpush.msra.mxu0 0.0
        %v1478 = vand.u32 %v1234, 4294901760
        %1479 = vmatpush.msra.mxu0 %v1478
        %v1480 = vand.u32 %v1233, 4294901760
        %1481 = vmatpush.msra.mxu0 %v1480
        %v1482 = vand.u32 %v1236, 4294901760
        %1483 = vmatmul.f32.gmra.mxu0 %v1482
        %v1484 = vpop.f32.mrf.mxu0
        %v1485 = vadd.f32 %v1450, %v1484
        %v1486 = vand.u32 %v1239, 4294901760
        %1487 = vmatmul.f32.gmra.mxu0 %v1486
        %v1488 = vpop.f32.mrf.mxu0
        %v1489 = vadd.f32 %v1454, %v1488
        %v1490 = vand.u32 %v1242, 4294901760
        %1491 = vmatmul.f32.gmra.mxu0 %v1490
        %v1492 = vpop.f32.mrf.mxu0
        %v1493 = vadd.f32 %v1458, %v1492
        %v1494 = vand.u32 %v1245, 4294901760
        %1495 = vmatmul.f32.gmra.mxu0 %v1494
        %v1496 = vpop.f32.mrf.mxu0
        %v1497 = vadd.f32 %v1462, %v1496
        %1498 = vdwg.mxu0
        %v1499 = vadd.f32 %v1214, %v1485
        %v1500 = vadd.f32 %v1218, %v1489
        %v1501 = vadd.f32 %v1222, %v1493
        %v1502 = vadd.f32 %v1226, %v1497
        %v1503 = vld [vmem:[#allocation4] sm:$0x1]
        %vm1504 = vcmp.ge.f32.partialorder %v1499, 0.0
        %vm1505 = vcmp.ge.f32.partialorder %v1500, 0.0
        %vm1506 = vcmp.ge.f32.partialorder %v1501, 0.0
        %vm1507 = vcmp.ge.f32.partialorder %v1502, 0.0
        %v1509 = vperm.slane %v1503, 0
        %1510 = vset.pattern.permute.xlu0 0
        %1511 = vperm.xlu0 %1510, %v1509
        %v1512 = vpop.permute.xlu0 %1511
        %v1514 = vmul.f32 %v1499, %v1512
        %v1515 = vmul.f32 %v1500, %v1512
        %v1516 = vmul.f32 %v1501, %v1512
        %v1517 = vmul.f32 %v1502, %v1512
        %v1518 = vsel %vm1504, %v1499, %v1514
        %v1519 = vsel %vm1505, %v1500, %v1515
        %v1520 = vsel %vm1506, %v1501, %v1516
        %v1521 = vsel %vm1507, %v1502, %v1517
        %1522 = vst.msk [vmem:[#allocation2 + $0x1] sm:$0xff] %vm565, %v1518
        %1523 = vst.msk [vmem:[#allocation2 + $0x9] sm:$0xff] %vm565, %v1519
        %1524 = vst.msk [vmem:[#allocation2 + $0x11] sm:$0xff] %vm565, %v1520
        %1525 = vst.msk [vmem:[#allocation2 + $0x19] sm:$0xff] %vm565, %v1521
        %v1526 = vld [vmem:[#allocation2] sm:$0xff]
        %v1527 = vld [vmem:[#allocation2 + $0x8] sm:$0xff]
        %v1528 = vld [vmem:[#allocation2 + $0x10] sm:$0xff]
        %v1529 = vld [vmem:[#allocation2 + $0x18] sm:$0xff]
        %v1530 = vld [vmem:[%s5] sm:$0xff]
        %v1531 = vld [vmem:[%s5 + $0x8] sm:$0xff]
        %v1532 = vld [vmem:[#allocation2 + $0x1] sm:$0xff]
        %v1533 = vld [vmem:[#allocation2 + $0x9] sm:$0xff]
        %v1534 = vld [vmem:[#allocation2 + $0x11] sm:$0xff]
        %v1535 = vld [vmem:[#allocation2 + $0x19] sm:$0xff]
        %s1536 = scalar_lea.vmem %s5, 16
        %v1537 = vld [vmem:[%s1536] sm:$0xff]
        %v1538 = vld [vmem:[%s1536 + $0x8] sm:$0xff]
        %v1540 = vsel %vm565, %v1532, 0
        %v1543 = vsel %vm565, %v1533, 0
        %v1546 = vsel %vm565, %v1534, 0
        %v1549 = vsel %vm565, %v1535, 0
        %1551 = vmatpush.msra.mxu0 0.0
        %1552 = vmatpush.msra.mxu0 0.0
        %1553 = vmatpush.msra.mxu0 0.0
        %1554 = vmatpush.msra.mxu0 0.0
        %1555 = vmatpush.msra.mxu0 0.0
        %1556 = vmatpush.msra.mxu0 0.0
        %1557 = vmatpush.msra.mxu0 0.0
        %1558 = vmatpush.msra.mxu0 0.0
        %1559 = vmatpush.msra.mxu0 0.0
        %1560 = vmatpush.msra.mxu0 0.0
        %1561 = vmatpush.msra.mxu0 0.0
        %1562 = vmatpush.msra.mxu0 0.0
        %1563 = vmatpush.msra.mxu0 0.0
        %1564 = vmatpush.msra.mxu0 0.0
        %v1565 = vand.u32 %v1538, 4294901760
        %1566 = vmatpush.msra.mxu0 %v1565
        %v1567 = vand.u32 %v1537, 4294901760
        %1568 = vmatpush.msra.mxu0 %v1567
        %v1569 = vand.u32 %v1540, 4294901760
        %v1570 = vsub.f32 %v1540, %v1569
        %v1571 = vand.u32 %v1570, 4294901760
        %v1572 = vsub.f32 %v1570, %v1571
        %v1573 = vand.u32 %v1572, 4294901760
        %1574 = vmatmul.f32.gmra.mxu0 %v1573
        %v1575 = vpop.f32.mrf.mxu0
        %v1576 = vadd.f32 0.0, %v1575
        %v1577 = vand.u32 %v1543, 4294901760
        %v1578 = vsub.f32 %v1543, %v1577
        %v1579 = vand.u32 %v1578, 4294901760
        %v1580 = vsub.f32 %v1578, %v1579
        %v1581 = vand.u32 %v1580, 4294901760
        %1582 = vmatmul.f32.gmra.mxu0 %v1581
        %v1583 = vpop.f32.mrf.mxu0
        %v1584 = vadd.f32 0.0, %v1583
        %v1585 = vand.u32 %v1546, 4294901760
        %v1586 = vsub.f32 %v1546, %v1585
        %v1587 = vand.u32 %v1586, 4294901760
        %v1588 = vsub.f32 %v1586, %v1587
        %v1589 = vand.u32 %v1588, 4294901760
        %1590 = vmatmul.f32.gmra.mxu0 %v1589
        %v1591 = vpop.f32.mrf.mxu0
        %v1592 = vadd.f32 0.0, %v1591
        %v1593 = vand.u32 %v1549, 4294901760
        %v1594 = vsub.f32 %v1549, %v1593
        %v1595 = vand.u32 %v1594, 4294901760
        %v1596 = vsub.f32 %v1594, %v1595
        %v1597 = vand.u32 %v1596, 4294901760
        %1598 = vmatmul.f32.gmra.mxu0 %v1597
        %v1599 = vpop.f32.mrf.mxu0
        %v1600 = vadd.f32 0.0, %v1599
        %1601 = vdwg.mxu0
        %1602 = vmatpush.msra.mxu0 0.0
        %1603 = vmatpush.msra.mxu0 0.0
        %1604 = vmatpush.msra.mxu0 0.0
        %1605 = vmatpush.msra.mxu0 0.0
        %1606 = vmatpush.msra.mxu0 0.0
        %1607 = vmatpush.msra.mxu0 0.0
        %1608 = vmatpush.msra.mxu0 0.0
        %1609 = vmatpush.msra.mxu0 0.0
        %1610 = vmatpush.msra.mxu0 0.0
        %1611 = vmatpush.msra.mxu0 0.0
        %1612 = vmatpush.msra.mxu0 0.0
        %1613 = vmatpush.msra.mxu0 0.0
        %1614 = vmatpush.msra.mxu0 0.0
        %1615 = vmatpush.msra.mxu0 0.0
        %v1616 = vand.u32 %v1538, 4294901760
        %v1617 = vsub.f32 %v1538, %v1616
        %v1618 = vand.u32 %v1617, 4294901760
        %v1619 = vsub.f32 %v1617, %v1618
        %v1620 = vand.u32 %v1619, 4294901760
        %1621 = vmatpush.msra.mxu0 %v1620
        %v1622 = vand.u32 %v1537, 4294901760
        %v1623 = vsub.f32 %v1537, %v1622
        %v1624 = vand.u32 %v1623, 4294901760
        %v1625 = vsub.f32 %v1623, %v1624
        %v1626 = vand.u32 %v1625, 4294901760
        %1627 = vmatpush.msra.mxu0 %v1626
        %v1628 = vand.u32 %v1540, 4294901760
        %1629 = vmatmul.f32.gmra.mxu0 %v1628
        %v1630 = vpop.f32.mrf.mxu0
        %v1631 = vadd.f32 %v1576, %v1630
        %v1632 = vand.u32 %v1543, 4294901760
        %1633 = vmatmul.f32.gmra.mxu0 %v1632
        %v1634 = vpop.f32.mrf.mxu0
        %v1635 = vadd.f32 %v1584, %v1634
        %v1636 = vand.u32 %v1546, 4294901760
        %1637 = vmatmul.f32.gmra.mxu0 %v1636
        %v1638 = vpop.f32.mrf.mxu0
        %v1639 = vadd.f32 %v1592, %v1638
        %v1640 = vand.u32 %v1549, 4294901760
        %1641 = vmatmul.f32.gmra.mxu0 %v1640
        %v1642 = vpop.f32.mrf.mxu0
        %v1643 = vadd.f32 %v1600, %v1642
        %1644 = vdwg.mxu0
        %1645 = vmatpush.msra.mxu0 0.0
        %1646 = vmatpush.msra.mxu0 0.0
        %1647 = vmatpush.msra.mxu0 0.0
        %1648 = vmatpush.msra.mxu0 0.0
        %1649 = vmatpush.msra.mxu0 0.0
        %1650 = vmatpush.msra.mxu0 0.0
        %1651 = vmatpush.msra.mxu0 0.0
        %1652 = vmatpush.msra.mxu0 0.0
        %1653 = vmatpush.msra.mxu0 0.0
        %1654 = vmatpush.msra.mxu0 0.0
        %1655 = vmatpush.msra.mxu0 0.0
        %1656 = vmatpush.msra.mxu0 0.0
        %1657 = vmatpush.msra.mxu0 0.0
        %1658 = vmatpush.msra.mxu0 0.0
        %v1659 = vand.u32 %v1538, 4294901760
        %v1660 = vsub.f32 %v1538, %v1659
        %1661 = vmatpush.msra.mxu0 %v1660
        %v1662 = vand.u32 %v1537, 4294901760
        %v1663 = vsub.f32 %v1537, %v1662
        %1664 = vmatpush.msra.mxu0 %v1663
        %v1665 = vand.u32 %v1540, 4294901760
        %v1666 = vsub.f32 %v1540, %v1665
        %1667 = vmatmul.f32.gmra.mxu0 %v1666
        %v1668 = vpop.f32.mrf.mxu0
        %v1669 = vadd.f32 %v1631, %v1668
        %v1670 = vand.u32 %v1543, 4294901760
        %v1671 = vsub.f32 %v1543, %v1670
        %1672 = vmatmul.f32.gmra.mxu0 %v1671
        %v1673 = vpop.f32.mrf.mxu0
        %v1674 = vadd.f32 %v1635, %v1673
        %v1675 = vand.u32 %v1546, 4294901760
        %v1676 = vsub.f32 %v1546, %v1675
        %1677 = vmatmul.f32.gmra.mxu0 %v1676
        %v1678 = vpop.f32.mrf.mxu0
        %v1679 = vadd.f32 %v1639, %v1678
        %v1680 = vand.u32 %v1549, 4294901760
        %v1681 = vsub.f32 %v1549, %v1680
        %1682 = vmatmul.f32.gmra.mxu0 %v1681
        %v1683 = vpop.f32.mrf.mxu0
        %v1684 = vadd.f32 %v1643, %v1683
        %1685 = vdwg.mxu0
        %1686 = vmatpush.msra.mxu0 0.0
        %1687 = vmatpush.msra.mxu0 0.0
        %1688 = vmatpush.msra.mxu0 0.0
        %1689 = vmatpush.msra.mxu0 0.0
        %1690 = vmatpush.msra.mxu0 0.0
        %1691 = vmatpush.msra.mxu0 0.0
        %1692 = vmatpush.msra.mxu0 0.0
        %1693 = vmatpush.msra.mxu0 0.0
        %1694 = vmatpush.msra.mxu0 0.0
        %1695 = vmatpush.msra.mxu0 0.0
        %1696 = vmatpush.msra.mxu0 0.0
        %1697 = vmatpush.msra.mxu0 0.0
        %1698 = vmatpush.msra.mxu0 0.0
        %1699 = vmatpush.msra.mxu0 0.0
        %v1700 = vand.u32 %v1538, 4294901760
        %1701 = vmatpush.msra.mxu0 %v1700
        %v1702 = vand.u32 %v1537, 4294901760
        %1703 = vmatpush.msra.mxu0 %v1702
        %v1704 = vand.u32 %v1540, 4294901760
        %v1705 = vsub.f32 %v1540, %v1704
        %v1706 = vand.u32 %v1705, 4294901760
        %1707 = vmatmul.f32.gmra.mxu0 %v1706
        %v1708 = vpop.f32.mrf.mxu0
        %v1709 = vadd.f32 %v1669, %v1708
        %v1710 = vand.u32 %v1543, 4294901760
        %v1711 = vsub.f32 %v1543, %v1710
        %v1712 = vand.u32 %v1711, 4294901760
        %1713 = vmatmul.f32.gmra.mxu0 %v1712
        %v1714 = vpop.f32.mrf.mxu0
        %v1715 = vadd.f32 %v1674, %v1714
        %v1716 = vand.u32 %v1546, 4294901760
        %v1717 = vsub.f32 %v1546, %v1716
        %v1718 = vand.u32 %v1717, 4294901760
        %1719 = vmatmul.f32.gmra.mxu0 %v1718
        %v1720 = vpop.f32.mrf.mxu0
        %v1721 = vadd.f32 %v1679, %v1720
        %v1722 = vand.u32 %v1549, 4294901760
        %v1723 = vsub.f32 %v1549, %v1722
        %v1724 = vand.u32 %v1723, 4294901760
        %1725 = vmatmul.f32.gmra.mxu0 %v1724
        %v1726 = vpop.f32.mrf.mxu0
        %v1727 = vadd.f32 %v1684, %v1726
        %1728 = vdwg.mxu0
        %1729 = vmatpush.msra.mxu0 0.0
        %1730 = vmatpush.msra.mxu0 0.0
        %1731 = vmatpush.msra.mxu0 0.0
        %1732 = vmatpush.msra.mxu0 0.0
        %1733 = vmatpush.msra.mxu0 0.0
        %1734 = vmatpush.msra.mxu0 0.0
        %1735 = vmatpush.msra.mxu0 0.0
        %1736 = vmatpush.msra.mxu0 0.0
        %1737 = vmatpush.msra.mxu0 0.0
        %1738 = vmatpush.msra.mxu0 0.0
        %1739 = vmatpush.msra.mxu0 0.0
        %1740 = vmatpush.msra.mxu0 0.0
        %1741 = vmatpush.msra.mxu0 0.0
        %1742 = vmatpush.msra.mxu0 0.0
        %v1743 = vand.u32 %v1538, 4294901760
        %v1744 = vsub.f32 %v1538, %v1743
        %v1745 = vand.u32 %v1744, 4294901760
        %1746 = vmatpush.msra.mxu0 %v1745
        %v1747 = vand.u32 %v1537, 4294901760
        %v1748 = vsub.f32 %v1537, %v1747
        %v1749 = vand.u32 %v1748, 4294901760
        %1750 = vmatpush.msra.mxu0 %v1749
        %v1751 = vand.u32 %v1540, 4294901760
        %1752 = vmatmul.f32.gmra.mxu0 %v1751
        %v1753 = vpop.f32.mrf.mxu0
        %v1754 = vadd.f32 %v1709, %v1753
        %v1755 = vand.u32 %v1543, 4294901760
        %1756 = vmatmul.f32.gmra.mxu0 %v1755
        %v1757 = vpop.f32.mrf.mxu0
        %v1758 = vadd.f32 %v1715, %v1757
        %v1759 = vand.u32 %v1546, 4294901760
        %1760 = vmatmul.f32.gmra.mxu0 %v1759
        %v1761 = vpop.f32.mrf.mxu0
        %v1762 = vadd.f32 %v1721, %v1761
        %v1763 = vand.u32 %v1549, 4294901760
        %1764 = vmatmul.f32.gmra.mxu0 %v1763
        %v1765 = vpop.f32.mrf.mxu0
        %v1766 = vadd.f32 %v1727, %v1765
        %1767 = vdwg.mxu0
        %1768 = vmatpush.msra.mxu0 0.0
        %1769 = vmatpush.msra.mxu0 0.0
        %1770 = vmatpush.msra.mxu0 0.0
        %1771 = vmatpush.msra.mxu0 0.0
        %1772 = vmatpush.msra.mxu0 0.0
        %1773 = vmatpush.msra.mxu0 0.0
        %1774 = vmatpush.msra.mxu0 0.0
        %1775 = vmatpush.msra.mxu0 0.0
        %1776 = vmatpush.msra.mxu0 0.0
        %1777 = vmatpush.msra.mxu0 0.0
        %1778 = vmatpush.msra.mxu0 0.0
        %1779 = vmatpush.msra.mxu0 0.0
        %1780 = vmatpush.msra.mxu0 0.0
        %1781 = vmatpush.msra.mxu0 0.0
        %v1782 = vand.u32 %v1538, 4294901760
        %1783 = vmatpush.msra.mxu0 %v1782
        %v1784 = vand.u32 %v1537, 4294901760
        %1785 = vmatpush.msra.mxu0 %v1784
        %v1786 = vand.u32 %v1540, 4294901760
        %1787 = vmatmul.f32.gmra.mxu0 %v1786
        %v1788 = vpop.f32.mrf.mxu0
        %v1789 = vadd.f32 %v1754, %v1788
        %v1790 = vand.u32 %v1543, 4294901760
        %1791 = vmatmul.f32.gmra.mxu0 %v1790
        %v1792 = vpop.f32.mrf.mxu0
        %v1793 = vadd.f32 %v1758, %v1792
        %v1794 = vand.u32 %v1546, 4294901760
        %1795 = vmatmul.f32.gmra.mxu0 %v1794
        %v1796 = vpop.f32.mrf.mxu0
        %v1797 = vadd.f32 %v1762, %v1796
        %v1798 = vand.u32 %v1549, 4294901760
        %1799 = vmatmul.f32.gmra.mxu0 %v1798
        %v1800 = vpop.f32.mrf.mxu0
        %v1801 = vadd.f32 %v1766, %v1800
        %1802 = vdwg.mxu0
        %v1804 = vsel %vm565, %v1526, 0
        %v1807 = vsel %vm565, %v1527, 0
        %v1810 = vsel %vm565, %v1528, 0
        %v1813 = vsel %vm565, %v1529, 0
        %1815 = vmatpush.msra.mxu0 0.0
        %1816 = vmatpush.msra.mxu0 0.0
        %1817 = vmatpush.msra.mxu0 0.0
        %1818 = vmatpush.msra.mxu0 0.0
        %1819 = vmatpush.msra.mxu0 0.0
        %1820 = vmatpush.msra.mxu0 0.0
        %1821 = vmatpush.msra.mxu0 0.0
        %1822 = vmatpush.msra.mxu0 0.0
        %1823 = vmatpush.msra.mxu0 0.0
        %1824 = vmatpush.msra.mxu0 0.0
        %1825 = vmatpush.msra.mxu0 0.0
        %1826 = vmatpush.msra.mxu0 0.0
        %1827 = vmatpush.msra.mxu0 0.0
        %1828 = vmatpush.msra.mxu0 0.0
        %v1829 = vand.u32 %v1531, 4294901760
        %1830 = vmatpush.msra.mxu0 %v1829
        %v1831 = vand.u32 %v1530, 4294901760
        %1832 = vmatpush.msra.mxu0 %v1831
        %v1833 = vand.u32 %v1804, 4294901760
        %v1834 = vsub.f32 %v1804, %v1833
        %v1835 = vand.u32 %v1834, 4294901760
        %v1836 = vsub.f32 %v1834, %v1835
        %v1837 = vand.u32 %v1836, 4294901760
        %1838 = vmatmul.f32.gmra.mxu0 %v1837
        %v1839 = vpop.f32.mrf.mxu0
        %v1840 = vadd.f32 %v1789, %v1839
        %v1841 = vand.u32 %v1807, 4294901760
        %v1842 = vsub.f32 %v1807, %v1841
        %v1843 = vand.u32 %v1842, 4294901760
        %v1844 = vsub.f32 %v1842, %v1843
        %v1845 = vand.u32 %v1844, 4294901760
        %1846 = vmatmul.f32.gmra.mxu0 %v1845
        %v1847 = vpop.f32.mrf.mxu0
        %v1848 = vadd.f32 %v1793, %v1847
        %v1849 = vand.u32 %v1810, 4294901760
        %v1850 = vsub.f32 %v1810, %v1849
        %v1851 = vand.u32 %v1850, 4294901760
        %v1852 = vsub.f32 %v1850, %v1851
        %v1853 = vand.u32 %v1852, 4294901760
        %1854 = vmatmul.f32.gmra.mxu0 %v1853
        %v1855 = vpop.f32.mrf.mxu0
        %v1856 = vadd.f32 %v1797, %v1855
        %v1857 = vand.u32 %v1813, 4294901760
        %v1858 = vsub.f32 %v1813, %v1857
        %v1859 = vand.u32 %v1858, 4294901760
        %v1860 = vsub.f32 %v1858, %v1859
        %v1861 = vand.u32 %v1860, 4294901760
        %1862 = vmatmul.f32.gmra.mxu0 %v1861
        %v1863 = vpop.f32.mrf.mxu0
        %v1864 = vadd.f32 %v1801, %v1863
        %1865 = vdwg.mxu0
        %1866 = vmatpush.msra.mxu0 0.0
        %1867 = vmatpush.msra.mxu0 0.0
        %1868 = vmatpush.msra.mxu0 0.0
        %1869 = vmatpush.msra.mxu0 0.0
        %1870 = vmatpush.msra.mxu0 0.0
        %1871 = vmatpush.msra.mxu0 0.0
        %1872 = vmatpush.msra.mxu0 0.0
        %1873 = vmatpush.msra.mxu0 0.0
        %1874 = vmatpush.msra.mxu0 0.0
        %1875 = vmatpush.msra.mxu0 0.0
        %1876 = vmatpush.msra.mxu0 0.0
        %1877 = vmatpush.msra.mxu0 0.0
        %1878 = vmatpush.msra.mxu0 0.0
        %1879 = vmatpush.msra.mxu0 0.0
        %v1880 = vand.u32 %v1531, 4294901760
        %v1881 = vsub.f32 %v1531, %v1880
        %v1882 = vand.u32 %v1881, 4294901760
        %v1883 = vsub.f32 %v1881, %v1882
        %v1884 = vand.u32 %v1883, 4294901760
        %1885 = vmatpush.msra.mxu0 %v1884
        %v1886 = vand.u32 %v1530, 4294901760
        %v1887 = vsub.f32 %v1530, %v1886
        %v1888 = vand.u32 %v1887, 4294901760
        %v1889 = vsub.f32 %v1887, %v1888
        %v1890 = vand.u32 %v1889, 4294901760
        %1891 = vmatpush.msra.mxu0 %v1890
        %v1892 = vand.u32 %v1804, 4294901760
        %1893 = vmatmul.f32.gmra.mxu0 %v1892
        %v1894 = vpop.f32.mrf.mxu0
        %v1895 = vadd.f32 %v1840, %v1894
        %v1896 = vand.u32 %v1807, 4294901760
        %1897 = vmatmul.f32.gmra.mxu0 %v1896
        %v1898 = vpop.f32.mrf.mxu0
        %v1899 = vadd.f32 %v1848, %v1898
        %v1900 = vand.u32 %v1810, 4294901760
        %1901 = vmatmul.f32.gmra.mxu0 %v1900
        %v1902 = vpop.f32.mrf.mxu0
        %v1903 = vadd.f32 %v1856, %v1902
        %v1904 = vand.u32 %v1813, 4294901760
        %1905 = vmatmul.f32.gmra.mxu0 %v1904
        %v1906 = vpop.f32.mrf.mxu0
        %v1907 = vadd.f32 %v1864, %v1906
        %1908 = vdwg.mxu0
        %1909 = vmatpush.msra.mxu0 0.0
        %1910 = vmatpush.msra.mxu0 0.0
        %1911 = vmatpush.msra.mxu0 0.0
        %1912 = vmatpush.msra.mxu0 0.0
        %1913 = vmatpush.msra.mxu0 0.0
        %1914 = vmatpush.msra.mxu0 0.0
        %1915 = vmatpush.msra.mxu0 0.0
        %1916 = vmatpush.msra.mxu0 0.0
        %1917 = vmatpush.msra.mxu0 0.0
        %1918 = vmatpush.msra.mxu0 0.0
        %1919 = vmatpush.msra.mxu0 0.0
        %1920 = vmatpush.msra.mxu0 0.0
        %1921 = vmatpush.msra.mxu0 0.0
        %1922 = vmatpush.msra.mxu0 0.0
        %v1923 = vand.u32 %v1531, 4294901760
        %v1924 = vsub.f32 %v1531, %v1923
        %1925 = vmatpush.msra.mxu0 %v1924
        %v1926 = vand.u32 %v1530, 4294901760
        %v1927 = vsub.f32 %v1530, %v1926
        %1928 = vmatpush.msra.mxu0 %v1927
        %v1929 = vand.u32 %v1804, 4294901760
        %v1930 = vsub.f32 %v1804, %v1929
        %1931 = vmatmul.f32.gmra.mxu0 %v1930
        %v1932 = vpop.f32.mrf.mxu0
        %v1933 = vadd.f32 %v1895, %v1932
        %v1934 = vand.u32 %v1807, 4294901760
        %v1935 = vsub.f32 %v1807, %v1934
        %1936 = vmatmul.f32.gmra.mxu0 %v1935
        %v1937 = vpop.f32.mrf.mxu0
        %v1938 = vadd.f32 %v1899, %v1937
        %v1939 = vand.u32 %v1810, 4294901760
        %v1940 = vsub.f32 %v1810, %v1939
        %1941 = vmatmul.f32.gmra.mxu0 %v1940
        %v1942 = vpop.f32.mrf.mxu0
        %v1943 = vadd.f32 %v1903, %v1942
        %v1944 = vand.u32 %v1813, 4294901760
        %v1945 = vsub.f32 %v1813, %v1944
        %1946 = vmatmul.f32.gmra.mxu0 %v1945
        %v1947 = vpop.f32.mrf.mxu0
        %v1948 = vadd.f32 %v1907, %v1947
        %1949 = vdwg.mxu0
        %1950 = vmatpush.msra.mxu0 0.0
        %1951 = vmatpush.msra.mxu0 0.0
        %1952 = vmatpush.msra.mxu0 0.0
        %1953 = vmatpush.msra.mxu0 0.0
        %1954 = vmatpush.msra.mxu0 0.0
        %1955 = vmatpush.msra.mxu0 0.0
        %1956 = vmatpush.msra.mxu0 0.0
        %1957 = vmatpush.msra.mxu0 0.0
        %1958 = vmatpush.msra.mxu0 0.0
        %1959 = vmatpush.msra.mxu0 0.0
        %1960 = vmatpush.msra.mxu0 0.0
        %1961 = vmatpush.msra.mxu0 0.0
        %1962 = vmatpush.msra.mxu0 0.0
        %1963 = vmatpush.msra.mxu0 0.0
        %v1964 = vand.u32 %v1531, 4294901760
        %1965 = vmatpush.msra.mxu0 %v1964
        %v1966 = vand.u32 %v1530, 4294901760
        %1967 = vmatpush.msra.mxu0 %v1966
        %v1968 = vand.u32 %v1804, 4294901760
        %v1969 = vsub.f32 %v1804, %v1968
        %v1970 = vand.u32 %v1969, 4294901760
        %1971 = vmatmul.f32.gmra.mxu0 %v1970
        %v1972 = vpop.f32.mrf.mxu0
        %v1973 = vadd.f32 %v1933, %v1972
        %v1974 = vand.u32 %v1807, 4294901760
        %v1975 = vsub.f32 %v1807, %v1974
        %v1976 = vand.u32 %v1975, 4294901760
        %1977 = vmatmul.f32.gmra.mxu0 %v1976
        %v1978 = vpop.f32.mrf.mxu0
        %v1979 = vadd.f32 %v1938, %v1978
        %v1980 = vand.u32 %v1810, 4294901760
        %v1981 = vsub.f32 %v1810, %v1980
        %v1982 = vand.u32 %v1981, 4294901760
        %1983 = vmatmul.f32.gmra.mxu0 %v1982
        %v1984 = vpop.f32.mrf.mxu0
        %v1985 = vadd.f32 %v1943, %v1984
        %v1986 = vand.u32 %v1813, 4294901760
        %v1987 = vsub.f32 %v1813, %v1986
        %v1988 = vand.u32 %v1987, 4294901760
        %1989 = vmatmul.f32.gmra.mxu0 %v1988
        %v1990 = vpop.f32.mrf.mxu0
        %v1991 = vadd.f32 %v1948, %v1990
        %1992 = vdwg.mxu0
        %1993 = vmatpush.msra.mxu0 0.0
        %1994 = vmatpush.msra.mxu0 0.0
        %1995 = vmatpush.msra.mxu0 0.0
        %1996 = vmatpush.msra.mxu0 0.0
        %1997 = vmatpush.msra.mxu0 0.0
        %1998 = vmatpush.msra.mxu0 0.0
        %1999 = vmatpush.msra.mxu0 0.0
        %2000 = vmatpush.msra.mxu0 0.0
        %2001 = vmatpush.msra.mxu0 0.0
        %2002 = vmatpush.msra.mxu0 0.0
        %2003 = vmatpush.msra.mxu0 0.0
        %2004 = vmatpush.msra.mxu0 0.0
        %2005 = vmatpush.msra.mxu0 0.0
        %2006 = vmatpush.msra.mxu0 0.0
        %v2007 = vand.u32 %v1531, 4294901760
        %v2008 = vsub.f32 %v1531, %v2007
        %v2009 = vand.u32 %v2008, 4294901760
        %2010 = vmatpush.msra.mxu0 %v2009
        %v2011 = vand.u32 %v1530, 4294901760
        %v2012 = vsub.f32 %v1530, %v2011
        %v2013 = vand.u32 %v2012, 4294901760
        %2014 = vmatpush.msra.mxu0 %v2013
        %v2015 = vand.u32 %v1804, 4294901760
        %2016 = vmatmul.f32.gmra.mxu0 %v2015
        %v2017 = vpop.f32.mrf.mxu0
        %v2018 = vadd.f32 %v1973, %v2017
        %v2019 = vand.u32 %v1807, 4294901760
        %2020 = vmatmul.f32.gmra.mxu0 %v2019
        %v2021 = vpop.f32.mrf.mxu0
        %v2022 = vadd.f32 %v1979, %v2021
        %v2023 = vand.u32 %v1810, 4294901760
        %2024 = vmatmul.f32.gmra.mxu0 %v2023
        %v2025 = vpop.f32.mrf.mxu0
        %v2026 = vadd.f32 %v1985, %v2025
        %v2027 = vand.u32 %v1813, 4294901760
        %2028 = vmatmul.f32.gmra.mxu0 %v2027
        %v2029 = vpop.f32.mrf.mxu0
        %v2030 = vadd.f32 %v1991, %v2029
        %2031 = vdwg.mxu0
        %2032 = vmatpush.msra.mxu0 0.0
        %2033 = vmatpush.msra.mxu0 0.0
        %2034 = vmatpush.msra.mxu0 0.0
        %2035 = vmatpush.msra.mxu0 0.0
        %2036 = vmatpush.msra.mxu0 0.0
        %2037 = vmatpush.msra.mxu0 0.0
        %2038 = vmatpush.msra.mxu0 0.0
        %2039 = vmatpush.msra.mxu0 0.0
        %2040 = vmatpush.msra.mxu0 0.0
        %2041 = vmatpush.msra.mxu0 0.0
        %2042 = vmatpush.msra.mxu0 0.0
        %2043 = vmatpush.msra.mxu0 0.0
        %2044 = vmatpush.msra.mxu0 0.0
        %2045 = vmatpush.msra.mxu0 0.0
        %v2046 = vand.u32 %v1531, 4294901760
        %2047 = vmatpush.msra.mxu0 %v2046
        %v2048 = vand.u32 %v1530, 4294901760
        %2049 = vmatpush.msra.mxu0 %v2048
        %v2050 = vand.u32 %v1804, 4294901760
        %2051 = vmatmul.f32.gmra.mxu0 %v2050
        %v2052 = vpop.f32.mrf.mxu0
        %v2053 = vadd.f32 %v2018, %v2052
        %v2054 = vand.u32 %v1807, 4294901760
        %2055 = vmatmul.f32.gmra.mxu0 %v2054
        %v2056 = vpop.f32.mrf.mxu0
        %v2057 = vadd.f32 %v2022, %v2056
        %v2058 = vand.u32 %v1810, 4294901760
        %2059 = vmatmul.f32.gmra.mxu0 %v2058
        %v2060 = vpop.f32.mrf.mxu0
        %v2061 = vadd.f32 %v2026, %v2060
        %v2062 = vand.u32 %v1813, 4294901760
        %2063 = vmatmul.f32.gmra.mxu0 %v2062
        %v2064 = vpop.f32.mrf.mxu0
        %v2065 = vadd.f32 %v2030, %v2064
        %2066 = vdwg.mxu0
        %v2067 = vld [vmem:[#allocation2 + $0x2] sm:$0xff]
        %v2068 = vld [vmem:[#allocation2 + $0xa] sm:$0xff]
        %v2069 = vld [vmem:[#allocation2 + $0x12] sm:$0xff]
        %v2070 = vld [vmem:[#allocation2 + $0x1a] sm:$0xff]
        %s2071 = scalar_lea.vmem %s5, 32
        %v2072 = vld [vmem:[%s2071] sm:$0xff]
        %v2073 = vld [vmem:[%s2071 + $0x8] sm:$0xff]
        %v2075 = vsel %vm565, %v2067, 0
        %v2078 = vsel %vm565, %v2068, 0
        %v2081 = vsel %vm565, %v2069, 0
        %v2084 = vsel %vm565, %v2070, 0
        %2086 = vmatpush.msra.mxu0 0.0
        %2087 = vmatpush.msra.mxu0 0.0
        %2088 = vmatpush.msra.mxu0 0.0
        %2089 = vmatpush.msra.mxu0 0.0
        %2090 = vmatpush.msra.mxu0 0.0
        %2091 = vmatpush.msra.mxu0 0.0
        %2092 = vmatpush.msra.mxu0 0.0
        %2093 = vmatpush.msra.mxu0 0.0
        %2094 = vmatpush.msra.mxu0 0.0
        %2095 = vmatpush.msra.mxu0 0.0
        %2096 = vmatpush.msra.mxu0 0.0
        %2097 = vmatpush.msra.mxu0 0.0
        %2098 = vmatpush.msra.mxu0 0.0
        %2099 = vmatpush.msra.mxu0 0.0
        %v2100 = vand.u32 %v2073, 4294901760
        %2101 = vmatpush.msra.mxu0 %v2100
        %v2102 = vand.u32 %v2072, 4294901760
        %2103 = vmatpush.msra.mxu0 %v2102
        %v2104 = vand.u32 %v2075, 4294901760
        %v2105 = vsub.f32 %v2075, %v2104
        %v2106 = vand.u32 %v2105, 4294901760
        %v2107 = vsub.f32 %v2105, %v2106
        %v2108 = vand.u32 %v2107, 4294901760
        %2109 = vmatmul.f32.gmra.mxu0 %v2108
        %v2110 = vpop.f32.mrf.mxu0
        %v2111 = vadd.f32 0.0, %v2110
        %v2112 = vand.u32 %v2078, 4294901760
        %v2113 = vsub.f32 %v2078, %v2112
        %v2114 = vand.u32 %v2113, 4294901760
        %v2115 = vsub.f32 %v2113, %v2114
        %v2116 = vand.u32 %v2115, 4294901760
        %2117 = vmatmul.f32.gmra.mxu0 %v2116
        %v2118 = vpop.f32.mrf.mxu0
        %v2119 = vadd.f32 0.0, %v2118
        %v2120 = vand.u32 %v2081, 4294901760
        %v2121 = vsub.f32 %v2081, %v2120
        %v2122 = vand.u32 %v2121, 4294901760
        %v2123 = vsub.f32 %v2121, %v2122
        %v2124 = vand.u32 %v2123, 4294901760
        %2125 = vmatmul.f32.gmra.mxu0 %v2124
        %v2126 = vpop.f32.mrf.mxu0
        %v2127 = vadd.f32 0.0, %v2126
        %v2128 = vand.u32 %v2084, 4294901760
        %v2129 = vsub.f32 %v2084, %v2128
        %v2130 = vand.u32 %v2129, 4294901760
        %v2131 = vsub.f32 %v2129, %v2130
        %v2132 = vand.u32 %v2131, 4294901760
        %2133 = vmatmul.f32.gmra.mxu0 %v2132
        %v2134 = vpop.f32.mrf.mxu0
        %v2135 = vadd.f32 0.0, %v2134
        %2136 = vdwg.mxu0
        %2137 = vmatpush.msra.mxu0 0.0
        %2138 = vmatpush.msra.mxu0 0.0
        %2139 = vmatpush.msra.mxu0 0.0
        %2140 = vmatpush.msra.mxu0 0.0
        %2141 = vmatpush.msra.mxu0 0.0
        %2142 = vmatpush.msra.mxu0 0.0
        %2143 = vmatpush.msra.mxu0 0.0
        %2144 = vmatpush.msra.mxu0 0.0
        %2145 = vmatpush.msra.mxu0 0.0
        %2146 = vmatpush.msra.mxu0 0.0
        %2147 = vmatpush.msra.mxu0 0.0
        %2148 = vmatpush.msra.mxu0 0.0
        %2149 = vmatpush.msra.mxu0 0.0
        %2150 = vmatpush.msra.mxu0 0.0
        %v2151 = vand.u32 %v2073, 4294901760
        %v2152 = vsub.f32 %v2073, %v2151
        %v2153 = vand.u32 %v2152, 4294901760
        %v2154 = vsub.f32 %v2152, %v2153
        %v2155 = vand.u32 %v2154, 4294901760
        %2156 = vmatpush.msra.mxu0 %v2155
        %v2157 = vand.u32 %v2072, 4294901760
        %v2158 = vsub.f32 %v2072, %v2157
        %v2159 = vand.u32 %v2158, 4294901760
        %v2160 = vsub.f32 %v2158, %v2159
        %v2161 = vand.u32 %v2160, 4294901760
        %2162 = vmatpush.msra.mxu0 %v2161
        %v2163 = vand.u32 %v2075, 4294901760
        %2164 = vmatmul.f32.gmra.mxu0 %v2163
        %v2165 = vpop.f32.mrf.mxu0
        %v2166 = vadd.f32 %v2111, %v2165
        %v2167 = vand.u32 %v2078, 4294901760
        %2168 = vmatmul.f32.gmra.mxu0 %v2167
        %v2169 = vpop.f32.mrf.mxu0
        %v2170 = vadd.f32 %v2119, %v2169
        %v2171 = vand.u32 %v2081, 4294901760
        %2172 = vmatmul.f32.gmra.mxu0 %v2171
        %v2173 = vpop.f32.mrf.mxu0
        %v2174 = vadd.f32 %v2127, %v2173
        %v2175 = vand.u32 %v2084, 4294901760
        %2176 = vmatmul.f32.gmra.mxu0 %v2175
        %v2177 = vpop.f32.mrf.mxu0
        %v2178 = vadd.f32 %v2135, %v2177
        %2179 = vdwg.mxu0
        %2180 = vmatpush.msra.mxu0 0.0
        %2181 = vmatpush.msra.mxu0 0.0
        %2182 = vmatpush.msra.mxu0 0.0
        %2183 = vmatpush.msra.mxu0 0.0
        %2184 = vmatpush.msra.mxu0 0.0
        %2185 = vmatpush.msra.mxu0 0.0
        %2186 = vmatpush.msra.mxu0 0.0
        %2187 = vmatpush.msra.mxu0 0.0
        %2188 = vmatpush.msra.mxu0 0.0
        %2189 = vmatpush.msra.mxu0 0.0
        %2190 = vmatpush.msra.mxu0 0.0
        %2191 = vmatpush.msra.mxu0 0.0
        %2192 = vmatpush.msra.mxu0 0.0
        %2193 = vmatpush.msra.mxu0 0.0
        %v2194 = vand.u32 %v2073, 4294901760
        %v2195 = vsub.f32 %v2073, %v2194
        %2196 = vmatpush.msra.mxu0 %v2195
        %v2197 = vand.u32 %v2072, 4294901760
        %v2198 = vsub.f32 %v2072, %v2197
        %2199 = vmatpush.msra.mxu0 %v2198
        %v2200 = vand.u32 %v2075, 4294901760
        %v2201 = vsub.f32 %v2075, %v2200
        %2202 = vmatmul.f32.gmra.mxu0 %v2201
        %v2203 = vpop.f32.mrf.mxu0
        %v2204 = vadd.f32 %v2166, %v2203
        %v2205 = vand.u32 %v2078, 4294901760
        %v2206 = vsub.f32 %v2078, %v2205
        %2207 = vmatmul.f32.gmra.mxu0 %v2206
        %v2208 = vpop.f32.mrf.mxu0
        %v2209 = vadd.f32 %v2170, %v2208
        %v2210 = vand.u32 %v2081, 4294901760
        %v2211 = vsub.f32 %v2081, %v2210
        %2212 = vmatmul.f32.gmra.mxu0 %v2211
        %v2213 = vpop.f32.mrf.mxu0
        %v2214 = vadd.f32 %v2174, %v2213
        %v2215 = vand.u32 %v2084, 4294901760
        %v2216 = vsub.f32 %v2084, %v2215
        %2217 = vmatmul.f32.gmra.mxu0 %v2216
        %v2218 = vpop.f32.mrf.mxu0
        %v2219 = vadd.f32 %v2178, %v2218
        %2220 = vdwg.mxu0
        %2221 = vmatpush.msra.mxu0 0.0
        %2222 = vmatpush.msra.mxu0 0.0
        %2223 = vmatpush.msra.mxu0 0.0
        %2224 = vmatpush.msra.mxu0 0.0
        %2225 = vmatpush.msra.mxu0 0.0
        %2226 = vmatpush.msra.mxu0 0.0
        %2227 = vmatpush.msra.mxu0 0.0
        %2228 = vmatpush.msra.mxu0 0.0
        %2229 = vmatpush.msra.mxu0 0.0
        %2230 = vmatpush.msra.mxu0 0.0
        %2231 = vmatpush.msra.mxu0 0.0
        %2232 = vmatpush.msra.mxu0 0.0
        %2233 = vmatpush.msra.mxu0 0.0
        %2234 = vmatpush.msra.mxu0 0.0
        %v2235 = vand.u32 %v2073, 4294901760
        %2236 = vmatpush.msra.mxu0 %v2235
        %v2237 = vand.u32 %v2072, 4294901760
        %2238 = vmatpush.msra.mxu0 %v2237
        %v2239 = vand.u32 %v2075, 4294901760
        %v2240 = vsub.f32 %v2075, %v2239
        %v2241 = vand.u32 %v2240, 4294901760
        %2242 = vmatmul.f32.gmra.mxu0 %v2241
        %v2243 = vpop.f32.mrf.mxu0
        %v2244 = vadd.f32 %v2204, %v2243
        %v2245 = vand.u32 %v2078, 4294901760
        %v2246 = vsub.f32 %v2078, %v2245
        %v2247 = vand.u32 %v2246, 4294901760
        %2248 = vmatmul.f32.gmra.mxu0 %v2247
        %v2249 = vpop.f32.mrf.mxu0
        %v2250 = vadd.f32 %v2209, %v2249
        %v2251 = vand.u32 %v2081, 4294901760
        %v2252 = vsub.f32 %v2081, %v2251
        %v2253 = vand.u32 %v2252, 4294901760
        %2254 = vmatmul.f32.gmra.mxu0 %v2253
        %v2255 = vpop.f32.mrf.mxu0
        %v2256 = vadd.f32 %v2214, %v2255
        %v2257 = vand.u32 %v2084, 4294901760
        %v2258 = vsub.f32 %v2084, %v2257
        %v2259 = vand.u32 %v2258, 4294901760
        %2260 = vmatmul.f32.gmra.mxu0 %v2259
        %v2261 = vpop.f32.mrf.mxu0
        %v2262 = vadd.f32 %v2219, %v2261
        %2263 = vdwg.mxu0
        %2264 = vmatpush.msra.mxu0 0.0
        %2265 = vmatpush.msra.mxu0 0.0
        %2266 = vmatpush.msra.mxu0 0.0
        %2267 = vmatpush.msra.mxu0 0.0
        %2268 = vmatpush.msra.mxu0 0.0
        %2269 = vmatpush.msra.mxu0 0.0
        %2270 = vmatpush.msra.mxu0 0.0
        %2271 = vmatpush.msra.mxu0 0.0
        %2272 = vmatpush.msra.mxu0 0.0
        %2273 = vmatpush.msra.mxu0 0.0
        %2274 = vmatpush.msra.mxu0 0.0
        %2275 = vmatpush.msra.mxu0 0.0
        %2276 = vmatpush.msra.mxu0 0.0
        %2277 = vmatpush.msra.mxu0 0.0
        %v2278 = vand.u32 %v2073, 4294901760
        %v2279 = vsub.f32 %v2073, %v2278
        %v2280 = vand.u32 %v2279, 4294901760
        %2281 = vmatpush.msra.mxu0 %v2280
        %v2282 = vand.u32 %v2072, 4294901760
        %v2283 = vsub.f32 %v2072, %v2282
        %v2284 = vand.u32 %v2283, 4294901760
        %2285 = vmatpush.msra.mxu0 %v2284
        %v2286 = vand.u32 %v2075, 4294901760
        %2287 = vmatmul.f32.gmra.mxu0 %v2286
        %v2288 = vpop.f32.mrf.mxu0
        %v2289 = vadd.f32 %v2244, %v2288
        %v2290 = vand.u32 %v2078, 4294901760
        %2291 = vmatmul.f32.gmra.mxu0 %v2290
        %v2292 = vpop.f32.mrf.mxu0
        %v2293 = vadd.f32 %v2250, %v2292
        %v2294 = vand.u32 %v2081, 4294901760
        %2295 = vmatmul.f32.gmra.mxu0 %v2294
        %v2296 = vpop.f32.mrf.mxu0
        %v2297 = vadd.f32 %v2256, %v2296
        %v2298 = vand.u32 %v2084, 4294901760
        %2299 = vmatmul.f32.gmra.mxu0 %v2298
        %v2300 = vpop.f32.mrf.mxu0
        %v2301 = vadd.f32 %v2262, %v2300
        %2302 = vdwg.mxu0
        %2303 = vmatpush.msra.mxu0 0.0
        %2304 = vmatpush.msra.mxu0 0.0
        %2305 = vmatpush.msra.mxu0 0.0
        %2306 = vmatpush.msra.mxu0 0.0
        %2307 = vmatpush.msra.mxu0 0.0
        %2308 = vmatpush.msra.mxu0 0.0
        %2309 = vmatpush.msra.mxu0 0.0
        %2310 = vmatpush.msra.mxu0 0.0
        %2311 = vmatpush.msra.mxu0 0.0
        %2312 = vmatpush.msra.mxu0 0.0
        %2313 = vmatpush.msra.mxu0 0.0
        %2314 = vmatpush.msra.mxu0 0.0
        %2315 = vmatpush.msra.mxu0 0.0
        %2316 = vmatpush.msra.mxu0 0.0
        %v2317 = vand.u32 %v2073, 4294901760
        %2318 = vmatpush.msra.mxu0 %v2317
        %v2319 = vand.u32 %v2072, 4294901760
        %2320 = vmatpush.msra.mxu0 %v2319
        %v2321 = vand.u32 %v2075, 4294901760
        %2322 = vmatmul.f32.gmra.mxu0 %v2321
        %v2323 = vpop.f32.mrf.mxu0
        %v2324 = vadd.f32 %v2289, %v2323
        %v2325 = vand.u32 %v2078, 4294901760
        %2326 = vmatmul.f32.gmra.mxu0 %v2325
        %v2327 = vpop.f32.mrf.mxu0
        %v2328 = vadd.f32 %v2293, %v2327
        %v2329 = vand.u32 %v2081, 4294901760
        %2330 = vmatmul.f32.gmra.mxu0 %v2329
        %v2331 = vpop.f32.mrf.mxu0
        %v2332 = vadd.f32 %v2297, %v2331
        %v2333 = vand.u32 %v2084, 4294901760
        %2334 = vmatmul.f32.gmra.mxu0 %v2333
        %v2335 = vpop.f32.mrf.mxu0
        %v2336 = vadd.f32 %v2301, %v2335
        %2337 = vdwg.mxu0
        %v2338 = vadd.f32 %v2053, %v2324
        %v2339 = vadd.f32 %v2057, %v2328
        %v2340 = vadd.f32 %v2061, %v2332
        %v2341 = vadd.f32 %v2065, %v2336
        %v2342 = vsel %vm565, %v2338, 0.0
        %v2343 = vsel %vm565, %v2339, 0.0
        %v2344 = vadd.f32 %v2342, %v2343
        %v2345 = vsel %vm565, %v2340, 0.0
        %v2346 = vadd.f32 %v2344, %v2345
        %v2347 = vsel %vm565, %v2341, 0.0
        %v2348 = vadd.f32 %v2346, %v2347
        %v2349 = vrot.slane %v2348, 4
        %v2350 = vadd.f32 %v2348, %v2349
        %v2351 = vrot.slane %v2350, 2
        %v2352 = vadd.f32 %v2350, %v2351
        %v2353 = vrot.slane %v2352, 1
        %v2354 = vadd.f32 %v2352, %v2353
        %v2355 = vrcp.pop 32.0
        %v2356 = vmul.f32 32.0, %v2355
        %v2357 = vsub.f32 1.0, %v2356
        %v2358 = vmul.f32 %v2355, %v2357
        %v2359 = vadd.f32 %v2355, %v2358
        %vm2360 = vweird.f32 %v2355
        %v2361 = vsel %vm2360, %v2355, %v2359
        %v2362 = vmul.f32 %v2354, %v2361
        %v2363 = vld [vmem:[%s6] sm:$0xff]
        %v2364 = vld [vmem:[%s6 + $0x8] sm:$0xff]
        %v2366 = vsel %vm565, %v2362, 0
        %2368 = vmatpush.msra.mxu0 0.0
        %2369 = vmatpush.msra.mxu0 0.0
        %2370 = vmatpush.msra.mxu0 0.0
        %2371 = vmatpush.msra.mxu0 0.0
        %2372 = vmatpush.msra.mxu0 0.0
        %2373 = vmatpush.msra.mxu0 0.0
        %2374 = vmatpush.msra.mxu0 0.0
        %2375 = vmatpush.msra.mxu0 0.0
        %2376 = vmatpush.msra.mxu0 0.0
        %2377 = vmatpush.msra.mxu0 0.0
        %2378 = vmatpush.msra.mxu0 0.0
        %2379 = vmatpush.msra.mxu0 0.0
        %2380 = vmatpush.msra.mxu0 0.0
        %2381 = vmatpush.msra.mxu0 0.0
        %v2382 = vand.u32 %v2364, 4294901760
        %2383 = vmatpush.msra.mxu0 %v2382
        %v2384 = vand.u32 %v2363, 4294901760
        %2385 = vmatpush.msra.mxu0 %v2384
        %v2386 = vand.u32 %v2366, 4294901760
        %v2387 = vsub.f32 %v2366, %v2386
        %v2388 = vand.u32 %v2387, 4294901760
        %v2389 = vsub.f32 %v2387, %v2388
        %v2390 = vand.u32 %v2389, 4294901760
        %2391 = vmatmul.f32.gmra.mxu0 %v2390
        %v2392 = vpop.f32.mrf.mxu0
        %v2393 = vadd.f32 0.0, %v2392
        %2394 = vdwg.mxu0
        %2395 = vmatpush.msra.mxu0 0.0
        %2396 = vmatpush.msra.mxu0 0.0
        %2397 = vmatpush.msra.mxu0 0.0
        %2398 = vmatpush.msra.mxu0 0.0
        %2399 = vmatpush.msra.mxu0 0.0
        %2400 = vmatpush.msra.mxu0 0.0
        %2401 = vmatpush.msra.mxu0 0.0
        %2402 = vmatpush.msra.mxu0 0.0
        %2403 = vmatpush.msra.mxu0 0.0
        %2404 = vmatpush.msra.mxu0 0.0
        %2405 = vmatpush.msra.mxu0 0.0
        %2406 = vmatpush.msra.mxu0 0.0
        %2407 = vmatpush.msra.mxu0 0.0
        %2408 = vmatpush.msra.mxu0 0.0
        %v2409 = vand.u32 %v2364, 4294901760
        %v2410 = vsub.f32 %v2364, %v2409
        %v2411 = vand.u32 %v2410, 4294901760
        %v2412 = vsub.f32 %v2410, %v2411
        %v2413 = vand.u32 %v2412, 4294901760
        %2414 = vmatpush.msra.mxu0 %v2413
        %v2415 = vand.u32 %v2363, 4294901760
        %v2416 = vsub.f32 %v2363, %v2415
        %v2417 = vand.u32 %v2416, 4294901760
        %v2418 = vsub.f32 %v2416, %v2417
        %v2419 = vand.u32 %v2418, 4294901760
        %2420 = vmatpush.msra.mxu0 %v2419
        %v2421 = vand.u32 %v2366, 4294901760
        %2422 = vmatmul.f32.gmra.mxu0 %v2421
        %v2423 = vpop.f32.mrf.mxu0
        %v2424 = vadd.f32 %v2393, %v2423
        %2425 = vdwg.mxu0
        %2426 = vmatpush.msra.mxu0 0.0
        %2427 = vmatpush.msra.mxu0 0.0
        %2428 = vmatpush.msra.mxu0 0.0
        %2429 = vmatpush.msra.mxu0 0.0
        %2430 = vmatpush.msra.mxu0 0.0
        %2431 = vmatpush.msra.mxu0 0.0
        %2432 = vmatpush.msra.mxu0 0.0
        %2433 = vmatpush.msra.mxu0 0.0
        %2434 = vmatpush.msra.mxu0 0.0
        %2435 = vmatpush.msra.mxu0 0.0
        %2436 = vmatpush.msra.mxu0 0.0
        %2437 = vmatpush.msra.mxu0 0.0
        %2438 = vmatpush.msra.mxu0 0.0
        %2439 = vmatpush.msra.mxu0 0.0
        %v2440 = vand.u32 %v2364, 4294901760
        %v2441 = vsub.f32 %v2364, %v2440
        %2442 = vmatpush.msra.mxu0 %v2441
        %v2443 = vand.u32 %v2363, 4294901760
        %v2444 = vsub.f32 %v2363, %v2443
        %2445 = vmatpush.msra.mxu0 %v2444
        %v2446 = vand.u32 %v2366, 4294901760
        %v2447 = vsub.f32 %v2366, %v2446
        %2448 = vmatmul.f32.gmra.mxu0 %v2447
        %v2449 = vpop.f32.mrf.mxu0
        %v2450 = vadd.f32 %v2424, %v2449
        %2451 = vdwg.mxu0
        %2452 = vmatpush.msra.mxu0 0.0
        %2453 = vmatpush.msra.mxu0 0.0
        %2454 = vmatpush.msra.mxu0 0.0
        %2455 = vmatpush.msra.mxu0 0.0
        %2456 = vmatpush.msra.mxu0 0.0
        %2457 = vmatpush.msra.mxu0 0.0
        %2458 = vmatpush.msra.mxu0 0.0
        %2459 = vmatpush.msra.mxu0 0.0
        %2460 = vmatpush.msra.mxu0 0.0
        %2461 = vmatpush.msra.mxu0 0.0
        %2462 = vmatpush.msra.mxu0 0.0
        %2463 = vmatpush.msra.mxu0 0.0
        %2464 = vmatpush.msra.mxu0 0.0
        %2465 = vmatpush.msra.mxu0 0.0
        %v2466 = vand.u32 %v2364, 4294901760
        %2467 = vmatpush.msra.mxu0 %v2466
        %v2468 = vand.u32 %v2363, 4294901760
        %2469 = vmatpush.msra.mxu0 %v2468
        %v2470 = vand.u32 %v2366, 4294901760
        %v2471 = vsub.f32 %v2366, %v2470
        %v2472 = vand.u32 %v2471, 4294901760
        %2473 = vmatmul.f32.gmra.mxu0 %v2472
        %v2474 = vpop.f32.mrf.mxu0
        %v2475 = vadd.f32 %v2450, %v2474
        %2476 = vdwg.mxu0
        %2477 = vmatpush.msra.mxu0 0.0
        %2478 = vmatpush.msra.mxu0 0.0
        %2479 = vmatpush.msra.mxu0 0.0
        %2480 = vmatpush.msra.mxu0 0.0
        %2481 = vmatpush.msra.mxu0 0.0
        %2482 = vmatpush.msra.mxu0 0.0
        %2483 = vmatpush.msra.mxu0 0.0
        %2484 = vmatpush.msra.mxu0 0.0
        %2485 = vmatpush.msra.mxu0 0.0
        %2486 = vmatpush.msra.mxu0 0.0
        %2487 = vmatpush.msra.mxu0 0.0
        %2488 = vmatpush.msra.mxu0 0.0
        %2489 = vmatpush.msra.mxu0 0.0
        %2490 = vmatpush.msra.mxu0 0.0
        %v2491 = vand.u32 %v2364, 4294901760
        %v2492 = vsub.f32 %v2364, %v2491
        %v2493 = vand.u32 %v2492, 4294901760
        %2494 = vmatpush.msra.mxu0 %v2493
        %v2495 = vand.u32 %v2363, 4294901760
        %v2496 = vsub.f32 %v2363, %v2495
        %v2497 = vand.u32 %v2496, 4294901760
        %2498 = vmatpush.msra.mxu0 %v2497
        %v2499 = vand.u32 %v2366, 4294901760
        %2500 = vmatmul.f32.gmra.mxu0 %v2499
        %v2501 = vpop.f32.mrf.mxu0
        %v2502 = vadd.f32 %v2475, %v2501
        %2503 = vdwg.mxu0
        %2504 = vmatpush.msra.mxu0 0.0
        %2505 = vmatpush.msra.mxu0 0.0
        %2506 = vmatpush.msra.mxu0 0.0
        %2507 = vmatpush.msra.mxu0 0.0
        %2508 = vmatpush.msra.mxu0 0.0
        %2509 = vmatpush.msra.mxu0 0.0
        %2510 = vmatpush.msra.mxu0 0.0
        %2511 = vmatpush.msra.mxu0 0.0
        %2512 = vmatpush.msra.mxu0 0.0
        %2513 = vmatpush.msra.mxu0 0.0
        %2514 = vmatpush.msra.mxu0 0.0
        %2515 = vmatpush.msra.mxu0 0.0
        %2516 = vmatpush.msra.mxu0 0.0
        %2517 = vmatpush.msra.mxu0 0.0
        %v2518 = vand.u32 %v2364, 4294901760
        %2519 = vmatpush.msra.mxu0 %v2518
        %v2520 = vand.u32 %v2363, 4294901760
        %2521 = vmatpush.msra.mxu0 %v2520
        %v2522 = vand.u32 %v2366, 4294901760
        %2523 = vmatmul.f32.gmra.mxu0 %v2522
        %v2524 = vpop.f32.mrf.mxu0
        %v2525 = vadd.f32 %v2502, %v2524
        %2526 = vdwg.mxu0
        %v2527 = vmax.f32 %v2525, 0.0
        %v2528 = vld [vmem:[%s7] sm:$0xf]
        %vm2529 = vcmask 31744
        %v2531 = vsel %vm2529, %v2527, 0
        %vm2533 = vcmask 1043456
        %v2535 = vsel %vm2533, %v2528, 0
        %2537 = vmatpush.msra.mxu0 0.0
        %2538 = vmatpush.msra.mxu0 0.0
        %2539 = vmatpush.msra.mxu0 0.0
        %2540 = vmatpush.msra.mxu0 0.0
        %2541 = vmatpush.msra.mxu0 0.0
        %2542 = vmatpush.msra.mxu0 0.0
        %2543 = vmatpush.msra.mxu0 0.0
        %2544 = vmatpush.msra.mxu0 0.0
        %2545 = vmatpush.msra.mxu0 0.0
        %2546 = vmatpush.msra.mxu0 0.0
        %2547 = vmatpush.msra.mxu0 0.0
        %2548 = vmatpush.msra.mxu0 0.0
        %2549 = vmatpush.msra.mxu0 0.0
        %2550 = vmatpush.msra.mxu0 0.0
        %2551 = vmatpush.msra.mxu0 0.0
        %v2552 = vand.u32 %v2535, 4294901760
        %2553 = vmatpush.msra.mxu0 %v2552
        %v2554 = vand.u32 %v2531, 4294901760
        %v2555 = vsub.f32 %v2531, %v2554
        %v2556 = vand.u32 %v2555, 4294901760
        %v2557 = vsub.f32 %v2555, %v2556
        %v2558 = vand.u32 %v2557, 4294901760
        %2559 = vmatmul.f32.gmra.mxu0 %v2558
        %v2560 = vpop.f32.mrf.mxu0
        %v2561 = vadd.f32 0.0, %v2560
        %2562 = vdwg.mxu0
        %2563 = vmatpush.msra.mxu0 0.0
        %2564 = vmatpush.msra.mxu0 0.0
        %2565 = vmatpush.msra.mxu0 0.0
        %2566 = vmatpush.msra.mxu0 0.0
        %2567 = vmatpush.msra.mxu0 0.0
        %2568 = vmatpush.msra.mxu0 0.0
        %2569 = vmatpush.msra.mxu0 0.0
        %2570 = vmatpush.msra.mxu0 0.0
        %2571 = vmatpush.msra.mxu0 0.0
        %2572 = vmatpush.msra.mxu0 0.0
        %2573 = vmatpush.msra.mxu0 0.0
        %2574 = vmatpush.msra.mxu0 0.0
        %2575 = vmatpush.msra.mxu0 0.0
        %2576 = vmatpush.msra.mxu0 0.0
        %2577 = vmatpush.msra.mxu0 0.0
        %v2578 = vand.u32 %v2535, 4294901760
        %v2579 = vsub.f32 %v2535, %v2578
        %v2580 = vand.u32 %v2579, 4294901760
        %v2581 = vsub.f32 %v2579, %v2580
        %v2582 = vand.u32 %v2581, 4294901760
        %2583 = vmatpush.msra.mxu0 %v2582
        %v2584 = vand.u32 %v2531, 4294901760
        %2585 = vmatmul.f32.gmra.mxu0 %v2584
        %v2586 = vpop.f32.mrf.mxu0
        %v2587 = vadd.f32 %v2561, %v2586
        %2588 = vdwg.mxu0
        %2589 = vmatpush.msra.mxu0 0.0
        %2590 = vmatpush.msra.mxu0 0.0
        %2591 = vmatpush.msra.mxu0 0.0
        %2592 = vmatpush.msra.mxu0 0.0
        %2593 = vmatpush.msra.mxu0 0.0
        %2594 = vmatpush.msra.mxu0 0.0
        %2595 = vmatpush.msra.mxu0 0.0
        %2596 = vmatpush.msra.mxu0 0.0
        %2597 = vmatpush.msra.mxu0 0.0
        %2598 = vmatpush.msra.mxu0 0.0
        %2599 = vmatpush.msra.mxu0 0.0
        %2600 = vmatpush.msra.mxu0 0.0
        %2601 = vmatpush.msra.mxu0 0.0
        %2602 = vmatpush.msra.mxu0 0.0
        %2603 = vmatpush.msra.mxu0 0.0
        %v2604 = vand.u32 %v2535, 4294901760
        %v2605 = vsub.f32 %v2535, %v2604
        %2606 = vmatpush.msra.mxu0 %v2605
        %v2607 = vand.u32 %v2531, 4294901760
        %v2608 = vsub.f32 %v2531, %v2607
        %2609 = vmatmul.f32.gmra.mxu0 %v2608
        %v2610 = vpop.f32.mrf.mxu0
        %v2611 = vadd.f32 %v2587, %v2610
        %2612 = vdwg.mxu0
        %2613 = vmatpush.msra.mxu0 0.0
        %2614 = vmatpush.msra.mxu0 0.0
        %2615 = vmatpush.msra.mxu0 0.0
        %2616 = vmatpush.msra.mxu0 0.0
        %2617 = vmatpush.msra.mxu0 0.0
        %2618 = vmatpush.msra.mxu0 0.0
        %2619 = vmatpush.msra.mxu0 0.0
        %2620 = vmatpush.msra.mxu0 0.0
        %2621 = vmatpush.msra.mxu0 0.0
        %2622 = vmatpush.msra.mxu0 0.0
        %2623 = vmatpush.msra.mxu0 0.0
        %2624 = vmatpush.msra.mxu0 0.0
        %2625 = vmatpush.msra.mxu0 0.0
        %2626 = vmatpush.msra.mxu0 0.0
        %2627 = vmatpush.msra.mxu0 0.0
        %v2628 = vand.u32 %v2535, 4294901760
        %2629 = vmatpush.msra.mxu0 %v2628
        %v2630 = vand.u32 %v2531, 4294901760
        %v2631 = vsub.f32 %v2531, %v2630
        %v2632 = vand.u32 %v2631, 4294901760
        %2633 = vmatmul.f32.gmra.mxu0 %v2632
        %v2634 = vpop.f32.mrf.mxu0
        %v2635 = vadd.f32 %v2611, %v2634
        %2636 = vdwg.mxu0
        %2637 = vmatpush.msra.mxu0 0.0
        %2638 = vmatpush.msra.mxu0 0.0
        %2639 = vmatpush.msra.mxu0 0.0
        %2640 = vmatpush.msra.mxu0 0.0
        %2641 = vmatpush.msra.mxu0 0.0
        %2642 = vmatpush.msra.mxu0 0.0
        %2643 = vmatpush.msra.mxu0 0.0
        %2644 = vmatpush.msra.mxu0 0.0
        %2645 = vmatpush.msra.mxu0 0.0
        %2646 = vmatpush.msra.mxu0 0.0
        %2647 = vmatpush.msra.mxu0 0.0
        %2648 = vmatpush.msra.mxu0 0.0
        %2649 = vmatpush.msra.mxu0 0.0
        %2650 = vmatpush.msra.mxu0 0.0
        %2651 = vmatpush.msra.mxu0 0.0
        %v2652 = vand.u32 %v2535, 4294901760
        %v2653 = vsub.f32 %v2535, %v2652
        %v2654 = vand.u32 %v2653, 4294901760
        %2655 = vmatpush.msra.mxu0 %v2654
        %v2656 = vand.u32 %v2531, 4294901760
        %2657 = vmatmul.f32.gmra.mxu0 %v2656
        %v2658 = vpop.f32.mrf.mxu0
        %v2659 = vadd.f32 %v2635, %v2658
        %2660 = vdwg.mxu0
        %2661 = vmatpush.msra.mxu0 0.0
        %2662 = vmatpush.msra.mxu0 0.0
        %2663 = vmatpush.msra.mxu0 0.0
        %2664 = vmatpush.msra.mxu0 0.0
        %2665 = vmatpush.msra.mxu0 0.0
        %2666 = vmatpush.msra.mxu0 0.0
        %2667 = vmatpush.msra.mxu0 0.0
        %2668 = vmatpush.msra.mxu0 0.0
        %2669 = vmatpush.msra.mxu0 0.0
        %2670 = vmatpush.msra.mxu0 0.0
        %2671 = vmatpush.msra.mxu0 0.0
        %2672 = vmatpush.msra.mxu0 0.0
        %2673 = vmatpush.msra.mxu0 0.0
        %2674 = vmatpush.msra.mxu0 0.0
        %2675 = vmatpush.msra.mxu0 0.0
        %v2676 = vand.u32 %v2535, 4294901760
        %2677 = vmatpush.msra.mxu0 %v2676
        %v2678 = vand.u32 %v2531, 4294901760
        %2679 = vmatmul.f32.gmra.mxu0 %v2678
        %v2680 = vpop.f32.mrf.mxu0
        %v2681 = vadd.f32 %v2659, %v2680
        %2682 = vdwg.mxu0
        %v2683 = vsub.f32 0.0, %v2681
        %v2684 = vmul.f32 %v2683, 1.442695
        %v2685 = vpow.pop %v2684
        %v2686 = vadd.f32 %v2685, 1.0
        %v2687 = vrcp.pop %v2686
        %v2688 = vmul.f32 %v2686, %v2687
        %v2689 = vsub.f32 1.0, %v2688
        %v2690 = vmul.f32 %v2687, %v2689
        %v2691 = vadd.f32 %v2687, %v2690
        %vm2692 = vweird.f32 %v2686
        %vm2693 = vweird.f32 %v2687
        %vm2694 = vmor %vm2692, %vm2693
        %v2695 = vsel %vm2694, %v2687, %v2691
        %v2696 = vand.u32 2147483647, %v2686
        %vm2697 = vcmp.eq.f32.partialorder %v2696, 8.507059e+37
        %v2698 = vand.u32 %v2686, 2147483648
        %v2699 = vor.u32 1.1754944e-38, %v2698
        %v2700 = vsel %vm2697, %v2699, %v2695
        %v2701 = vmul.f32 1.0, %v2700
        %v2702 = vperm.slane %v2701, 0
        %v2703 = vmul.f32 %v2338, %v2702
        %v2704 = vmul.f32 %v2339, %v2702
        %v2705 = vmul.f32 %v2340, %v2702
        %v2706 = vmul.f32 %v2341, %v2702
        %v2707 = vadd.f32 %v2703, %v673
        %v2708 = vadd.f32 %v2704, %v674
        %v2709 = vadd.f32 %v2705, %v675
        %v2710 = vadd.f32 %v2706, %v676
        %v2711 = vadd.f32 %v561, %v2707
        %v2712 = vadd.f32 %v562, %v2708
        %v2713 = vadd.f32 %v563, %v2709
        %v2714 = vadd.f32 %v564, %v2710
        %vm2715 = vcmask 122880
        %2716 = vst.msk [vmem:[%s550] sm:$0x1] %vm2715, %v2701
        %v2717 = vsel %vm565, %v2711, 0.0
        %2718 = vadd.xlane.f32.xlu0 %v2717
        %v2719 = vpop.xlane.xlu0 %2718
        %v2720 = vsel %vm565, %v2712, 0.0
        %2721 = vadd.xlane.f32.xlu0 %v2720
        %v2722 = vpop.xlane.xlu0 %2721
        %v2723 = vsel %vm565, %v2713, 0.0
        %2724 = vadd.xlane.f32.xlu0 %v2723
        %v2725 = vpop.xlane.xlu0 %2724
        %v2726 = vsel %vm565, %v2714, 0.0
        %2727 = vadd.xlane.f32.xlu0 %v2726
        %v2728 = vpop.xlane.xlu0 %2727
        %v2729 = vmul.f32 %v2719, %v584
        %v2730 = vmul.f32 %v2722, %v584
        %v2731 = vmul.f32 %v2725, %v584
        %v2732 = vmul.f32 %v2728, %v584
        %v2733 = vsub.f32 %v2711, %v2729
        %v2734 = vsub.f32 %v2712, %v2730
        %v2735 = vsub.f32 %v2713, %v2731
        %v2736 = vsub.f32 %v2714, %v2732
        %v2737 = vmul.f32 %v2733, %v2733
        %v2738 = vmul.f32 %v2734, %v2734
        %v2739 = vmul.f32 %v2735, %v2735
        %v2740 = vmul.f32 %v2736, %v2736
        %v2741 = vsel %vm565, %v2737, 0.0
        %2742 = vadd.xlane.f32.xlu0 %v2741
        %v2743 = vpop.xlane.xlu0 %2742
        %v2744 = vsel %vm565, %v2738, 0.0
        %2745 = vadd.xlane.f32.xlu0 %v2744
        %v2746 = vpop.xlane.xlu0 %2745
        %v2747 = vsel %vm565, %v2739, 0.0
        %2748 = vadd.xlane.f32.xlu0 %v2747
        %v2749 = vpop.xlane.xlu0 %2748
        %v2750 = vsel %vm565, %v2740, 0.0
        %2751 = vadd.xlane.f32.xlu0 %v2750
        %v2752 = vpop.xlane.xlu0 %2751
        %v2753 = vmul.f32 %v2743, %v584
        %v2754 = vmul.f32 %v2746, %v584
        %v2755 = vmul.f32 %v2749, %v584
        %v2756 = vmul.f32 %v2752, %v584
        %v2757 = vadd.f32 %v2753, 1e-05
        %v2758 = vadd.f32 %v2754, 1e-05
        %v2759 = vadd.f32 %v2755, 1e-05
        %v2760 = vadd.f32 %v2756, 1e-05
        %v2761 = vrsqrt.pop %v2757
        %v2762 = vmul.f32 %v2761, %v2757
        %v2763 = vmul.f32 %v2762, %v2761
        %v2764 = vmul.f32 0.5, %v2763
        %v2765 = vsub.f32 1.5, %v2764
        %v2766 = vmul.f32 %v2761, %v2765
        %vm2767 = vweird.f32 %v2757
        %vm2768 = vweird.f32 %v2761
        %vm2769 = vmor %vm2767, %vm2768
        %v2770 = vsel %vm2769, %v2761, %v2766
        %v2771 = vrsqrt.pop %v2758
        %v2772 = vmul.f32 %v2771, %v2758
        %v2773 = vmul.f32 %v2772, %v2771
        %v2774 = vmul.f32 0.5, %v2773
        %v2775 = vsub.f32 1.5, %v2774
        %v2776 = vmul.f32 %v2771, %v2775
        %vm2777 = vweird.f32 %v2758
        %vm2778 = vweird.f32 %v2771
        %vm2779 = vmor %vm2777, %vm2778
        %v2780 = vsel %vm2779, %v2771, %v2776
        %v2781 = vrsqrt.pop %v2759
        %v2782 = vmul.f32 %v2781, %v2759
        %v2783 = vmul.f32 %v2782, %v2781
        %v2784 = vmul.f32 0.5, %v2783
        %v2785 = vsub.f32 1.5, %v2784
        %v2786 = vmul.f32 %v2781, %v2785
        %vm2787 = vweird.f32 %v2759
        %vm2788 = vweird.f32 %v2781
        %vm2789 = vmor %vm2787, %vm2788
        %v2790 = vsel %vm2789, %v2781, %v2786
        %v2791 = vrsqrt.pop %v2760
        %v2792 = vmul.f32 %v2791, %v2760
        %v2793 = vmul.f32 %v2792, %v2791
        %v2794 = vmul.f32 0.5, %v2793
        %v2795 = vsub.f32 1.5, %v2794
        %v2796 = vmul.f32 %v2791, %v2795
        %vm2797 = vweird.f32 %v2760
        %vm2798 = vweird.f32 %v2791
        %vm2799 = vmor %vm2797, %vm2798
        %v2800 = vsel %vm2799, %v2791, %v2796
        %v2801 = vmul.f32 %v2733, %v2770
        %v2802 = vmul.f32 %v2734, %v2780
        %v2803 = vmul.f32 %v2735, %v2790
        %v2804 = vmul.f32 %v2736, %v2800
        %v2805 = vld [vmem:[%s8] sm:$0x1]
        %v2807 = vperm.slane %v2805, 0
        %v2809 = vmul.f32 %v2801, %v2807
        %v2810 = vmul.f32 %v2802, %v2807
        %v2811 = vmul.f32 %v2803, %v2807
        %v2812 = vmul.f32 %v2804, %v2807
        %v2813 = vld [vmem:[%s9] sm:$0x1]
        %v2815 = vperm.slane %v2813, 0
        %v2817 = vadd.f32 %v2809, %v2815
        %v2818 = vadd.f32 %v2810, %v2815
        %v2819 = vadd.f32 %v2811, %v2815
        %v2820 = vadd.f32 %v2812, %v2815
        %v2821 = vld [vmem:[%s10] sm:$0xff]
        %v2822 = vld [vmem:[%s10 + $0x8] sm:$0xff]
        %v2823 = vld [vmem:[%s11] sm:$0x1]
        %v2825 = vperm.slane %v2823, 0
        %v2828 = vsel %vm565, %v2817, 0
        %v2831 = vsel %vm565, %v2818, 0
        %v2834 = vsel %vm565, %v2819, 0
        %v2837 = vsel %vm565, %v2820, 0
        %2839 = vmatpush.msra.mxu0 0.0
        %2840 = vmatpush.msra.mxu0 0.0
        %2841 = vmatpush.msra.mxu0 0.0
        %2842 = vmatpush.msra.mxu0 0.0
        %2843 = vmatpush.msra.mxu0 0.0
        %2844 = vmatpush.msra.mxu0 0.0
        %2845 = vmatpush.msra.mxu0 0.0
        %2846 = vmatpush.msra.mxu0 0.0
        %2847 = vmatpush.msra.mxu0 0.0
        %2848 = vmatpush.msra.mxu0 0.0
        %2849 = vmatpush.msra.mxu0 0.0
        %2850 = vmatpush.msra.mxu0 0.0
        %2851 = vmatpush.msra.mxu0 0.0
        %2852 = vmatpush.msra.mxu0 0.0
        %v2853 = vand.u32 %v2822, 4294901760
        %2854 = vmatpush.msra.mxu0 %v2853
        %v2855 = vand.u32 %v2821, 4294901760
        %2856 = vmatpush.msra.mxu0 %v2855
        %v2857 = vand.u32 %v2828, 4294901760
        %v2858 = vsub.f32 %v2828, %v2857
        %v2859 = vand.u32 %v2858, 4294901760
        %v2860 = vsub.f32 %v2858, %v2859
        %v2861 = vand.u32 %v2860, 4294901760
        %2862 = vmatmul.f32.gmra.mxu0 %v2861
        %v2863 = vpop.f32.mrf.mxu0
        %v2864 = vadd.f32 %v2825, %v2863
        %v2865 = vand.u32 %v2831, 4294901760
        %v2866 = vsub.f32 %v2831, %v2865
        %v2867 = vand.u32 %v2866, 4294901760
        %v2868 = vsub.f32 %v2866, %v2867
        %v2869 = vand.u32 %v2868, 4294901760
        %2870 = vmatmul.f32.gmra.mxu0 %v2869
        %v2871 = vpop.f32.mrf.mxu0
        %v2872 = vadd.f32 %v2825, %v2871
        %v2873 = vand.u32 %v2834, 4294901760
        %v2874 = vsub.f32 %v2834, %v2873
        %v2875 = vand.u32 %v2874, 4294901760
        %v2876 = vsub.f32 %v2874, %v2875
        %v2877 = vand.u32 %v2876, 4294901760
        %2878 = vmatmul.f32.gmra.mxu0 %v2877
        %v2879 = vpop.f32.mrf.mxu0
        %v2880 = vadd.f32 %v2825, %v2879
        %v2881 = vand.u32 %v2837, 4294901760
        %v2882 = vsub.f32 %v2837, %v2881
        %v2883 = vand.u32 %v2882, 4294901760
        %v2884 = vsub.f32 %v2882, %v2883
        %v2885 = vand.u32 %v2884, 4294901760
        %2886 = vmatmul.f32.gmra.mxu0 %v2885
        %v2887 = vpop.f32.mrf.mxu0
        %v2888 = vadd.f32 %v2825, %v2887
        %2889 = vdwg.mxu0
        %2890 = vmatpush.msra.mxu0 0.0
        %2891 = vmatpush.msra.mxu0 0.0
        %2892 = vmatpush.msra.mxu0 0.0
        %2893 = vmatpush.msra.mxu0 0.0
        %2894 = vmatpush.msra.mxu0 0.0
        %2895 = vmatpush.msra.mxu0 0.0
        %2896 = vmatpush.msra.mxu0 0.0
        %2897 = vmatpush.msra.mxu0 0.0
        %2898 = vmatpush.msra.mxu0 0.0
        %2899 = vmatpush.msra.mxu0 0.0
        %2900 = vmatpush.msra.mxu0 0.0
        %2901 = vmatpush.msra.mxu0 0.0
        %2902 = vmatpush.msra.mxu0 0.0
        %2903 = vmatpush.msra.mxu0 0.0
        %v2904 = vand.u32 %v2822, 4294901760
        %v2905 = vsub.f32 %v2822, %v2904
        %v2906 = vand.u32 %v2905, 4294901760
        %v2907 = vsub.f32 %v2905, %v2906
        %v2908 = vand.u32 %v2907, 4294901760
        %2909 = vmatpush.msra.mxu0 %v2908
        %v2910 = vand.u32 %v2821, 4294901760
        %v2911 = vsub.f32 %v2821, %v2910
        %v2912 = vand.u32 %v2911, 4294901760
        %v2913 = vsub.f32 %v2911, %v2912
        %v2914 = vand.u32 %v2913, 4294901760
        %2915 = vmatpush.msra.mxu0 %v2914
        %v2916 = vand.u32 %v2828, 4294901760
        %2917 = vmatmul.f32.gmra.mxu0 %v2916
        %v2918 = vpop.f32.mrf.mxu0
        %v2919 = vadd.f32 %v2864, %v2918
        %v2920 = vand.u32 %v2831, 4294901760
        %2921 = vmatmul.f32.gmra.mxu0 %v2920
        %v2922 = vpop.f32.mrf.mxu0
        %v2923 = vadd.f32 %v2872, %v2922
        %v2924 = vand.u32 %v2834, 4294901760
        %2925 = vmatmul.f32.gmra.mxu0 %v2924
        %v2926 = vpop.f32.mrf.mxu0
        %v2927 = vadd.f32 %v2880, %v2926
        %v2928 = vand.u32 %v2837, 4294901760
        %2929 = vmatmul.f32.gmra.mxu0 %v2928
        %v2930 = vpop.f32.mrf.mxu0
        %v2931 = vadd.f32 %v2888, %v2930
        %2932 = vdwg.mxu0
        %2933 = vmatpush.msra.mxu0 0.0
        %2934 = vmatpush.msra.mxu0 0.0
        %2935 = vmatpush.msra.mxu0 0.0
        %2936 = vmatpush.msra.mxu0 0.0
        %2937 = vmatpush.msra.mxu0 0.0
        %2938 = vmatpush.msra.mxu0 0.0
        %2939 = vmatpush.msra.mxu0 0.0
        %2940 = vmatpush.msra.mxu0 0.0
        %2941 = vmatpush.msra.mxu0 0.0
        %2942 = vmatpush.msra.mxu0 0.0
        %2943 = vmatpush.msra.mxu0 0.0
        %2944 = vmatpush.msra.mxu0 0.0
        %2945 = vmatpush.msra.mxu0 0.0
        %2946 = vmatpush.msra.mxu0 0.0
        %v2947 = vand.u32 %v2822, 4294901760
        %v2948 = vsub.f32 %v2822, %v2947
        %2949 = vmatpush.msra.mxu0 %v2948
        %v2950 = vand.u32 %v2821, 4294901760
        %v2951 = vsub.f32 %v2821, %v2950
        %2952 = vmatpush.msra.mxu0 %v2951
        %v2953 = vand.u32 %v2828, 4294901760
        %v2954 = vsub.f32 %v2828, %v2953
        %2955 = vmatmul.f32.gmra.mxu0 %v2954
        %v2956 = vpop.f32.mrf.mxu0
        %v2957 = vadd.f32 %v2919, %v2956
        %v2958 = vand.u32 %v2831, 4294901760
        %v2959 = vsub.f32 %v2831, %v2958
        %2960 = vmatmul.f32.gmra.mxu0 %v2959
        %v2961 = vpop.f32.mrf.mxu0
        %v2962 = vadd.f32 %v2923, %v2961
        %v2963 = vand.u32 %v2834, 4294901760
        %v2964 = vsub.f32 %v2834, %v2963
        %2965 = vmatmul.f32.gmra.mxu0 %v2964
        %v2966 = vpop.f32.mrf.mxu0
        %v2967 = vadd.f32 %v2927, %v2966
        %v2968 = vand.u32 %v2837, 4294901760
        %v2969 = vsub.f32 %v2837, %v2968
        %2970 = vmatmul.f32.gmra.mxu0 %v2969
        %v2971 = vpop.f32.mrf.mxu0
        %v2972 = vadd.f32 %v2931, %v2971
        %2973 = vdwg.mxu0
        %2974 = vmatpush.msra.mxu0 0.0
        %2975 = vmatpush.msra.mxu0 0.0
        %2976 = vmatpush.msra.mxu0 0.0
        %2977 = vmatpush.msra.mxu0 0.0
        %2978 = vmatpush.msra.mxu0 0.0
        %2979 = vmatpush.msra.mxu0 0.0
        %2980 = vmatpush.msra.mxu0 0.0
        %2981 = vmatpush.msra.mxu0 0.0
        %2982 = vmatpush.msra.mxu0 0.0
        %2983 = vmatpush.msra.mxu0 0.0
        %2984 = vmatpush.msra.mxu0 0.0
        %2985 = vmatpush.msra.mxu0 0.0
        %2986 = vmatpush.msra.mxu0 0.0
        %2987 = vmatpush.msra.mxu0 0.0
        %v2988 = vand.u32 %v2822, 4294901760
        %2989 = vmatpush.msra.mxu0 %v2988
        %v2990 = vand.u32 %v2821, 4294901760
        %2991 = vmatpush.msra.mxu0 %v2990
        %v2992 = vand.u32 %v2828, 4294901760
        %v2993 = vsub.f32 %v2828, %v2992
        %v2994 = vand.u32 %v2993, 4294901760
        %2995 = vmatmul.f32.gmra.mxu0 %v2994
        %v2996 = vpop.f32.mrf.mxu0
        %v2997 = vadd.f32 %v2957, %v2996
        %v2998 = vand.u32 %v2831, 4294901760
        %v2999 = vsub.f32 %v2831, %v2998
        %v3000 = vand.u32 %v2999, 4294901760
        %3001 = vmatmul.f32.gmra.mxu0 %v3000
        %v3002 = vpop.f32.mrf.mxu0
        %v3003 = vadd.f32 %v2962, %v3002
        %v3004 = vand.u32 %v2834, 4294901760
        %v3005 = vsub.f32 %v2834, %v3004
        %v3006 = vand.u32 %v3005, 4294901760
        %3007 = vmatmul.f32.gmra.mxu0 %v3006
        %v3008 = vpop.f32.mrf.mxu0
        %v3009 = vadd.f32 %v2967, %v3008
        %v3010 = vand.u32 %v2837, 4294901760
        %v3011 = vsub.f32 %v2837, %v3010
        %v3012 = vand.u32 %v3011, 4294901760
        %3013 = vmatmul.f32.gmra.mxu0 %v3012
        %v3014 = vpop.f32.mrf.mxu0
        %v3015 = vadd.f32 %v2972, %v3014
        %3016 = vdwg.mxu0
        %3017 = vmatpush.msra.mxu0 0.0
        %3018 = vmatpush.msra.mxu0 0.0
        %3019 = vmatpush.msra.mxu0 0.0
        %3020 = vmatpush.msra.mxu0 0.0
        %3021 = vmatpush.msra.mxu0 0.0
        %3022 = vmatpush.msra.mxu0 0.0
        %3023 = vmatpush.msra.mxu0 0.0
        %3024 = vmatpush.msra.mxu0 0.0
        %3025 = vmatpush.msra.mxu0 0.0
        %3026 = vmatpush.msra.mxu0 0.0
        %3027 = vmatpush.msra.mxu0 0.0
        %3028 = vmatpush.msra.mxu0 0.0
        %3029 = vmatpush.msra.mxu0 0.0
        %3030 = vmatpush.msra.mxu0 0.0
        %v3031 = vand.u32 %v2822, 4294901760
        %v3032 = vsub.f32 %v2822, %v3031
        %v3033 = vand.u32 %v3032, 4294901760
        %3034 = vmatpush.msra.mxu0 %v3033
        %v3035 = vand.u32 %v2821, 4294901760
        %v3036 = vsub.f32 %v2821, %v3035
        %v3037 = vand.u32 %v3036, 4294901760
        %3038 = vmatpush.msra.mxu0 %v3037
        %v3039 = vand.u32 %v2828, 4294901760
        %3040 = vmatmul.f32.gmra.mxu0 %v3039
        %v3041 = vpop.f32.mrf.mxu0
        %v3042 = vadd.f32 %v2997, %v3041
        %v3043 = vand.u32 %v2831, 4294901760
        %3044 = vmatmul.f32.gmra.mxu0 %v3043
        %v3045 = vpop.f32.mrf.mxu0
        %v3046 = vadd.f32 %v3003, %v3045
        %v3047 = vand.u32 %v2834, 4294901760
        %3048 = vmatmul.f32.gmra.mxu0 %v3047
        %v3049 = vpop.f32.mrf.mxu0
        %v3050 = vadd.f32 %v3009, %v3049
        %v3051 = vand.u32 %v2837, 4294901760
        %3052 = vmatmul.f32.gmra.mxu0 %v3051
        %v3053 = vpop.f32.mrf.mxu0
        %v3054 = vadd.f32 %v3015, %v3053
        %3055 = vdwg.mxu0
        %3056 = vmatpush.msra.mxu0 0.0
        %3057 = vmatpush.msra.mxu0 0.0
        %3058 = vmatpush.msra.mxu0 0.0
        %3059 = vmatpush.msra.mxu0 0.0
        %3060 = vmatpush.msra.mxu0 0.0
        %3061 = vmatpush.msra.mxu0 0.0
        %3062 = vmatpush.msra.mxu0 0.0
        %3063 = vmatpush.msra.mxu0 0.0
        %3064 = vmatpush.msra.mxu0 0.0
        %3065 = vmatpush.msra.mxu0 0.0
        %3066 = vmatpush.msra.mxu0 0.0
        %3067 = vmatpush.msra.mxu0 0.0
        %3068 = vmatpush.msra.mxu0 0.0
        %3069 = vmatpush.msra.mxu0 0.0
        %v3070 = vand.u32 %v2822, 4294901760
        %3071 = vmatpush.msra.mxu0 %v3070
        %v3072 = vand.u32 %v2821, 4294901760
        %3073 = vmatpush.msra.mxu0 %v3072
        %v3074 = vand.u32 %v2828, 4294901760
        %3075 = vmatmul.f32.gmra.mxu0 %v3074
        %v3076 = vpop.f32.mrf.mxu0
        %v3077 = vadd.f32 %v3042, %v3076
        %v3078 = vand.u32 %v2831, 4294901760
        %3079 = vmatmul.f32.gmra.mxu0 %v3078
        %v3080 = vpop.f32.mrf.mxu0
        %v3081 = vadd.f32 %v3046, %v3080
        %v3082 = vand.u32 %v2834, 4294901760
        %3083 = vmatmul.f32.gmra.mxu0 %v3082
        %v3084 = vpop.f32.mrf.mxu0
        %v3085 = vadd.f32 %v3050, %v3084
        %v3086 = vand.u32 %v2837, 4294901760
        %3087 = vmatmul.f32.gmra.mxu0 %v3086
        %v3088 = vpop.f32.mrf.mxu0
        %v3089 = vadd.f32 %v3054, %v3088
        %3090 = vdwg.mxu0
        %v3091 = vmul.f32 %v3077, %v3077
        %v3092 = vmul.f32 %v3081, %v3081
        %v3093 = vmul.f32 %v3085, %v3085
        %v3094 = vmul.f32 %v3089, %v3089
        %v3095 = vmul.f32 %v3077, %v3091
        %v3096 = vmul.f32 %v3081, %v3092
        %v3097 = vmul.f32 %v3085, %v3093
        %v3098 = vmul.f32 %v3089, %v3094
        %v3099 = vmul.f32 %v3095, 0.044715
        %v3100 = vmul.f32 %v3096, 0.044715
        %v3101 = vmul.f32 %v3097, 0.044715
        %v3102 = vmul.f32 %v3098, 0.044715
        %v3103 = vadd.f32 %v3077, %v3099
        %v3104 = vadd.f32 %v3081, %v3100
        %v3105 = vadd.f32 %v3085, %v3101
        %v3106 = vadd.f32 %v3089, %v3102
        %v3107 = vmul.f32 %v3103, 0.7978846
        %v3108 = vmul.f32 %v3104, 0.7978846
        %v3109 = vmul.f32 %v3105, 0.7978846
        %v3110 = vmul.f32 %v3106, 0.7978846
        %v3111 = vtanh.pop %v3107
        %v3112 = vtanh.pop %v3108
        %v3113 = vtanh.pop %v3109
        %v3114 = vtanh.pop %v3110
        %v3115 = vadd.f32 %v3111, 1.0
        %v3116 = vadd.f32 %v3112, 1.0
        %v3117 = vadd.f32 %v3113, 1.0
        %v3118 = vadd.f32 %v3114, 1.0
        %v3119 = vmul.f32 %v3115, 0.5
        %v3120 = vmul.f32 %v3116, 0.5
        %v3121 = vmul.f32 %v3117, 0.5
        %v3122 = vmul.f32 %v3118, 0.5
        %v3123 = vmul.f32 %v3077, %v3119
        %v3124 = vmul.f32 %v3081, %v3120
        %v3125 = vmul.f32 %v3085, %v3121
        %v3126 = vmul.f32 %v3089, %v3122
        %vm3127 = vcmask 523264
        %3128 = vst.msk [vmem:[#allocation3] sm:$0xff] %vm3127, 0.0
        %3129 = vst.msk [vmem:[#allocation3 + $0x8] sm:$0xff] %vm3127, 0.0
        %3130 = vst.msk [vmem:[#allocation3 + $0x10] sm:$0xff] %vm3127, 0.0
        %3131 = vst.msk [vmem:[#allocation3 + $0x18] sm:$0xff] %vm3127, 0.0
        %vm3132 = vcmask 521216
        %3133 = vst.msk [vmem:[#allocation3 + $0x20] sm:$0x3f] %vm3132, 0.0
        %3134 = vst.msk [vmem:[#allocation3 + $0x3] sm:$0xff] %vm3127, %v3123
        %3135 = vst.msk [vmem:[#allocation3 + $0xb] sm:$0xff] %vm3127, %v3124
        %3136 = vst.msk [vmem:[#allocation3 + $0x13] sm:$0xff] %vm3127, %v3125
        %3137 = vst.msk [vmem:[#allocation3 + $0x1b] sm:$0xff] %vm3127, %v3126
        %v3138 = vlaneseq
        %v3139 = vshrl.u32 %v3138, 7
        %v3140 = vadd.s32 %v3139, 8
        %v3141 = vadd.s32 %v3139, 16
        %v3142 = vadd.s32 %v3139, 24
        %vm3143 = vcmp.lt.s32.totalorder %v3139, 0
        %v3144 = vsub.s32 0, %v3139
        %v3145 = vsel %vm3143, %v3144, %v3139
        %v3146 = vshrl.u32 %v3145, 1
        %v3147 = vand.u32 %v3145, 1
        %v3148 = vsub.s32 0, %v3147
        %v3149 = vsel %vm3143, %v3148, %v3147
        %vm3150 = vcmp.lt.s32.totalorder %v3140, 0
        %v3151 = vsub.s32 0, %v3140
        %v3152 = vsel %vm3150, %v3151, %v3140
        %v3153 = vshrl.u32 %v3152, 1
        %v3154 = vand.u32 %v3152, 1
        %v3155 = vsub.s32 0, %v3154
        %v3156 = vsel %vm3150, %v3155, %v3154
        %vm3157 = vcmp.lt.s32.totalorder %v3141, 0
        %v3158 = vsub.s32 0, %v3141
        %v3159 = vsel %vm3157, %v3158, %v3141
        %v3160 = vshrl.u32 %v3159, 1
        %v3161 = vand.u32 %v3159, 1
        %v3162 = vsub.s32 0, %v3161
        %v3163 = vsel %vm3157, %v3162, %v3161
        %vm3164 = vcmp.lt.s32.totalorder %v3142, 0
        %v3165 = vsub.s32 0, %v3142
        %v3166 = vsel %vm3164, %v3165, %v3142
        %v3167 = vshrl.u32 %v3166, 1
        %v3168 = vand.u32 %v3166, 1
        %v3169 = vsub.s32 0, %v3168
        %v3170 = vsel %vm3164, %v3169, %v3168
        %vm3171 = vcmp.ne.s32.totalorder %v3149, 0
        %vm3172 = vcmp.ne.s32.totalorder %v3156, 0
        %vm3173 = vcmp.ne.s32.totalorder %v3163, 0
        %vm3174 = vcmp.ne.s32.totalorder %v3170, 0
        %vm3175 = vcmp.lt.s32.totalorder %v3149, 0
        %vm3176 = vcmp.lt.s32.totalorder %v3156, 0
        %vm3177 = vcmp.lt.s32.totalorder %v3163, 0
        %vm3178 = vcmp.lt.s32.totalorder %v3170, 0
        %vm3179 = vmand %vm3175, %vm3171
        %vm3180 = vmand %vm3176, %vm3172
        %vm3181 = vmand %vm3177, %vm3173
        %vm3182 = vmand %vm3178, %vm3174
        %v3183 = vadd.s32 %v3149, 2
        %v3184 = vadd.s32 %v3156, 2
        %v3185 = vadd.s32 %v3163, 2
        %v3186 = vadd.s32 %v3170, 2
        %v3187 = vsel %vm3179, %v3183, %v3149
        %v3188 = vsel %vm3180, %v3184, %v3156
        %v3189 = vsel %vm3181, %v3185, %v3163
        %v3190 = vsel %vm3182, %v3186, %v3170
        %vm3191 = vcmp.gt.s32.totalorder %v3187, 0
        %vm3192 = vcmp.gt.s32.totalorder %v3188, 0
        %vm3193 = vcmp.gt.s32.totalorder %v3189, 0
        %vm3194 = vcmp.gt.s32.totalorder %v3190, 0
        %v3195 = vsel %vm3191, 1, 0
        %v3196 = vsel %vm3192, 1, 0
        %v3197 = vsel %vm3193, 1, 0
        %v3198 = vsel %vm3194, 1, 0
        %v3199 = vcvt.s32.f32 %v3195
        %v3200 = vcvt.s32.f32 %v3196
        %v3201 = vcvt.s32.f32 %v3197
        %v3202 = vcvt.s32.f32 %v3198
        %vm3203 = vcmp.lt.s32.totalorder %v3187, 1
        %vm3204 = vcmp.lt.s32.totalorder %v3188, 1
        %vm3205 = vcmp.lt.s32.totalorder %v3189, 1
        %vm3206 = vcmp.lt.s32.totalorder %v3190, 1
        %v3207 = vsel %vm3203, 1, 0
        %v3208 = vsel %vm3204, 1, 0
        %v3209 = vsel %vm3205, 1, 0
        %v3210 = vsel %vm3206, 1, 0
        %v3211 = vcvt.s32.f32 %v3207
        %v3212 = vcvt.s32.f32 %v3208
        %v3213 = vcvt.s32.f32 %v3209
        %v3214 = vcvt.s32.f32 %v3210
        %v3215 = vld [vmem:[#allocation3] sm:$0xff]
        %v3216 = vld [vmem:[#allocation3 + $0x8] sm:$0xff]
        %v3217 = vld [vmem:[#allocation3 + $0x10] sm:$0xff]
        %v3218 = vld [vmem:[#allocation3 + $0x18] sm:$0xff]
        %v3219 = vmul.f32 %v3215, %v3199
        %v3220 = vmul.f32 %v3216, %v3200
        %v3221 = vmul.f32 %v3217, %v3201
        %v3222 = vmul.f32 %v3218, %v3202
        %v3223 = vld [vmem:[%s12] sm:$0x1]
        %v3224 = vperm.slane %v3223, 0
        %v3225 = vmul.f32 %v3219, %v3224
        %v3226 = vmul.f32 %v3220, %v3224
        %v3227 = vmul.f32 %v3221, %v3224
        %v3228 = vmul.f32 %v3222, %v3224
        %v3229 = vadd.f32 %v3225, 0.0
        %v3230 = vadd.f32 %v3226, 0.0
        %v3231 = vadd.f32 %v3227, 0.0
        %v3232 = vadd.f32 %v3228, 0.0
        %v3233 = vld [vmem:[#allocation3 + $0x1] sm:$0xff]
        %v3234 = vld [vmem:[#allocation3 + $0x9] sm:$0xff]
        %v3235 = vld [vmem:[#allocation3 + $0x11] sm:$0xff]
        %v3236 = vld [vmem:[#allocation3 + $0x19] sm:$0xff]
        %v3237 = vld [vmem:[%s12 + $0x1] sm:$0x1]
        %v3238 = vperm.slane %v3237, 0
        %v3239 = vmul.f32 %v3233, %v3238
        %v3240 = vmul.f32 %v3234, %v3238
        %v3241 = vmul.f32 %v3235, %v3238
        %v3242 = vmul.f32 %v3236, %v3238
        %v3243 = vadd.f32 %v3229, %v3239
        %v3244 = vadd.f32 %v3230, %v3240
        %v3245 = vadd.f32 %v3231, %v3241
        %v3246 = vadd.f32 %v3232, %v3242
        %v3247 = vld [vmem:[#allocation3 + $0x2] sm:$0xff]
        %v3248 = vld [vmem:[#allocation3 + $0xa] sm:$0xff]
        %v3249 = vld [vmem:[#allocation3 + $0x12] sm:$0xff]
        %v3250 = vld [vmem:[#allocation3 + $0x1a] sm:$0xff]
        %v3251 = vmul.f32 %v3247, %v3211
        %v3252 = vmul.f32 %v3248, %v3212
        %v3253 = vmul.f32 %v3249, %v3213
        %v3254 = vmul.f32 %v3250, %v3214
        %v3255 = vld [vmem:[%s12 + $0x2] sm:$0x1]
        %v3256 = vperm.slane %v3255, 0
        %v3257 = vmul.f32 %v3251, %v3256
        %v3258 = vmul.f32 %v3252, %v3256
        %v3259 = vmul.f32 %v3253, %v3256
        %v3260 = vmul.f32 %v3254, %v3256
        %v3261 = vadd.f32 %v3243, %v3257
        %v3262 = vadd.f32 %v3244, %v3258
        %v3263 = vadd.f32 %v3245, %v3259
        %v3264 = vadd.f32 %v3246, %v3260
        %v3265 = vmul.f32 %v3247, %v3199
        %v3266 = vmul.f32 %v3248, %v3200
        %v3267 = vmul.f32 %v3249, %v3201
        %v3268 = vmul.f32 %v3250, %v3202
        %v3269 = vld [vmem:[%s12 + $0x3] sm:$0x1]
        %v3270 = vperm.slane %v3269, 0
        %v3271 = vmul.f32 %v3265, %v3270
        %v3272 = vmul.f32 %v3266, %v3270
        %v3273 = vmul.f32 %v3267, %v3270
        %v3274 = vmul.f32 %v3268, %v3270
        %v3275 = vadd.f32 %v3261, %v3271
        %v3276 = vadd.f32 %v3262, %v3272
        %v3277 = vadd.f32 %v3263, %v3273
        %v3278 = vadd.f32 %v3264, %v3274
        %v3279 = vld [vmem:[#allocation3 + $0x3] sm:$0xff]
        %v3280 = vld [vmem:[#allocation3 + $0xb] sm:$0xff]
        %v3281 = vld [vmem:[#allocation3 + $0x13] sm:$0xff]
        %v3282 = vld [vmem:[#allocation3 + $0x1b] sm:$0xff]
        %v3283 = vld [vmem:[%s12 + $0x4] sm:$0x1]
        %v3284 = vperm.slane %v3283, 0
        %v3285 = vmul.f32 %v3279, %v3284
        %v3286 = vmul.f32 %v3280, %v3284
        %v3287 = vmul.f32 %v3281, %v3284
        %v3288 = vmul.f32 %v3282, %v3284
        %v3289 = vadd.f32 %v3275, %v3285
        %v3290 = vadd.f32 %v3276, %v3286
        %v3291 = vadd.f32 %v3277, %v3287
        %v3292 = vadd.f32 %v3278, %v3288
        %v3293 = vld [vmem:[#allocation3 + $0x4] sm:$0xff]
        %v3294 = vld [vmem:[#allocation3 + $0xc] sm:$0xff]
        %v3295 = vld [vmem:[#allocation3 + $0x14] sm:$0xff]
        %v3296 = vld [vmem:[#allocation3 + $0x1c] sm:$0xff]
        %v3297 = vmul.f32 %v3293, %v3211
        %v3298 = vmul.f32 %v3294, %v3212
        %v3299 = vmul.f32 %v3295, %v3213
        %v3300 = vmul.f32 %v3296, %v3214
        %v3301 = vld [vmem:[%s12 + $0x5] sm:$0x1]
        %v3302 = vperm.slane %v3301, 0
        %v3303 = vmul.f32 %v3297, %v3302
        %v3304 = vmul.f32 %v3298, %v3302
        %v3305 = vmul.f32 %v3299, %v3302
        %v3306 = vmul.f32 %v3300, %v3302
        %v3307 = vadd.f32 %v3289, %v3303
        %v3308 = vadd.f32 %v3290, %v3304
        %v3309 = vadd.f32 %v3291, %v3305
        %v3310 = vadd.f32 %v3292, %v3306
        %v3311 = vmul.f32 %v3293, %v3199
        %v3312 = vmul.f32 %v3294, %v3200
        %v3313 = vmul.f32 %v3295, %v3201
        %v3314 = vmul.f32 %v3296, %v3202
        %v3315 = vld [vmem:[%s12 + $0x6] sm:$0x1]
        %v3316 = vperm.slane %v3315, 0
        %v3317 = vmul.f32 %v3311, %v3316
        %v3318 = vmul.f32 %v3312, %v3316
        %v3319 = vmul.f32 %v3313, %v3316
        %v3320 = vmul.f32 %v3314, %v3316
        %v3321 = vadd.f32 %v3307, %v3317
        %v3322 = vadd.f32 %v3308, %v3318
        %v3323 = vadd.f32 %v3309, %v3319
        %v3324 = vadd.f32 %v3310, %v3320
        %v3325 = vld [vmem:[#allocation3 + $0x5] sm:$0xff]
        %v3326 = vld [vmem:[#allocation3 + $0xd] sm:$0xff]
        %v3327 = vld [vmem:[#allocation3 + $0x15] sm:$0xff]
        %v3328 = vld [vmem:[#allocation3 + $0x1d] sm:$0xff]
        %v3329 = vld [vmem:[%s12 + $0x7] sm:$0x1]
        %v3330 = vperm.slane %v3329, 0
        %v3331 = vmul.f32 %v3325, %v3330
        %v3332 = vmul.f32 %v3326, %v3330
        %v3333 = vmul.f32 %v3327, %v3330
        %v3334 = vmul.f32 %v3328, %v3330
        %v3335 = vadd.f32 %v3321, %v3331
        %v3336 = vadd.f32 %v3322, %v3332
        %v3337 = vadd.f32 %v3323, %v3333
        %v3338 = vadd.f32 %v3324, %v3334
        %v3339 = vld [vmem:[#allocation3 + $0x6] sm:$0xff]
        %v3340 = vld [vmem:[#allocation3 + $0xe] sm:$0xff]
        %v3341 = vld [vmem:[#allocation3 + $0x16] sm:$0xff]
        %v3342 = vld [vmem:[#allocation3 + $0x1e] sm:$0xff]
        %v3343 = vmul.f32 %v3339, %v3211
        %v3344 = vmul.f32 %v3340, %v3212
        %v3345 = vmul.f32 %v3341, %v3213
        %v3346 = vmul.f32 %v3342, %v3214
        %v3347 = vld [vmem:[%s12 + $0x8] sm:$0x1]
        %v3348 = vperm.slane %v3347, 0
        %v3349 = vmul.f32 %v3343, %v3348
        %v3350 = vmul.f32 %v3344, %v3348
        %v3351 = vmul.f32 %v3345, %v3348
        %v3352 = vmul.f32 %v3346, %v3348
        %v3353 = vadd.f32 %v3335, %v3349
        %v3354 = vadd.f32 %v3336, %v3350
        %v3355 = vadd.f32 %v3337, %v3351
        %v3356 = vadd.f32 %v3338, %v3352
        %v3357 = vld [vmem:[%s13] sm:$0x1]
        %v3359 = vperm.slane %v3357, 0
        %v3361 = vadd.f32 %v3353, %v3359
        %v3362 = vadd.f32 %v3354, %v3359
        %v3363 = vadd.f32 %v3355, %v3359
        %v3364 = vadd.f32 %v3356, %v3359
        %v3365 = vmul.f32 %v3361, %v3361
        %v3366 = vmul.f32 %v3362, %v3362
        %v3367 = vmul.f32 %v3363, %v3363
        %v3368 = vmul.f32 %v3364, %v3364
        %v3369 = vmul.f32 %v3361, %v3365
        %v3370 = vmul.f32 %v3362, %v3366
        %v3371 = vmul.f32 %v3363, %v3367
        %v3372 = vmul.f32 %v3364, %v3368
        %v3373 = vmul.f32 %v3369, 0.044715
        %v3374 = vmul.f32 %v3370, 0.044715
        %v3375 = vmul.f32 %v3371, 0.044715
        %v3376 = vmul.f32 %v3372, 0.044715
        %v3377 = vadd.f32 %v3361, %v3373
        %v3378 = vadd.f32 %v3362, %v3374
        %v3379 = vadd.f32 %v3363, %v3375
        %v3380 = vadd.f32 %v3364, %v3376
        %v3381 = vmul.f32 %v3377, 0.7978846
        %v3382 = vmul.f32 %v3378, 0.7978846
        %v3383 = vmul.f32 %v3379, 0.7978846
        %v3384 = vmul.f32 %v3380, 0.7978846
        %v3385 = vtanh.pop %v3381
        %v3386 = vtanh.pop %v3382
        %v3387 = vtanh.pop %v3383
        %v3388 = vtanh.pop %v3384
        %v3389 = vadd.f32 %v3385, 1.0
        %v3390 = vadd.f32 %v3386, 1.0
        %v3391 = vadd.f32 %v3387, 1.0
        %v3392 = vadd.f32 %v3388, 1.0
        %v3393 = vmul.f32 %v3389, 0.5
        %v3394 = vmul.f32 %v3390, 0.5
        %v3395 = vmul.f32 %v3391, 0.5
        %v3396 = vmul.f32 %v3392, 0.5
        %v3397 = vmul.f32 %v3361, %v3393
        %v3398 = vmul.f32 %v3362, %v3394
        %v3399 = vmul.f32 %v3363, %v3395
        %v3400 = vmul.f32 %v3364, %v3396
        %v3401 = vld [vmem:[%s14] sm:$0xff]
        %v3402 = vld [vmem:[%s14 + $0x8] sm:$0xff]
        %v3403 = vld [vmem:[%s14 + $0x10] sm:$0xff]
        %v3404 = vld [vmem:[%s14 + $0x18] sm:$0xff]
        %v3405 = vld [vmem:[%s14 + $0x20] sm:$0xff]
        %v3406 = vld [vmem:[%s14 + $0x28] sm:$0xff]
        %v3407 = vld [vmem:[%s14 + $0x30] sm:$0xff]
        %v3408 = vld [vmem:[%s14 + $0x38] sm:$0xff]
        %v3409 = vld [vmem:[%s15] sm:$0x1]
        %v3411 = vperm.slane %v3409, 0
        %v3414 = vsel %vm3127, %v3397, 0
        %v3417 = vsel %vm3127, %v3398, 0
        %v3420 = vsel %vm3127, %v3399, 0
        %v3423 = vsel %vm3127, %v3400, 0
        %3425 = vmatpush.msra.mxu0 0.0
        %3426 = vmatpush.msra.mxu0 0.0
        %3427 = vmatpush.msra.mxu0 0.0
        %3428 = vmatpush.msra.mxu0 0.0
        %3429 = vmatpush.msra.mxu0 0.0
        %3430 = vmatpush.msra.mxu0 0.0
        %3431 = vmatpush.msra.mxu0 0.0
        %3432 = vmatpush.msra.mxu0 0.0
        %v3433 = vand.u32 %v3408, 4294901760
        %3434 = vmatpush.msra.mxu0 %v3433
        %v3435 = vand.u32 %v3407, 4294901760
        %3436 = vmatpush.msra.mxu0 %v3435
        %v3437 = vand.u32 %v3406, 4294901760
        %3438 = vmatpush.msra.mxu0 %v3437
        %v3439 = vand.u32 %v3405, 4294901760
        %3440 = vmatpush.msra.mxu0 %v3439
        %v3441 = vand.u32 %v3404, 4294901760
        %3442 = vmatpush.msra.mxu0 %v3441
        %v3443 = vand.u32 %v3403, 4294901760
        %3444 = vmatpush.msra.mxu0 %v3443
        %v3445 = vand.u32 %v3402, 4294901760
        %3446 = vmatpush.msra.mxu0 %v3445
        %v3447 = vand.u32 %v3401, 4294901760
        %3448 = vmatpush.msra.mxu0 %v3447
        %v3449 = vand.u32 %v3414, 4294901760
        %v3450 = vsub.f32 %v3414, %v3449
        %v3451 = vand.u32 %v3450, 4294901760
        %v3452 = vsub.f32 %v3450, %v3451
        %v3453 = vand.u32 %v3452, 4294901760
        %3454 = vmatmul.f32.gmra.mxu0 %v3453
        %v3455 = vpop.f32.mrf.mxu0
        %v3456 = vadd.f32 %v3411, %v3455
        %v3457 = vand.u32 %v3417, 4294901760
        %v3458 = vsub.f32 %v3417, %v3457
        %v3459 = vand.u32 %v3458, 4294901760
        %v3460 = vsub.f32 %v3458, %v3459
        %v3461 = vand.u32 %v3460, 4294901760
        %3462 = vmatmul.f32.gmra.mxu0 %v3461
        %v3463 = vpop.f32.mrf.mxu0
        %v3464 = vadd.f32 %v3411, %v3463
        %v3465 = vand.u32 %v3420, 4294901760
        %v3466 = vsub.f32 %v3420, %v3465
        %v3467 = vand.u32 %v3466, 4294901760
        %v3468 = vsub.f32 %v3466, %v3467
        %v3469 = vand.u32 %v3468, 4294901760
        %3470 = vmatmul.f32.gmra.mxu0 %v3469
        %v3471 = vpop.f32.mrf.mxu0
        %v3472 = vadd.f32 %v3411, %v3471
        %v3473 = vand.u32 %v3423, 4294901760
        %v3474 = vsub.f32 %v3423, %v3473
        %v3475 = vand.u32 %v3474, 4294901760
        %v3476 = vsub.f32 %v3474, %v3475
        %v3477 = vand.u32 %v3476, 4294901760
        %3478 = vmatmul.f32.gmra.mxu0 %v3477
        %v3479 = vpop.f32.mrf.mxu0
        %v3480 = vadd.f32 %v3411, %v3479
        %3481 = vdwg.mxu0
        %3482 = vmatpush.msra.mxu0 0.0
        %3483 = vmatpush.msra.mxu0 0.0
        %3484 = vmatpush.msra.mxu0 0.0
        %3485 = vmatpush.msra.mxu0 0.0
        %3486 = vmatpush.msra.mxu0 0.0
        %3487 = vmatpush.msra.mxu0 0.0
        %3488 = vmatpush.msra.mxu0 0.0
        %3489 = vmatpush.msra.mxu0 0.0
        %v3490 = vand.u32 %v3408, 4294901760
        %v3491 = vsub.f32 %v3408, %v3490
        %v3492 = vand.u32 %v3491, 4294901760
        %v3493 = vsub.f32 %v3491, %v3492
        %v3494 = vand.u32 %v3493, 4294901760
        %3495 = vmatpush.msra.mxu0 %v3494
        %v3496 = vand.u32 %v3407, 4294901760
        %v3497 = vsub.f32 %v3407, %v3496
        %v3498 = vand.u32 %v3497, 4294901760
        %v3499 = vsub.f32 %v3497, %v3498
        %v3500 = vand.u32 %v3499, 4294901760
        %3501 = vmatpush.msra.mxu0 %v3500
        %v3502 = vand.u32 %v3406, 4294901760
        %v3503 = vsub.f32 %v3406, %v3502
        %v3504 = vand.u32 %v3503, 4294901760
        %v3505 = vsub.f32 %v3503, %v3504
        %v3506 = vand.u32 %v3505, 4294901760
        %3507 = vmatpush.msra.mxu0 %v3506
        %v3508 = vand.u32 %v3405, 4294901760
        %v3509 = vsub.f32 %v3405, %v3508
        %v3510 = vand.u32 %v3509, 4294901760
        %v3511 = vsub.f32 %v3509, %v3510
        %v3512 = vand.u32 %v3511, 4294901760
        %3513 = vmatpush.msra.mxu0 %v3512
        %v3514 = vand.u32 %v3404, 4294901760
        %v3515 = vsub.f32 %v3404, %v3514
        %v3516 = vand.u32 %v3515, 4294901760
        %v3517 = vsub.f32 %v3515, %v3516
        %v3518 = vand.u32 %v3517, 4294901760
        %3519 = vmatpush.msra.mxu0 %v3518
        %v3520 = vand.u32 %v3403, 4294901760
        %v3521 = vsub.f32 %v3403, %v3520
        %v3522 = vand.u32 %v3521, 4294901760
        %v3523 = vsub.f32 %v3521, %v3522
        %v3524 = vand.u32 %v3523, 4294901760
        %3525 = vmatpush.msra.mxu0 %v3524
        %v3526 = vand.u32 %v3402, 4294901760
        %v3527 = vsub.f32 %v3402, %v3526
        %v3528 = vand.u32 %v3527, 4294901760
        %v3529 = vsub.f32 %v3527, %v3528
        %v3530 = vand.u32 %v3529, 4294901760
        %3531 = vmatpush.msra.mxu0 %v3530
        %v3532 = vand.u32 %v3401, 4294901760
        %v3533 = vsub.f32 %v3401, %v3532
        %v3534 = vand.u32 %v3533, 4294901760
        %v3535 = vsub.f32 %v3533, %v3534
        %v3536 = vand.u32 %v3535, 4294901760
        %3537 = vmatpush.msra.mxu0 %v3536
        %v3538 = vand.u32 %v3414, 4294901760
        %3539 = vmatmul.f32.gmra.mxu0 %v3538
        %v3540 = vpop.f32.mrf.mxu0
        %v3541 = vadd.f32 %v3456, %v3540
        %v3542 = vand.u32 %v3417, 4294901760
        %3543 = vmatmul.f32.gmra.mxu0 %v3542
        %v3544 = vpop.f32.mrf.mxu0
        %v3545 = vadd.f32 %v3464, %v3544
        %v3546 = vand.u32 %v3420, 4294901760
        %3547 = vmatmul.f32.gmra.mxu0 %v3546
        %v3548 = vpop.f32.mrf.mxu0
        %v3549 = vadd.f32 %v3472, %v3548
        %v3550 = vand.u32 %v3423, 4294901760
        %3551 = vmatmul.f32.gmra.mxu0 %v3550
        %v3552 = vpop.f32.mrf.mxu0
        %v3553 = vadd.f32 %v3480, %v3552
        %3554 = vdwg.mxu0
        %3555 = vmatpush.msra.mxu0 0.0
        %3556 = vmatpush.msra.mxu0 0.0
        %3557 = vmatpush.msra.mxu0 0.0
        %3558 = vmatpush.msra.mxu0 0.0
        %3559 = vmatpush.msra.mxu0 0.0
        %3560 = vmatpush.msra.mxu0 0.0
        %3561 = vmatpush.msra.mxu0 0.0
        %3562 = vmatpush.msra.mxu0 0.0
        %v3563 = vand.u32 %v3408, 4294901760
        %v3564 = vsub.f32 %v3408, %v3563
        %3565 = vmatpush.msra.mxu0 %v3564
        %v3566 = vand.u32 %v3407, 4294901760
        %v3567 = vsub.f32 %v3407, %v3566
        %3568 = vmatpush.msra.mxu0 %v3567
        %v3569 = vand.u32 %v3406, 4294901760
        %v3570 = vsub.f32 %v3406, %v3569
        %3571 = vmatpush.msra.mxu0 %v3570
        %v3572 = vand.u32 %v3405, 4294901760
        %v3573 = vsub.f32 %v3405, %v3572
        %3574 = vmatpush.msra.mxu0 %v3573
        %v3575 = vand.u32 %v3404, 4294901760
        %v3576 = vsub.f32 %v3404, %v3575
        %3577 = vmatpush.msra.mxu0 %v3576
        %v3578 = vand.u32 %v3403, 4294901760
        %v3579 = vsub.f32 %v3403, %v3578
        %3580 = vmatpush.msra.mxu0 %v3579
        %v3581 = vand.u32 %v3402, 4294901760
        %v3582 = vsub.f32 %v3402, %v3581
        %3583 = vmatpush.msra.mxu0 %v3582
        %v3584 = vand.u32 %v3401, 4294901760
        %v3585 = vsub.f32 %v3401, %v3584
        %3586 = vmatpush.msra.mxu0 %v3585
        %v3587 = vand.u32 %v3414, 4294901760
        %v3588 = vsub.f32 %v3414, %v3587
        %3589 = vmatmul.f32.gmra.mxu0 %v3588
        %v3590 = vpop.f32.mrf.mxu0
        %v3591 = vadd.f32 %v3541, %v3590
        %v3592 = vand.u32 %v3417, 4294901760
        %v3593 = vsub.f32 %v3417, %v3592
        %3594 = vmatmul.f32.gmra.mxu0 %v3593
        %v3595 = vpop.f32.mrf.mxu0
        %v3596 = vadd.f32 %v3545, %v3595
        %v3597 = vand.u32 %v3420, 4294901760
        %v3598 = vsub.f32 %v3420, %v3597
        %3599 = vmatmul.f32.gmra.mxu0 %v3598
        %v3600 = vpop.f32.mrf.mxu0
        %v3601 = vadd.f32 %v3549, %v3600
        %v3602 = vand.u32 %v3423, 4294901760
        %v3603 = vsub.f32 %v3423, %v3602
        %3604 = vmatmul.f32.gmra.mxu0 %v3603
        %v3605 = vpop.f32.mrf.mxu0
        %v3606 = vadd.f32 %v3553, %v3605
        %3607 = vdwg.mxu0
        %3608 = vmatpush.msra.mxu0 0.0
        %3609 = vmatpush.msra.mxu0 0.0
        %3610 = vmatpush.msra.mxu0 0.0
        %3611 = vmatpush.msra.mxu0 0.0
        %3612 = vmatpush.msra.mxu0 0.0
        %3613 = vmatpush.msra.mxu0 0.0
        %3614 = vmatpush.msra.mxu0 0.0
        %3615 = vmatpush.msra.mxu0 0.0
        %v3616 = vand.u32 %v3408, 4294901760
        %3617 = vmatpush.msra.mxu0 %v3616
        %v3618 = vand.u32 %v3407, 4294901760
        %3619 = vmatpush.msra.mxu0 %v3618
        %v3620 = vand.u32 %v3406, 4294901760
        %3621 = vmatpush.msra.mxu0 %v3620
        %v3622 = vand.u32 %v3405, 4294901760
        %3623 = vmatpush.msra.mxu0 %v3622
        %v3624 = vand.u32 %v3404, 4294901760
        %3625 = vmatpush.msra.mxu0 %v3624
        %v3626 = vand.u32 %v3403, 4294901760
        %3627 = vmatpush.msra.mxu0 %v3626
        %v3628 = vand.u32 %v3402, 4294901760
        %3629 = vmatpush.msra.mxu0 %v3628
        %v3630 = vand.u32 %v3401, 4294901760
        %3631 = vmatpush.msra.mxu0 %v3630
        %v3632 = vand.u32 %v3414, 4294901760
        %v3633 = vsub.f32 %v3414, %v3632
        %v3634 = vand.u32 %v3633, 4294901760
        %3635 = vmatmul.f32.gmra.mxu0 %v3634
        %v3636 = vpop.f32.mrf.mxu0
        %v3637 = vadd.f32 %v3591, %v3636
        %v3638 = vand.u32 %v3417, 4294901760
        %v3639 = vsub.f32 %v3417, %v3638
        %v3640 = vand.u32 %v3639, 4294901760
        %3641 = vmatmul.f32.gmra.mxu0 %v3640
        %v3642 = vpop.f32.mrf.mxu0
        %v3643 = vadd.f32 %v3596, %v3642
        %v3644 = vand.u32 %v3420, 4294901760
        %v3645 = vsub.f32 %v3420, %v3644
        %v3646 = vand.u32 %v3645, 4294901760
        %3647 = vmatmul.f32.gmra.mxu0 %v3646
        %v3648 = vpop.f32.mrf.mxu0
        %v3649 = vadd.f32 %v3601, %v3648
        %v3650 = vand.u32 %v3423, 4294901760
        %v3651 = vsub.f32 %v3423, %v3650
        %v3652 = vand.u32 %v3651, 4294901760
        %3653 = vmatmul.f32.gmra.mxu0 %v3652
        %v3654 = vpop.f32.mrf.mxu0
        %v3655 = vadd.f32 %v3606, %v3654
        %3656 = vdwg.mxu0
        %3657 = vmatpush.msra.mxu0 0.0
        %3658 = vmatpush.msra.mxu0 0.0
        %3659 = vmatpush.msra.mxu0 0.0
        %3660 = vmatpush.msra.mxu0 0.0
        %3661 = vmatpush.msra.mxu0 0.0
        %3662 = vmatpush.msra.mxu0 0.0
        %3663 = vmatpush.msra.mxu0 0.0
        %3664 = vmatpush.msra.mxu0 0.0
        %v3665 = vand.u32 %v3408, 4294901760
        %v3666 = vsub.f32 %v3408, %v3665
        %v3667 = vand.u32 %v3666, 4294901760
        %3668 = vmatpush.msra.mxu0 %v3667
        %v3669 = vand.u32 %v3407, 4294901760
        %v3670 = vsub.f32 %v3407, %v3669
        %v3671 = vand.u32 %v3670, 4294901760
        %3672 = vmatpush.msra.mxu0 %v3671
        %v3673 = vand.u32 %v3406, 4294901760
        %v3674 = vsub.f32 %v3406, %v3673
        %v3675 = vand.u32 %v3674, 4294901760
        %3676 = vmatpush.msra.mxu0 %v3675
        %v3677 = vand.u32 %v3405, 4294901760
        %v3678 = vsub.f32 %v3405, %v3677
        %v3679 = vand.u32 %v3678, 4294901760
        %3680 = vmatpush.msra.mxu0 %v3679
        %v3681 = vand.u32 %v3404, 4294901760
        %v3682 = vsub.f32 %v3404, %v3681
        %v3683 = vand.u32 %v3682, 4294901760
        %3684 = vmatpush.msra.mxu0 %v3683
        %v3685 = vand.u32 %v3403, 4294901760
        %v3686 = vsub.f32 %v3403, %v3685
        %v3687 = vand.u32 %v3686, 4294901760
        %3688 = vmatpush.msra.mxu0 %v3687
        %v3689 = vand.u32 %v3402, 4294901760
        %v3690 = vsub.f32 %v3402, %v3689
        %v3691 = vand.u32 %v3690, 4294901760
        %3692 = vmatpush.msra.mxu0 %v3691
        %v3693 = vand.u32 %v3401, 4294901760
        %v3694 = vsub.f32 %v3401, %v3693
        %v3695 = vand.u32 %v3694, 4294901760
        %3696 = vmatpush.msra.mxu0 %v3695
        %v3697 = vand.u32 %v3414, 4294901760
        %3698 = vmatmul.f32.gmra.mxu0 %v3697
        %v3699 = vpop.f32.mrf.mxu0
        %v3700 = vadd.f32 %v3637, %v3699
        %v3701 = vand.u32 %v3417, 4294901760
        %3702 = vmatmul.f32.gmra.mxu0 %v3701
        %v3703 = vpop.f32.mrf.mxu0
        %v3704 = vadd.f32 %v3643, %v3703
        %v3705 = vand.u32 %v3420, 4294901760
        %3706 = vmatmul.f32.gmra.mxu0 %v3705
        %v3707 = vpop.f32.mrf.mxu0
        %v3708 = vadd.f32 %v3649, %v3707
        %v3709 = vand.u32 %v3423, 4294901760
        %3710 = vmatmul.f32.gmra.mxu0 %v3709
        %v3711 = vpop.f32.mrf.mxu0
        %v3712 = vadd.f32 %v3655, %v3711
        %3713 = vdwg.mxu0
        %3714 = vmatpush.msra.mxu0 0.0
        %3715 = vmatpush.msra.mxu0 0.0
        %3716 = vmatpush.msra.mxu0 0.0
        %3717 = vmatpush.msra.mxu0 0.0
        %3718 = vmatpush.msra.mxu0 0.0
        %3719 = vmatpush.msra.mxu0 0.0
        %3720 = vmatpush.msra.mxu0 0.0
        %3721 = vmatpush.msra.mxu0 0.0
        %v3722 = vand.u32 %v3408, 4294901760
        %3723 = vmatpush.msra.mxu0 %v3722
        %v3724 = vand.u32 %v3407, 4294901760
        %3725 = vmatpush.msra.mxu0 %v3724
        %v3726 = vand.u32 %v3406, 4294901760
        %3727 = vmatpush.msra.mxu0 %v3726
        %v3728 = vand.u32 %v3405, 4294901760
        %3729 = vmatpush.msra.mxu0 %v3728
        %v3730 = vand.u32 %v3404, 4294901760
        %3731 = vmatpush.msra.mxu0 %v3730
        %v3732 = vand.u32 %v3403, 4294901760
        %3733 = vmatpush.msra.mxu0 %v3732
        %v3734 = vand.u32 %v3402, 4294901760
        %3735 = vmatpush.msra.mxu0 %v3734
        %v3736 = vand.u32 %v3401, 4294901760
        %3737 = vmatpush.msra.mxu0 %v3736
        %v3738 = vand.u32 %v3414, 4294901760
        %3739 = vmatmul.f32.gmra.mxu0 %v3738
        %v3740 = vpop.f32.mrf.mxu0
        %v3741 = vadd.f32 %v3700, %v3740
        %v3742 = vand.u32 %v3417, 4294901760
        %3743 = vmatmul.f32.gmra.mxu0 %v3742
        %v3744 = vpop.f32.mrf.mxu0
        %v3745 = vadd.f32 %v3704, %v3744
        %v3746 = vand.u32 %v3420, 4294901760
        %3747 = vmatmul.f32.gmra.mxu0 %v3746
        %v3748 = vpop.f32.mrf.mxu0
        %v3749 = vadd.f32 %v3708, %v3748
        %v3750 = vand.u32 %v3423, 4294901760
        %3751 = vmatmul.f32.gmra.mxu0 %v3750
        %v3752 = vpop.f32.mrf.mxu0
        %v3753 = vadd.f32 %v3712, %v3752
        %3754 = vdwg.mxu0
        %v3755 = vadd.f32 %v2711, %v3741
        %v3756 = vadd.f32 %v2712, %v3745
        %v3757 = vadd.f32 %v2713, %v3749
        %v3758 = vadd.f32 %v2714, %v3753
        %3759 = vst.msk [vmem:[%s560] sm:$0xff] %vm565, %v3755
        %3760 = vst.msk [vmem:[%s560 + $0x8] sm:$0xff] %vm565, %v3756
        %3761 = vst.msk [vmem:[%s560 + $0x10] sm:$0xff] %vm565, %v3757
        %3762 = vst.msk [vmem:[%s560 + $0x18] sm:$0xff] %vm565, %v3758
        %p3763 = scmp.lt.s32.totalorder %s34, 1
        %s3764 = scalar_select %p3763, %s34, 1
        %s3765 = smul.addr %s3764, 4
        %s3766 = smul.addr %s3765, 8
        %s3767 = scalar_lea.vmem %s16, %s3766
        %s3768 = sand.u32 %s409, 1
        %s3769 = scalar_lea.sflag [#allocation6], %s3768
        %s3770 = sand.u32 %s409, 1
        %s3771 = scalar_lea.vmem [#allocation5], %s3770
        // Predicated region
        $region85: #{tpu_custom_call.1} parent=83 // pred_check
          %p3772 = pneg %p393
        $region86: #{tpu_custom_call.1} parent=83 // pred_check_branch
          %3774 = sbr.rel (%p3772) target = $region88
        $region87: #{tpu_custom_call.1} parent=83 // pred_region
          _
        $region88: #{tpu_custom_call.1} parent=83 // pred_fallthru
          _
        // Predicated region
        $region89: #{tpu_custom_call.1} parent=83 // pred_check
          %p3775 = pneg %p419
        $region90: #{tpu_custom_call.1} parent=83 // pred_check_branch
          %3777 = sbr.rel (%p3775) target = $region92
        $region91: #{tpu_custom_call.1} parent=83 // pred_region
          %3779 = vsyncadd %s3769, 0
          %s3780 = scalar_lea.hbm %s17, %s34
          %s3782 = sshll.u32 %s3771, 4
          %s3783 = int_to_ptr.vmem [resolvable:$true] %s3782
          %s3784 = sshll.u32 %s3780, 4
          %s3785 = int_to_ptr.hbm [resolvable:$true] %s3784
          %3787 = dma.vmem_to_hbm [thread:$0]  %s3783, 16, %s3785, %s3769
        $region92: #{tpu_custom_call.1} parent=83 // pred_fallthru
          _
      $region84: #{tpu_custom_call.1} parent=5 // pred_fallthru
        _
      %p3788 = scmp.le.s32.totalorder 2, %s29
      // Predicated region
      $region93: #{tpu_custom_call.1} parent=5 // pred_check
        %p3789 = pneg %p3788
      $region94: #{tpu_custom_call.1} parent=5 // pred_check_branch
        %3791 = sbr.rel (%p3789) target = $region96
      $region95: #{tpu_custom_call.1} parent=5 // pred_region
        %s3792 = ssub.s32 %s29, 2
        // Predicated region
        $region97: #{tpu_custom_call.1} parent=95 // pred_check
          %p3793 = pneg %p399
        $region98: #{tpu_custom_call.1} parent=95 // pred_check_branch
          %3795 = sbr.rel (%p3793) target = $region100
        $region99: #{tpu_custom_call.1} parent=95 // pred_region
          %p3796 = scmp.lt.s32.totalorder %s35, 1
          %s3797 = scalar_select %p3796, %s35, 1
          %s3798 = smul.addr %s3797, 4
          %s3799 = smul.addr %s3798, 8
          %s3800 = scalar_lea.vmem %s16, %s3799
        $region100: #{tpu_custom_call.1} parent=95 // pred_fallthru
          _
        // Predicated region
        $region101: #{tpu_custom_call.1} parent=95 // pred_check
          %p3801 = pneg %p425
        $region102: #{tpu_custom_call.1} parent=95 // pred_check_branch
          %3803 = sbr.rel (%p3801) target = $region104
        $region103: #{tpu_custom_call.1} parent=95 // pred_region
          %s3804 = sand.u32 %s410, 1
          %s3805 = scalar_lea.sflag [#allocation6], %s3804
          %s3806 = sand.u32 %s410, 1
          %s3807 = scalar_lea.vmem [#allocation5], %s3806
          %3809 = dma.done %s3805, 16
        $region104: #{tpu_custom_call.1} parent=95 // pred_fallthru
          _
      $region96: #{tpu_custom_call.1} parent=5 // pred_fallthru
        _
    $region6: #{tpu_custom_call.1} parent=1 // loop_footer
      %s33 = sadd.s32 1, %s29
    $region7: #{tpu_custom_call.1} parent=1 // loop_footer_branch
      %28 = sbr.rel target = $region3
    $region8: #{tpu_custom_call.1} parent=1 // loop_exit
      _
    %3810 = vsyncpa [#allocation6], 1
    %s3811 = scalar_lea.sflag [#allocation6], 1
    %3812 = vsyncpa %s3811, 1

</llo_original>
